<compile_context>
chip_gen: v7x
topology: tpu7x:2x2x1
jax: 0.10.0
libtpu: 0.0.40
codegen_flags: <defaults>
</compile_context>

<pallas_src>
import jax
import jax.numpy as jnp
from jax.experimental import pallas as pl
from jax.experimental.pallas import tpu as pltpu  # noqa: F401  (kept for completeness)

HP = 128  # per-gate padded width (H=50 -> 128 lanes), so every gate slice is vreg-aligned


def _lstm_kernel(x_ref,      # (T, B, I)        f32   time-major input
                 wih1_ref,   # (I, 4*Hp)        bf16  layer-1 input weights, gates [i,f,o,g]
                 whh1_ref,   # (Hp, 4*Hp)       bf16  layer-1 recurrent weights
                 b1_ref,     # (1, 4*Hp)        f32   layer-1 combined bias (b_ih + b_hh)
                 wih2_ref,   # (Hp, 4*Hp)       bf16  layer-2 input weights
                 whh2_ref,   # (Hp, 4*Hp)       bf16  layer-2 recurrent weights
                 b2_ref,     # (1, 4*Hp)        f32   layer-2 combined bias
                 wfc_ref,    # (1, Hp)          f32   final FC row (padded)
                 bfc_ref,    # (1, 1)           f32
                 out_ref):   # (B, 1)           f32
    T, B, I = x_ref.shape
    Hp = whh1_ref.shape[0]
    G = 4 * Hp

    # ---- Hoisted layer-1 input projection: one MXU call for all timesteps ----
    x2d = x_ref[...].reshape(T * B, I).astype(jnp.bfloat16)   # collapse leading dims
    xg1 = (jnp.dot(x2d, wih1_ref[...], preferred_element_type=jnp.float32)
           + b1_ref[...])                                     # (T*B, 4Hp), bias folded once
    xg1 = xg1.reshape(T, B, G)                                # time-major: xg1[t] is tile-pick

    b2b = jnp.broadcast_to(b2_ref[...], (B, G))               # hoisted: JAX does not CSE broadcasts

    def activations(gates):
        # gate columns: [i | f | o] (sigmoid, contiguous 3*Hp) then [g] (tanh, Hp)
        sfo = jax.nn.sigmoid(gates[:, 0:3 * Hp])              # one EUP-heavy op for 3 gates
        g_g = jnp.tanh(gates[:, 3 * Hp:4 * Hp])
        return sfo[:, 0:Hp], sfo[:, Hp:2 * Hp], sfo[:, 2 * Hp:3 * Hp], g_g

    z = jnp.zeros((B, Hp), jnp.float32)
    h1, c1, h2, c2 = z, z, z, z

    # Fully unrolled recurrence (T is static); padded gate lanes stay exactly zero in h/c.
    for t in range(T):
        h1b = h1.astype(jnp.bfloat16)
        h2b = h2.astype(jnp.bfloat16)

        # ---- off critical path: layer-2 recurrent half + bias (only needs step t-1 state) ----
        r2 = jnp.dot(h2b, whh2_ref[...], preferred_element_type=jnp.float32) + b2b

        # ---- layer 1: recurrent dot is the only matmul on the dependent chain here ----
        g1 = xg1[t] + jnp.dot(h1b, whh1_ref[...], preferred_element_type=jnp.float32)
        i1, f1, o1, gg1 = activations(g1)
        c1 = f1 * c1 + i1 * gg1
        h1 = o1 * jnp.tanh(c1)

        # ---- layer 2: only the input half depends on h1_new ----
        g2 = (jnp.dot(h1.astype(jnp.bfloat16), wih2_ref[...],
                      preferred_element_type=jnp.float32) + r2)
        i2, f2, o2, gg2 = activations(g2)
        c2 = f2 * c2 + i2 * gg2
        h2 = o2 * jnp.tanh(c2)

    # ---- final FC (out width 1): VPU multiply + lane reduce, no MXU pass ----
    logits = jnp.sum(h2 * wfc_ref[...], axis=-1, keepdims=True) + bfc_ref[...]
    out_ref[...] = jax.nn.sigmoid(logits)


@jax.jit
def lstm_forward(x, kp):
    """x: (B, T, I) float32 -> (B, 1) float32."""
    B = x.shape[0]
    xt = jnp.transpose(x, (1, 0, 2))   # time-major (T, B, I); tiny one-time wrapper transpose
    return pl.pallas_call(
        _lstm_kernel,
        out_shape=jax.ShapeDtypeStruct((B, 1), jnp.float32),
        # No grid: all operands are tiny and resident in VMEM for the whole call.
    )(xt, kp["wih1"], kp["whh1"], kp["b1"], kp["wih2"], kp["whh2"],
      kp["b2"], kp["wfc"], kp["bfc"])


# ----------------------------- parameter construction -----------------------------

def init_raw_params(key, input_size, hidden_size):
    """Raw PyTorch-layout weights, U(-1/sqrt(H), 1/sqrt(H)) like nn.LSTM / nn.Linear."""
    H, I = hidden_size, input_size
    k = 1.0 / float(H) ** 0.5
    keys = jax.random.split(key, 10)

    def u(kk, shape):
        return jax.random.uniform(kk, shape, jnp.float32, minval=-k, maxval=k)

    return dict(
        w_ih_l0=u(keys[0], (4 * H, I)), w_hh_l0=u(keys[1], (4 * H, H)),
        b_ih_l0=u(keys[2], (4 * H,)),   b_hh_l0=u(keys[3], (4 * H,)),
        w_ih_l1=u(keys[4], (4 * H, H)), w_hh_l1=u(keys[5], (4 * H, H)),
        b_ih_l1=u(keys[6], (4 * H,)),   b_hh_l1=u(keys[7], (4 * H,)),
        fc_w=u(keys[8], (1, H)),        fc_b=u(keys[9], (1,)),
    )


def _split_gates(w, H):
    # PyTorch gate order along dim 0: [i, f, g, o]
    return w[0:H], w[H:2 * H], w[2 * H:3 * H], w[3 * H:4 * H]


def _pack_weight(w, H, hp, in_pad=None):
    """(4H, in) PyTorch layout -> (in[_pad], 4*hp) kernel layout, gate order [i,f,o,g],
    each gate's columns zero-padded H -> hp (and contraction rows padded if requested)."""
    i_w, f_w, g_w, o_w = _split_gates(w, H)

    def blk(b):
        return jnp.pad(b.T, ((0, 0), (0, hp - H)))            # (in, hp)

    out = jnp.concatenate([blk(i_w), blk(f_w), blk(o_w), blk(g_w)], axis=1)
    if in_pad is not None and in_pad > out.shape[0]:
        out = jnp.pad(out, ((0, in_pad - out.shape[0]), (0, 0)))
    return out


def _pack_bias(b, H, hp):
    i_b, f_b, g_b, o_b = _split_gates(b, H)

    def blk(v):
        return jnp.pad(v, (0, hp - H))

    return jnp.concatenate([blk(i_b), blk(f_b), blk(o_b), blk(g_b)]).reshape(1, 4 * hp)


def pack_params(raw, hidden_size, hp=HP):
    """Convert raw PyTorch-layout params to the padded/reordered kernel layout.
    MXU weight operands are stored in bf16 (f32 accumulation happens in-kernel)."""
    H = hidden_size
    bf16 = jnp.bfloat16
    wih1 = _pack_weight(raw["w_ih_l0"], H, hp).astype(bf16)           # (I, 4hp)
    whh1 = _pack_weight(raw["w_hh_l0"], H, hp, in_pad=hp).astype(bf16)  # (hp, 4hp)
    b1 = _pack_bias(raw["b_ih_l0"] + raw["b_hh_l0"], H, hp)           # (1, 4hp) f32
    wih2 = _pack_weight(raw["w_ih_l1"], H, hp, in_pad=hp).astype(bf16)  # (hp, 4hp)
    whh2 = _pack_weight(raw["w_hh_l1"], H, hp, in_pad=hp).astype(bf16)  # (hp, 4hp)
    b2 = _pack_bias(raw["b_ih_l1"] + raw["b_hh_l1"], H, hp)           # (1, 4hp) f32
    wfc = jnp.pad(raw["fc_w"], ((0, 0), (0, hp - H)))                 # (1, hp)  f32 (VPU only)
    bfc = raw["fc_b"].reshape(1, 1)                                   # (1, 1)
    return dict(wih1=wih1, whh1=whh1, b1=b1, wih2=wih2, whh2=whh2,
                b2=b2, wfc=wfc, bfc=bfc)


# ----------------------------- pure-JAX reference -----------------------------

def lstm_forward_ref(x, raw, hidden_size):
    """Reference forward using the raw PyTorch-layout weights (gate order [i,f,g,o])."""
    B, T, _ = x.shape
    H = hidden_size

    def cell(x_t, h, c, w_ih, w_hh, b_ih, b_hh):
        g = x_t @ w_ih.T + h @ w_hh.T + b_ih + b_hh
        i_g = jax.nn.sigmoid(g[:, 0 * H:1 * H])
        f_g = jax.nn.sigmoid(g[:, 1 * H:2 * H])
        g_g = jnp.tanh(g[:, 2 * H:3 * H])
        o_g = jax.nn.sigmoid(g[:, 3 * H:4 * H])
        c_n = f_g * c + i_g * g_g
        return o_g * jnp.tanh(c_n), c_n

    h1 = c1 = h2 = c2 = jnp.zeros((B, H), jnp.float32)
    for t in range(T):
        x_t = x[:, t, :]
        h1, c1 = cell(x_t, h1, c1, raw["w_ih_l0"], raw["w_hh_l0"], raw["b_ih_l0"], raw["b_hh_l0"])
        h2, c2 = cell(h1, h2, c2, raw["w_ih_l1"], raw["w_hh_l1"], raw["b_ih_l1"], raw["b_hh_l1"])
    return jax.nn.sigmoid(h2 @ raw["fc_w"].T + raw["fc_b"])


if __name__ == "__main__":
    B, T, I, H = 2, 8, 16, 50   # batch, seq, input_size, hidden_size (module defaults)
    key = jax.random.PRNGKey(0)
    kx, kp = jax.random.split(key)
    x = jax.random.normal(kx, (B, T, I), jnp.float32)

    raw = init_raw_params(kp, I, H)
    packed = pack_params(raw, H)

    out = lstm_forward(x, packed)
    out = jax.block_until_ready(out)

    ref = lstm_forward_ref(x, raw, H)
    assert out.shape == (B, 1)
    # bf16 MXU operands with f32 accumulation -> loosened tolerance vs f32 reference.
    assert jnp.allclose(out, ref, rtol=2e-2, atol=2e-2), (out, ref)
    print("KERNEL_OK")
</pallas_src>

<mosaic_0001>
module attributes {stable_mosaic.version = 11 : i64} {
  func.func @_lstm_kernel(%arg0: memref<8x2x16xf32, #tpu.memory_space<vmem>>, %arg1: memref<16x512xbf16, #tpu.memory_space<vmem>>, %arg2: memref<128x512xbf16, #tpu.memory_space<vmem>>, %arg3: memref<1x512xf32, #tpu.memory_space<vmem>>, %arg4: memref<128x512xbf16, #tpu.memory_space<vmem>>, %arg5: memref<128x512xbf16, #tpu.memory_space<vmem>>, %arg6: memref<1x512xf32, #tpu.memory_space<vmem>>, %arg7: memref<1x128xf32, #tpu.memory_space<vmem>>, %arg8: memref<1x1xf32, #tpu.memory_space<vmem>>, %arg9: memref<2x1xf32, #tpu.memory_space<vmem>>) attributes {dimension_semantics = [], scalar_prefetch = 0 : i64, scratch_operands = 0 : i64, tpu.core_type = #tpu.core_type<tc>} {
    %c0 = arith.constant 0 : index
    %c0_0 = arith.constant 0 : index
    %c0_1 = arith.constant 0 : index
    %0 = vector.load %arg0[%c0, %c0_0, %c0_1] : memref<8x2x16xf32, #tpu.memory_space<vmem>>, vector<8x2x16xf32>
    %1 = vector.shape_cast %0 : vector<8x2x16xf32> to vector<16x16xf32>
    %2 = arith.truncf %1 : vector<16x16xf32> to vector<16x16xbf16>
    %c0_2 = arith.constant 0 : index
    %c0_3 = arith.constant 0 : index
    %3 = vector.load %arg1[%c0_2, %c0_3] : memref<16x512xbf16, #tpu.memory_space<vmem>>, vector<16x512xbf16>
    %cst = arith.constant dense<0.000000e+00> : vector<16x512xf32>
    %4 = tpu.matmul %2, %3, %cst {dimension_numbers = #tpu.dot_dimension_numbers<[1], [0], [0], [1], [0, 0, 1, 1], [], []>} : vector<16x16xbf16>, vector<16x512xbf16>, vector<16x512xf32> -> vector<16x512xf32>
    %c0_4 = arith.constant 0 : index
    %c0_5 = arith.constant 0 : index
    %5 = vector.load %arg3[%c0_4, %c0_5] : memref<1x512xf32, #tpu.memory_space<vmem>>, vector<1x512xf32>
    %6 = vector.broadcast %5 : vector<1x512xf32> to vector<16x512xf32>
    %7 = arith.addf %4, %6 : vector<16x512xf32>
    %8 = vector.shape_cast %7 : vector<16x512xf32> to vector<8x2x512xf32>
    %c0_6 = arith.constant 0 : index
    %c0_7 = arith.constant 0 : index
    %9 = vector.load %arg6[%c0_6, %c0_7] : memref<1x512xf32, #tpu.memory_space<vmem>>, vector<1x512xf32>
    %10 = vector.shape_cast %9 : vector<1x512xf32> to vector<1x512xf32>
    %11 = vector.broadcast %10 : vector<1x512xf32> to vector<2x512xf32>
    %cst_8 = arith.constant 0.000000e+00 : f32
    %12 = vector.broadcast %cst_8 : f32 to vector<2x128xf32>
    %13 = arith.truncf %12 : vector<2x128xf32> to vector<2x128xbf16>
    %14 = arith.truncf %12 : vector<2x128xf32> to vector<2x128xbf16>
    %c0_9 = arith.constant 0 : index
    %c0_10 = arith.constant 0 : index
    %15 = vector.load %arg5[%c0_9, %c0_10] : memref<128x512xbf16, #tpu.memory_space<vmem>>, vector<128x512xbf16>
    %cst_11 = arith.constant dense<0.000000e+00> : vector<2x512xf32>
    %16 = tpu.matmul %14, %15, %cst_11 {dimension_numbers = #tpu.dot_dimension_numbers<[1], [0], [0], [1], [0, 0, 1, 1], [], []>} : vector<2x128xbf16>, vector<128x512xbf16>, vector<2x512xf32> -> vector<2x512xf32>
    %17 = arith.addf %16, %11 : vector<2x512xf32>
    %18 = vector.extract_strided_slice %8 {offsets = [0, 0, 0], sizes = [1, 2, 512], strides = [1, 1, 1]} : vector<8x2x512xf32> to vector<1x2x512xf32>
    %19 = vector.shape_cast %18 : vector<1x2x512xf32> to vector<2x512xf32>
    %c0_12 = arith.constant 0 : index
    %c0_13 = arith.constant 0 : index
    %20 = vector.load %arg2[%c0_12, %c0_13] : memref<128x512xbf16, #tpu.memory_space<vmem>>, vector<128x512xbf16>
    %cst_14 = arith.constant dense<0.000000e+00> : vector<2x512xf32>
    %21 = tpu.matmul %13, %20, %cst_14 {dimension_numbers = #tpu.dot_dimension_numbers<[1], [0], [0], [1], [0, 0, 1, 1], [], []>} : vector<2x128xbf16>, vector<128x512xbf16>, vector<2x512xf32> -> vector<2x512xf32>
    %22 = arith.addf %19, %21 : vector<2x512xf32>
    %23 = vector.extract_strided_slice %22 {offsets = [0, 0], sizes = [2, 384], strides = [1, 1]} : vector<2x512xf32> to vector<2x384xf32>
    %24 = arith.negf %23 : vector<2x384xf32>
    %25 = math.exp %24 : vector<2x384xf32>
    %cst_15 = arith.constant 1.000000e+00 : f32
    %26 = vector.broadcast %cst_15 : f32 to vector<2x384xf32>
    %27 = arith.addf %26, %25 : vector<2x384xf32>
    %28 = arith.divf %26, %27 : vector<2x384xf32>
    %29 = vector.extract_strided_slice %22 {offsets = [0, 384], sizes = [2, 128], strides = [1, 1]} : vector<2x512xf32> to vector<2x128xf32>
    %30 = math.tanh %29 : vector<2x128xf32>
    %31 = vector.extract_strided_slice %28 {offsets = [0, 0], sizes = [2, 128], strides = [1, 1]} : vector<2x384xf32> to vector<2x128xf32>
    %32 = vector.extract_strided_slice %28 {offsets = [0, 128], sizes = [2, 128], strides = [1, 1]} : vector<2x384xf32> to vector<2x128xf32>
    %33 = vector.extract_strided_slice %28 {offsets = [0, 256], sizes = [2, 128], strides = [1, 1]} : vector<2x384xf32> to vector<2x128xf32>
    %34 = arith.mulf %32, %12 : vector<2x128xf32>
    %35 = arith.mulf %31, %30 : vector<2x128xf32>
    %36 = arith.addf %34, %35 : vector<2x128xf32>
    %37 = math.tanh %36 : vector<2x128xf32>
    %38 = arith.mulf %33, %37 : vector<2x128xf32>
    %39 = arith.truncf %38 : vector<2x128xf32> to vector<2x128xbf16>
    %c0_16 = arith.constant 0 : index
    %c0_17 = arith.constant 0 : index
    %40 = vector.load %arg4[%c0_16, %c0_17] : memref<128x512xbf16, #tpu.memory_space<vmem>>, vector<128x512xbf16>
    %cst_18 = arith.constant dense<0.000000e+00> : vector<2x512xf32>
    %41 = tpu.matmul %39, %40, %cst_18 {dimension_numbers = #tpu.dot_dimension_numbers<[1], [0], [0], [1], [0, 0, 1, 1], [], []>} : vector<2x128xbf16>, vector<128x512xbf16>, vector<2x512xf32> -> vector<2x512xf32>
    %42 = arith.addf %41, %17 : vector<2x512xf32>
    %43 = vector.extract_strided_slice %42 {offsets = [0, 0], sizes = [2, 384], strides = [1, 1]} : vector<2x512xf32> to vector<2x384xf32>
    %44 = arith.negf %43 : vector<2x384xf32>
    %45 = math.exp %44 : vector<2x384xf32>
    %cst_19 = arith.constant 1.000000e+00 : f32
    %46 = vector.broadcast %cst_19 : f32 to vector<2x384xf32>
    %47 = arith.addf %46, %45 : vector<2x384xf32>
    %48 = arith.divf %46, %47 : vector<2x384xf32>
    %49 = vector.extract_strided_slice %42 {offsets = [0, 384], sizes = [2, 128], strides = [1, 1]} : vector<2x512xf32> to vector<2x128xf32>
    %50 = math.tanh %49 : vector<2x128xf32>
    %51 = vector.extract_strided_slice %48 {offsets = [0, 0], sizes = [2, 128], strides = [1, 1]} : vector<2x384xf32> to vector<2x128xf32>
    %52 = vector.extract_strided_slice %48 {offsets = [0, 128], sizes = [2, 128], strides = [1, 1]} : vector<2x384xf32> to vector<2x128xf32>
    %53 = vector.extract_strided_slice %48 {offsets = [0, 256], sizes = [2, 128], strides = [1, 1]} : vector<2x384xf32> to vector<2x128xf32>
    %54 = arith.mulf %52, %12 : vector<2x128xf32>
    %55 = arith.mulf %51, %50 : vector<2x128xf32>
    %56 = arith.addf %54, %55 : vector<2x128xf32>
    %57 = math.tanh %56 : vector<2x128xf32>
    %58 = arith.mulf %53, %57 : vector<2x128xf32>
    %59 = arith.truncf %38 : vector<2x128xf32> to vector<2x128xbf16>
    %60 = arith.truncf %58 : vector<2x128xf32> to vector<2x128xbf16>
    %c0_20 = arith.constant 0 : index
    %c0_21 = arith.constant 0 : index
    %61 = vector.load %arg5[%c0_20, %c0_21] : memref<128x512xbf16, #tpu.memory_space<vmem>>, vector<128x512xbf16>
    %cst_22 = arith.constant dense<0.000000e+00> : vector<2x512xf32>
    %62 = tpu.matmul %60, %61, %cst_22 {dimension_numbers = #tpu.dot_dimension_numbers<[1], [0], [0], [1], [0, 0, 1, 1], [], []>} : vector<2x128xbf16>, vector<128x512xbf16>, vector<2x512xf32> -> vector<2x512xf32>
    %63 = arith.addf %62, %11 : vector<2x512xf32>
    %64 = vector.extract_strided_slice %8 {offsets = [1, 0, 0], sizes = [1, 2, 512], strides = [1, 1, 1]} : vector<8x2x512xf32> to vector<1x2x512xf32>
    %65 = vector.shape_cast %64 : vector<1x2x512xf32> to vector<2x512xf32>
    %c0_23 = arith.constant 0 : index
    %c0_24 = arith.constant 0 : index
    %66 = vector.load %arg2[%c0_23, %c0_24] : memref<128x512xbf16, #tpu.memory_space<vmem>>, vector<128x512xbf16>
    %cst_25 = arith.constant dense<0.000000e+00> : vector<2x512xf32>
    %67 = tpu.matmul %59, %66, %cst_25 {dimension_numbers = #tpu.dot_dimension_numbers<[1], [0], [0], [1], [0, 0, 1, 1], [], []>} : vector<2x128xbf16>, vector<128x512xbf16>, vector<2x512xf32> -> vector<2x512xf32>
    %68 = arith.addf %65, %67 : vector<2x512xf32>
    %69 = vector.extract_strided_slice %68 {offsets = [0, 0], sizes = [2, 384], strides = [1, 1]} : vector<2x512xf32> to vector<2x384xf32>
    %70 = arith.negf %69 : vector<2x384xf32>
    %71 = math.exp %70 : vector<2x384xf32>
    %cst_26 = arith.constant 1.000000e+00 : f32
    %72 = vector.broadcast %cst_26 : f32 to vector<2x384xf32>
    %73 = arith.addf %72, %71 : vector<2x384xf32>
    %74 = arith.divf %72, %73 : vector<2x384xf32>
    %75 = vector.extract_strided_slice %68 {offsets = [0, 384], sizes = [2, 128], strides = [1, 1]} : vector<2x512xf32> to vector<2x128xf32>
    %76 = math.tanh %75 : vector<2x128xf32>
    %77 = vector.extract_strided_slice %74 {offsets = [0, 0], sizes = [2, 128], strides = [1, 1]} : vector<2x384xf32> to vector<2x128xf32>
    %78 = vector.extract_strided_slice %74 {offsets = [0, 128], sizes = [2, 128], strides = [1, 1]} : vector<2x384xf32> to vector<2x128xf32>
    %79 = vector.extract_strided_slice %74 {offsets = [0, 256], sizes = [2, 128], strides = [1, 1]} : vector<2x384xf32> to vector<2x128xf32>
    %80 = arith.mulf %78, %36 : vector<2x128xf32>
    %81 = arith.mulf %77, %76 : vector<2x128xf32>
    %82 = arith.addf %80, %81 : vector<2x128xf32>
    %83 = math.tanh %82 : vector<2x128xf32>
    %84 = arith.mulf %79, %83 : vector<2x128xf32>
    %85 = arith.truncf %84 : vector<2x128xf32> to vector<2x128xbf16>
    %c0_27 = arith.constant 0 : index
    %c0_28 = arith.constant 0 : index
    %86 = vector.load %arg4[%c0_27, %c0_28] : memref<128x512xbf16, #tpu.memory_space<vmem>>, vector<128x512xbf16>
    %cst_29 = arith.constant dense<0.000000e+00> : vector<2x512xf32>
    %87 = tpu.matmul %85, %86, %cst_29 {dimension_numbers = #tpu.dot_dimension_numbers<[1], [0], [0], [1], [0, 0, 1, 1], [], []>} : vector<2x128xbf16>, vector<128x512xbf16>, vector<2x512xf32> -> vector<2x512xf32>
    %88 = arith.addf %87, %63 : vector<2x512xf32>
    %89 = vector.extract_strided_slice %88 {offsets = [0, 0], sizes = [2, 384], strides = [1, 1]} : vector<2x512xf32> to vector<2x384xf32>
    %90 = arith.negf %89 : vector<2x384xf32>
    %91 = math.exp %90 : vector<2x384xf32>
    %cst_30 = arith.constant 1.000000e+00 : f32
    %92 = vector.broadcast %cst_30 : f32 to vector<2x384xf32>
    %93 = arith.addf %92, %91 : vector<2x384xf32>
    %94 = arith.divf %92, %93 : vector<2x384xf32>
    %95 = vector.extract_strided_slice %88 {offsets = [0, 384], sizes = [2, 128], strides = [1, 1]} : vector<2x512xf32> to vector<2x128xf32>
    %96 = math.tanh %95 : vector<2x128xf32>
    %97 = vector.extract_strided_slice %94 {offsets = [0, 0], sizes = [2, 128], strides = [1, 1]} : vector<2x384xf32> to vector<2x128xf32>
    %98 = vector.extract_strided_slice %94 {offsets = [0, 128], sizes = [2, 128], strides = [1, 1]} : vector<2x384xf32> to vector<2x128xf32>
    %99 = vector.extract_strided_slice %94 {offsets = [0, 256], sizes = [2, 128], strides = [1, 1]} : vector<2x384xf32> to vector<2x128xf32>
    %100 = arith.mulf %98, %56 : vector<2x128xf32>
    %101 = arith.mulf %97, %96 : vector<2x128xf32>
    %102 = arith.addf %100, %101 : vector<2x128xf32>
    %103 = math.tanh %102 : vector<2x128xf32>
    %104 = arith.mulf %99, %103 : vector<2x128xf32>
    %105 = arith.truncf %84 : vector<2x128xf32> to vector<2x128xbf16>
    %106 = arith.truncf %104 : vector<2x128xf32> to vector<2x128xbf16>
    %c0_31 = arith.constant 0 : index
    %c0_32 = arith.constant 0 : index
    %107 = vector.load %arg5[%c0_31, %c0_32] : memref<128x512xbf16, #tpu.memory_space<vmem>>, vector<128x512xbf16>
    %cst_33 = arith.constant dense<0.000000e+00> : vector<2x512xf32>
    %108 = tpu.matmul %106, %107, %cst_33 {dimension_numbers = #tpu.dot_dimension_numbers<[1], [0], [0], [1], [0, 0, 1, 1], [], []>} : vector<2x128xbf16>, vector<128x512xbf16>, vector<2x512xf32> -> vector<2x512xf32>
    %109 = arith.addf %108, %11 : vector<2x512xf32>
    %110 = vector.extract_strided_slice %8 {offsets = [2, 0, 0], sizes = [1, 2, 512], strides = [1, 1, 1]} : vector<8x2x512xf32> to vector<1x2x512xf32>
    %111 = vector.shape_cast %110 : vector<1x2x512xf32> to vector<2x512xf32>
    %c0_34 = arith.constant 0 : index
    %c0_35 = arith.constant 0 : index
    %112 = vector.load %arg2[%c0_34, %c0_35] : memref<128x512xbf16, #tpu.memory_space<vmem>>, vector<128x512xbf16>
    %cst_36 = arith.constant dense<0.000000e+00> : vector<2x512xf32>
    %113 = tpu.matmul %105, %112, %cst_36 {dimension_numbers = #tpu.dot_dimension_numbers<[1], [0], [0], [1], [0, 0, 1, 1], [], []>} : vector<2x128xbf16>, vector<128x512xbf16>, vector<2x512xf32> -> vector<2x512xf32>
    %114 = arith.addf %111, %113 : vector<2x512xf32>
    %115 = vector.extract_strided_slice %114 {offsets = [0, 0], sizes = [2, 384], strides = [1, 1]} : vector<2x512xf32> to vector<2x384xf32>
    %116 = arith.negf %115 : vector<2x384xf32>
    %117 = math.exp %116 : vector<2x384xf32>
    %cst_37 = arith.constant 1.000000e+00 : f32
    %118 = vector.broadcast %cst_37 : f32 to vector<2x384xf32>
    %119 = arith.addf %118, %117 : vector<2x384xf32>
    %120 = arith.divf %118, %119 : vector<2x384xf32>
    %121 = vector.extract_strided_slice %114 {offsets = [0, 384], sizes = [2, 128], strides = [1, 1]} : vector<2x512xf32> to vector<2x128xf32>
    %122 = math.tanh %121 : vector<2x128xf32>
    %123 = vector.extract_strided_slice %120 {offsets = [0, 0], sizes = [2, 128], strides = [1, 1]} : vector<2x384xf32> to vector<2x128xf32>
    %124 = vector.extract_strided_slice %120 {offsets = [0, 128], sizes = [2, 128], strides = [1, 1]} : vector<2x384xf32> to vector<2x128xf32>
    %125 = vector.extract_strided_slice %120 {offsets = [0, 256], sizes = [2, 128], strides = [1, 1]} : vector<2x384xf32> to vector<2x128xf32>
    %126 = arith.mulf %124, %82 : vector<2x128xf32>
    %127 = arith.mulf %123, %122 : vector<2x128xf32>
    %128 = arith.addf %126, %127 : vector<2x128xf32>
    %129 = math.tanh %128 : vector<2x128xf32>
    %130 = arith.mulf %125, %129 : vector<2x128xf32>
    %131 = arith.truncf %130 : vector<2x128xf32> to vector<2x128xbf16>
    %c0_38 = arith.constant 0 : index
    %c0_39 = arith.constant 0 : index
    %132 = vector.load %arg4[%c0_38, %c0_39] : memref<128x512xbf16, #tpu.memory_space<vmem>>, vector<128x512xbf16>
    %cst_40 = arith.constant dense<0.000000e+00> : vector<2x512xf32>
    %133 = tpu.matmul %131, %132, %cst_40 {dimension_numbers = #tpu.dot_dimension_numbers<[1], [0], [0], [1], [0, 0, 1, 1], [], []>} : vector<2x128xbf16>, vector<128x512xbf16>, vector<2x512xf32> -> vector<2x512xf32>
    %134 = arith.addf %133, %109 : vector<2x512xf32>
    %135 = vector.extract_strided_slice %134 {offsets = [0, 0], sizes = [2, 384], strides = [1, 1]} : vector<2x512xf32> to vector<2x384xf32>
    %136 = arith.negf %135 : vector<2x384xf32>
    %137 = math.exp %136 : vector<2x384xf32>
    %cst_41 = arith.constant 1.000000e+00 : f32
    %138 = vector.broadcast %cst_41 : f32 to vector<2x384xf32>
    %139 = arith.addf %138, %137 : vector<2x384xf32>
    %140 = arith.divf %138, %139 : vector<2x384xf32>
    %141 = vector.extract_strided_slice %134 {offsets = [0, 384], sizes = [2, 128], strides = [1, 1]} : vector<2x512xf32> to vector<2x128xf32>
    %142 = math.tanh %141 : vector<2x128xf32>
    %143 = vector.extract_strided_slice %140 {offsets = [0, 0], sizes = [2, 128], strides = [1, 1]} : vector<2x384xf32> to vector<2x128xf32>
    %144 = vector.extract_strided_slice %140 {offsets = [0, 128], sizes = [2, 128], strides = [1, 1]} : vector<2x384xf32> to vector<2x128xf32>
    %145 = vector.extract_strided_slice %140 {offsets = [0, 256], sizes = [2, 128], strides = [1, 1]} : vector<2x384xf32> to vector<2x128xf32>
    %146 = arith.mulf %144, %102 : vector<2x128xf32>
    %147 = arith.mulf %143, %142 : vector<2x128xf32>
    %148 = arith.addf %146, %147 : vector<2x128xf32>
    %149 = math.tanh %148 : vector<2x128xf32>
    %150 = arith.mulf %145, %149 : vector<2x128xf32>
    %151 = arith.truncf %130 : vector<2x128xf32> to vector<2x128xbf16>
    %152 = arith.truncf %150 : vector<2x128xf32> to vector<2x128xbf16>
    %c0_42 = arith.constant 0 : index
    %c0_43 = arith.constant 0 : index
    %153 = vector.load %arg5[%c0_42, %c0_43] : memref<128x512xbf16, #tpu.memory_space<vmem>>, vector<128x512xbf16>
    %cst_44 = arith.constant dense<0.000000e+00> : vector<2x512xf32>
    %154 = tpu.matmul %152, %153, %cst_44 {dimension_numbers = #tpu.dot_dimension_numbers<[1], [0], [0], [1], [0, 0, 1, 1], [], []>} : vector<2x128xbf16>, vector<128x512xbf16>, vector<2x512xf32> -> vector<2x512xf32>
    %155 = arith.addf %154, %11 : vector<2x512xf32>
    %156 = vector.extract_strided_slice %8 {offsets = [3, 0, 0], sizes = [1, 2, 512], strides = [1, 1, 1]} : vector<8x2x512xf32> to vector<1x2x512xf32>
    %157 = vector.shape_cast %156 : vector<1x2x512xf32> to vector<2x512xf32>
    %c0_45 = arith.constant 0 : index
    %c0_46 = arith.constant 0 : index
    %158 = vector.load %arg2[%c0_45, %c0_46] : memref<128x512xbf16, #tpu.memory_space<vmem>>, vector<128x512xbf16>
    %cst_47 = arith.constant dense<0.000000e+00> : vector<2x512xf32>
    %159 = tpu.matmul %151, %158, %cst_47 {dimension_numbers = #tpu.dot_dimension_numbers<[1], [0], [0], [1], [0, 0, 1, 1], [], []>} : vector<2x128xbf16>, vector<128x512xbf16>, vector<2x512xf32> -> vector<2x512xf32>
    %160 = arith.addf %157, %159 : vector<2x512xf32>
    %161 = vector.extract_strided_slice %160 {offsets = [0, 0], sizes = [2, 384], strides = [1, 1]} : vector<2x512xf32> to vector<2x384xf32>
    %162 = arith.negf %161 : vector<2x384xf32>
    %163 = math.exp %162 : vector<2x384xf32>
    %cst_48 = arith.constant 1.000000e+00 : f32
    %164 = vector.broadcast %cst_48 : f32 to vector<2x384xf32>
    %165 = arith.addf %164, %163 : vector<2x384xf32>
    %166 = arith.divf %164, %165 : vector<2x384xf32>
    %167 = vector.extract_strided_slice %160 {offsets = [0, 384], sizes = [2, 128], strides = [1, 1]} : vector<2x512xf32> to vector<2x128xf32>
    %168 = math.tanh %167 : vector<2x128xf32>
    %169 = vector.extract_strided_slice %166 {offsets = [0, 0], sizes = [2, 128], strides = [1, 1]} : vector<2x384xf32> to vector<2x128xf32>
    %170 = vector.extract_strided_slice %166 {offsets = [0, 128], sizes = [2, 128], strides = [1, 1]} : vector<2x384xf32> to vector<2x128xf32>
    %171 = vector.extract_strided_slice %166 {offsets = [0, 256], sizes = [2, 128], strides = [1, 1]} : vector<2x384xf32> to vector<2x128xf32>
    %172 = arith.mulf %170, %128 : vector<2x128xf32>
    %173 = arith.mulf %169, %168 : vector<2x128xf32>
    %174 = arith.addf %172, %173 : vector<2x128xf32>
    %175 = math.tanh %174 : vector<2x128xf32>
    %176 = arith.mulf %171, %175 : vector<2x128xf32>
    %177 = arith.truncf %176 : vector<2x128xf32> to vector<2x128xbf16>
    %c0_49 = arith.constant 0 : index
    %c0_50 = arith.constant 0 : index
    %178 = vector.load %arg4[%c0_49, %c0_50] : memref<128x512xbf16, #tpu.memory_space<vmem>>, vector<128x512xbf16>
    %cst_51 = arith.constant dense<0.000000e+00> : vector<2x512xf32>
    %179 = tpu.matmul %177, %178, %cst_51 {dimension_numbers = #tpu.dot_dimension_numbers<[1], [0], [0], [1], [0, 0, 1, 1], [], []>} : vector<2x128xbf16>, vector<128x512xbf16>, vector<2x512xf32> -> vector<2x512xf32>
    %180 = arith.addf %179, %155 : vector<2x512xf32>
    %181 = vector.extract_strided_slice %180 {offsets = [0, 0], sizes = [2, 384], strides = [1, 1]} : vector<2x512xf32> to vector<2x384xf32>
    %182 = arith.negf %181 : vector<2x384xf32>
    %183 = math.exp %182 : vector<2x384xf32>
    %cst_52 = arith.constant 1.000000e+00 : f32
    %184 = vector.broadcast %cst_52 : f32 to vector<2x384xf32>
    %185 = arith.addf %184, %183 : vector<2x384xf32>
    %186 = arith.divf %184, %185 : vector<2x384xf32>
    %187 = vector.extract_strided_slice %180 {offsets = [0, 384], sizes = [2, 128], strides = [1, 1]} : vector<2x512xf32> to vector<2x128xf32>
    %188 = math.tanh %187 : vector<2x128xf32>
    %189 = vector.extract_strided_slice %186 {offsets = [0, 0], sizes = [2, 128], strides = [1, 1]} : vector<2x384xf32> to vector<2x128xf32>
    %190 = vector.extract_strided_slice %186 {offsets = [0, 128], sizes = [2, 128], strides = [1, 1]} : vector<2x384xf32> to vector<2x128xf32>
    %191 = vector.extract_strided_slice %186 {offsets = [0, 256], sizes = [2, 128], strides = [1, 1]} : vector<2x384xf32> to vector<2x128xf32>
    %192 = arith.mulf %190, %148 : vector<2x128xf32>
    %193 = arith.mulf %189, %188 : vector<2x128xf32>
    %194 = arith.addf %192, %193 : vector<2x128xf32>
    %195 = math.tanh %194 : vector<2x128xf32>
    %196 = arith.mulf %191, %195 : vector<2x128xf32>
    %197 = arith.truncf %176 : vector<2x128xf32> to vector<2x128xbf16>
    %198 = arith.truncf %196 : vector<2x128xf32> to vector<2x128xbf16>
    %c0_53 = arith.constant 0 : index
    %c0_54 = arith.constant 0 : index
    %199 = vector.load %arg5[%c0_53, %c0_54] : memref<128x512xbf16, #tpu.memory_space<vmem>>, vector<128x512xbf16>
    %cst_55 = arith.constant dense<0.000000e+00> : vector<2x512xf32>
    %200 = tpu.matmul %198, %199, %cst_55 {dimension_numbers = #tpu.dot_dimension_numbers<[1], [0], [0], [1], [0, 0, 1, 1], [], []>} : vector<2x128xbf16>, vector<128x512xbf16>, vector<2x512xf32> -> vector<2x512xf32>
    %201 = arith.addf %200, %11 : vector<2x512xf32>
    %202 = vector.extract_strided_slice %8 {offsets = [4, 0, 0], sizes = [1, 2, 512], strides = [1, 1, 1]} : vector<8x2x512xf32> to vector<1x2x512xf32>
    %203 = vector.shape_cast %202 : vector<1x2x512xf32> to vector<2x512xf32>
    %c0_56 = arith.constant 0 : index
    %c0_57 = arith.constant 0 : index
    %204 = vector.load %arg2[%c0_56, %c0_57] : memref<128x512xbf16, #tpu.memory_space<vmem>>, vector<128x512xbf16>
    %cst_58 = arith.constant dense<0.000000e+00> : vector<2x512xf32>
    %205 = tpu.matmul %197, %204, %cst_58 {dimension_numbers = #tpu.dot_dimension_numbers<[1], [0], [0], [1], [0, 0, 1, 1], [], []>} : vector<2x128xbf16>, vector<128x512xbf16>, vector<2x512xf32> -> vector<2x512xf32>
    %206 = arith.addf %203, %205 : vector<2x512xf32>
    %207 = vector.extract_strided_slice %206 {offsets = [0, 0], sizes = [2, 384], strides = [1, 1]} : vector<2x512xf32> to vector<2x384xf32>
    %208 = arith.negf %207 : vector<2x384xf32>
    %209 = math.exp %208 : vector<2x384xf32>
    %cst_59 = arith.constant 1.000000e+00 : f32
    %210 = vector.broadcast %cst_59 : f32 to vector<2x384xf32>
    %211 = arith.addf %210, %209 : vector<2x384xf32>
    %212 = arith.divf %210, %211 : vector<2x384xf32>
    %213 = vector.extract_strided_slice %206 {offsets = [0, 384], sizes = [2, 128], strides = [1, 1]} : vector<2x512xf32> to vector<2x128xf32>
    %214 = math.tanh %213 : vector<2x128xf32>
    %215 = vector.extract_strided_slice %212 {offsets = [0, 0], sizes = [2, 128], strides = [1, 1]} : vector<2x384xf32> to vector<2x128xf32>
    %216 = vector.extract_strided_slice %212 {offsets = [0, 128], sizes = [2, 128], strides = [1, 1]} : vector<2x384xf32> to vector<2x128xf32>
    %217 = vector.extract_strided_slice %212 {offsets = [0, 256], sizes = [2, 128], strides = [1, 1]} : vector<2x384xf32> to vector<2x128xf32>
    %218 = arith.mulf %216, %174 : vector<2x128xf32>
    %219 = arith.mulf %215, %214 : vector<2x128xf32>
    %220 = arith.addf %218, %219 : vector<2x128xf32>
    %221 = math.tanh %220 : vector<2x128xf32>
    %222 = arith.mulf %217, %221 : vector<2x128xf32>
    %223 = arith.truncf %222 : vector<2x128xf32> to vector<2x128xbf16>
    %c0_60 = arith.constant 0 : index
    %c0_61 = arith.constant 0 : index
    %224 = vector.load %arg4[%c0_60, %c0_61] : memref<128x512xbf16, #tpu.memory_space<vmem>>, vector<128x512xbf16>
    %cst_62 = arith.constant dense<0.000000e+00> : vector<2x512xf32>
    %225 = tpu.matmul %223, %224, %cst_62 {dimension_numbers = #tpu.dot_dimension_numbers<[1], [0], [0], [1], [0, 0, 1, 1], [], []>} : vector<2x128xbf16>, vector<128x512xbf16>, vector<2x512xf32> -> vector<2x512xf32>
    %226 = arith.addf %225, %201 : vector<2x512xf32>
    %227 = vector.extract_strided_slice %226 {offsets = [0, 0], sizes = [2, 384], strides = [1, 1]} : vector<2x512xf32> to vector<2x384xf32>
    %228 = arith.negf %227 : vector<2x384xf32>
    %229 = math.exp %228 : vector<2x384xf32>
    %cst_63 = arith.constant 1.000000e+00 : f32
    %230 = vector.broadcast %cst_63 : f32 to vector<2x384xf32>
    %231 = arith.addf %230, %229 : vector<2x384xf32>
    %232 = arith.divf %230, %231 : vector<2x384xf32>
    %233 = vector.extract_strided_slice %226 {offsets = [0, 384], sizes = [2, 128], strides = [1, 1]} : vector<2x512xf32> to vector<2x128xf32>
    %234 = math.tanh %233 : vector<2x128xf32>
    %235 = vector.extract_strided_slice %232 {offsets = [0, 0], sizes = [2, 128], strides = [1, 1]} : vector<2x384xf32> to vector<2x128xf32>
    %236 = vector.extract_strided_slice %232 {offsets = [0, 128], sizes = [2, 128], strides = [1, 1]} : vector<2x384xf32> to vector<2x128xf32>
    %237 = vector.extract_strided_slice %232 {offsets = [0, 256], sizes = [2, 128], strides = [1, 1]} : vector<2x384xf32> to vector<2x128xf32>
    %238 = arith.mulf %236, %194 : vector<2x128xf32>
    %239 = arith.mulf %235, %234 : vector<2x128xf32>
    %240 = arith.addf %238, %239 : vector<2x128xf32>
    %241 = math.tanh %240 : vector<2x128xf32>
    %242 = arith.mulf %237, %241 : vector<2x128xf32>
    %243 = arith.truncf %222 : vector<2x128xf32> to vector<2x128xbf16>
    %244 = arith.truncf %242 : vector<2x128xf32> to vector<2x128xbf16>
    %c0_64 = arith.constant 0 : index
    %c0_65 = arith.constant 0 : index
    %245 = vector.load %arg5[%c0_64, %c0_65] : memref<128x512xbf16, #tpu.memory_space<vmem>>, vector<128x512xbf16>
    %cst_66 = arith.constant dense<0.000000e+00> : vector<2x512xf32>
    %246 = tpu.matmul %244, %245, %cst_66 {dimension_numbers = #tpu.dot_dimension_numbers<[1], [0], [0], [1], [0, 0, 1, 1], [], []>} : vector<2x128xbf16>, vector<128x512xbf16>, vector<2x512xf32> -> vector<2x512xf32>
    %247 = arith.addf %246, %11 : vector<2x512xf32>
    %248 = vector.extract_strided_slice %8 {offsets = [5, 0, 0], sizes = [1, 2, 512], strides = [1, 1, 1]} : vector<8x2x512xf32> to vector<1x2x512xf32>
    %249 = vector.shape_cast %248 : vector<1x2x512xf32> to vector<2x512xf32>
    %c0_67 = arith.constant 0 : index
    %c0_68 = arith.constant 0 : index
    %250 = vector.load %arg2[%c0_67, %c0_68] : memref<128x512xbf16, #tpu.memory_space<vmem>>, vector<128x512xbf16>
    %cst_69 = arith.constant dense<0.000000e+00> : vector<2x512xf32>
    %251 = tpu.matmul %243, %250, %cst_69 {dimension_numbers = #tpu.dot_dimension_numbers<[1], [0], [0], [1], [0, 0, 1, 1], [], []>} : vector<2x128xbf16>, vector<128x512xbf16>, vector<2x512xf32> -> vector<2x512xf32>
    %252 = arith.addf %249, %251 : vector<2x512xf32>
    %253 = vector.extract_strided_slice %252 {offsets = [0, 0], sizes = [2, 384], strides = [1, 1]} : vector<2x512xf32> to vector<2x384xf32>
    %254 = arith.negf %253 : vector<2x384xf32>
    %255 = math.exp %254 : vector<2x384xf32>
    %cst_70 = arith.constant 1.000000e+00 : f32
    %256 = vector.broadcast %cst_70 : f32 to vector<2x384xf32>
    %257 = arith.addf %256, %255 : vector<2x384xf32>
    %258 = arith.divf %256, %257 : vector<2x384xf32>
    %259 = vector.extract_strided_slice %252 {offsets = [0, 384], sizes = [2, 128], strides = [1, 1]} : vector<2x512xf32> to vector<2x128xf32>
    %260 = math.tanh %259 : vector<2x128xf32>
    %261 = vector.extract_strided_slice %258 {offsets = [0, 0], sizes = [2, 128], strides = [1, 1]} : vector<2x384xf32> to vector<2x128xf32>
    %262 = vector.extract_strided_slice %258 {offsets = [0, 128], sizes = [2, 128], strides = [1, 1]} : vector<2x384xf32> to vector<2x128xf32>
    %263 = vector.extract_strided_slice %258 {offsets = [0, 256], sizes = [2, 128], strides = [1, 1]} : vector<2x384xf32> to vector<2x128xf32>
    %264 = arith.mulf %262, %220 : vector<2x128xf32>
    %265 = arith.mulf %261, %260 : vector<2x128xf32>
    %266 = arith.addf %264, %265 : vector<2x128xf32>
    %267 = math.tanh %266 : vector<2x128xf32>
    %268 = arith.mulf %263, %267 : vector<2x128xf32>
    %269 = arith.truncf %268 : vector<2x128xf32> to vector<2x128xbf16>
    %c0_71 = arith.constant 0 : index
    %c0_72 = arith.constant 0 : index
    %270 = vector.load %arg4[%c0_71, %c0_72] : memref<128x512xbf16, #tpu.memory_space<vmem>>, vector<128x512xbf16>
    %cst_73 = arith.constant dense<0.000000e+00> : vector<2x512xf32>
    %271 = tpu.matmul %269, %270, %cst_73 {dimension_numbers = #tpu.dot_dimension_numbers<[1], [0], [0], [1], [0, 0, 1, 1], [], []>} : vector<2x128xbf16>, vector<128x512xbf16>, vector<2x512xf32> -> vector<2x512xf32>
    %272 = arith.addf %271, %247 : vector<2x512xf32>
    %273 = vector.extract_strided_slice %272 {offsets = [0, 0], sizes = [2, 384], strides = [1, 1]} : vector<2x512xf32> to vector<2x384xf32>
    %274 = arith.negf %273 : vector<2x384xf32>
    %275 = math.exp %274 : vector<2x384xf32>
    %cst_74 = arith.constant 1.000000e+00 : f32
    %276 = vector.broadcast %cst_74 : f32 to vector<2x384xf32>
    %277 = arith.addf %276, %275 : vector<2x384xf32>
    %278 = arith.divf %276, %277 : vector<2x384xf32>
    %279 = vector.extract_strided_slice %272 {offsets = [0, 384], sizes = [2, 128], strides = [1, 1]} : vector<2x512xf32> to vector<2x128xf32>
    %280 = math.tanh %279 : vector<2x128xf32>
    %281 = vector.extract_strided_slice %278 {offsets = [0, 0], sizes = [2, 128], strides = [1, 1]} : vector<2x384xf32> to vector<2x128xf32>
    %282 = vector.extract_strided_slice %278 {offsets = [0, 128], sizes = [2, 128], strides = [1, 1]} : vector<2x384xf32> to vector<2x128xf32>
    %283 = vector.extract_strided_slice %278 {offsets = [0, 256], sizes = [2, 128], strides = [1, 1]} : vector<2x384xf32> to vector<2x128xf32>
    %284 = arith.mulf %282, %240 : vector<2x128xf32>
    %285 = arith.mulf %281, %280 : vector<2x128xf32>
    %286 = arith.addf %284, %285 : vector<2x128xf32>
    %287 = math.tanh %286 : vector<2x128xf32>
    %288 = arith.mulf %283, %287 : vector<2x128xf32>
    %289 = arith.truncf %268 : vector<2x128xf32> to vector<2x128xbf16>
    %290 = arith.truncf %288 : vector<2x128xf32> to vector<2x128xbf16>
    %c0_75 = arith.constant 0 : index
    %c0_76 = arith.constant 0 : index
    %291 = vector.load %arg5[%c0_75, %c0_76] : memref<128x512xbf16, #tpu.memory_space<vmem>>, vector<128x512xbf16>
    %cst_77 = arith.constant dense<0.000000e+00> : vector<2x512xf32>
    %292 = tpu.matmul %290, %291, %cst_77 {dimension_numbers = #tpu.dot_dimension_numbers<[1], [0], [0], [1], [0, 0, 1, 1], [], []>} : vector<2x128xbf16>, vector<128x512xbf16>, vector<2x512xf32> -> vector<2x512xf32>
    %293 = arith.addf %292, %11 : vector<2x512xf32>
    %294 = vector.extract_strided_slice %8 {offsets = [6, 0, 0], sizes = [1, 2, 512], strides = [1, 1, 1]} : vector<8x2x512xf32> to vector<1x2x512xf32>
    %295 = vector.shape_cast %294 : vector<1x2x512xf32> to vector<2x512xf32>
    %c0_78 = arith.constant 0 : index
    %c0_79 = arith.constant 0 : index
    %296 = vector.load %arg2[%c0_78, %c0_79] : memref<128x512xbf16, #tpu.memory_space<vmem>>, vector<128x512xbf16>
    %cst_80 = arith.constant dense<0.000000e+00> : vector<2x512xf32>
    %297 = tpu.matmul %289, %296, %cst_80 {dimension_numbers = #tpu.dot_dimension_numbers<[1], [0], [0], [1], [0, 0, 1, 1], [], []>} : vector<2x128xbf16>, vector<128x512xbf16>, vector<2x512xf32> -> vector<2x512xf32>
    %298 = arith.addf %295, %297 : vector<2x512xf32>
    %299 = vector.extract_strided_slice %298 {offsets = [0, 0], sizes = [2, 384], strides = [1, 1]} : vector<2x512xf32> to vector<2x384xf32>
    %300 = arith.negf %299 : vector<2x384xf32>
    %301 = math.exp %300 : vector<2x384xf32>
    %cst_81 = arith.constant 1.000000e+00 : f32
    %302 = vector.broadcast %cst_81 : f32 to vector<2x384xf32>
    %303 = arith.addf %302, %301 : vector<2x384xf32>
    %304 = arith.divf %302, %303 : vector<2x384xf32>
    %305 = vector.extract_strided_slice %298 {offsets = [0, 384], sizes = [2, 128], strides = [1, 1]} : vector<2x512xf32> to vector<2x128xf32>
    %306 = math.tanh %305 : vector<2x128xf32>
    %307 = vector.extract_strided_slice %304 {offsets = [0, 0], sizes = [2, 128], strides = [1, 1]} : vector<2x384xf32> to vector<2x128xf32>
    %308 = vector.extract_strided_slice %304 {offsets = [0, 128], sizes = [2, 128], strides = [1, 1]} : vector<2x384xf32> to vector<2x128xf32>
    %309 = vector.extract_strided_slice %304 {offsets = [0, 256], sizes = [2, 128], strides = [1, 1]} : vector<2x384xf32> to vector<2x128xf32>
    %310 = arith.mulf %308, %266 : vector<2x128xf32>
    %311 = arith.mulf %307, %306 : vector<2x128xf32>
    %312 = arith.addf %310, %311 : vector<2x128xf32>
    %313 = math.tanh %312 : vector<2x128xf32>
    %314 = arith.mulf %309, %313 : vector<2x128xf32>
    %315 = arith.truncf %314 : vector<2x128xf32> to vector<2x128xbf16>
    %c0_82 = arith.constant 0 : index
    %c0_83 = arith.constant 0 : index
    %316 = vector.load %arg4[%c0_82, %c0_83] : memref<128x512xbf16, #tpu.memory_space<vmem>>, vector<128x512xbf16>
    %cst_84 = arith.constant dense<0.000000e+00> : vector<2x512xf32>
    %317 = tpu.matmul %315, %316, %cst_84 {dimension_numbers = #tpu.dot_dimension_numbers<[1], [0], [0], [1], [0, 0, 1, 1], [], []>} : vector<2x128xbf16>, vector<128x512xbf16>, vector<2x512xf32> -> vector<2x512xf32>
    %318 = arith.addf %317, %293 : vector<2x512xf32>
    %319 = vector.extract_strided_slice %318 {offsets = [0, 0], sizes = [2, 384], strides = [1, 1]} : vector<2x512xf32> to vector<2x384xf32>
    %320 = arith.negf %319 : vector<2x384xf32>
    %321 = math.exp %320 : vector<2x384xf32>
    %cst_85 = arith.constant 1.000000e+00 : f32
    %322 = vector.broadcast %cst_85 : f32 to vector<2x384xf32>
    %323 = arith.addf %322, %321 : vector<2x384xf32>
    %324 = arith.divf %322, %323 : vector<2x384xf32>
    %325 = vector.extract_strided_slice %318 {offsets = [0, 384], sizes = [2, 128], strides = [1, 1]} : vector<2x512xf32> to vector<2x128xf32>
    %326 = math.tanh %325 : vector<2x128xf32>
    %327 = vector.extract_strided_slice %324 {offsets = [0, 0], sizes = [2, 128], strides = [1, 1]} : vector<2x384xf32> to vector<2x128xf32>
    %328 = vector.extract_strided_slice %324 {offsets = [0, 128], sizes = [2, 128], strides = [1, 1]} : vector<2x384xf32> to vector<2x128xf32>
    %329 = vector.extract_strided_slice %324 {offsets = [0, 256], sizes = [2, 128], strides = [1, 1]} : vector<2x384xf32> to vector<2x128xf32>
    %330 = arith.mulf %328, %286 : vector<2x128xf32>
    %331 = arith.mulf %327, %326 : vector<2x128xf32>
    %332 = arith.addf %330, %331 : vector<2x128xf32>
    %333 = math.tanh %332 : vector<2x128xf32>
    %334 = arith.mulf %329, %333 : vector<2x128xf32>
    %335 = arith.truncf %314 : vector<2x128xf32> to vector<2x128xbf16>
    %336 = arith.truncf %334 : vector<2x128xf32> to vector<2x128xbf16>
    %c0_86 = arith.constant 0 : index
    %c0_87 = arith.constant 0 : index
    %337 = vector.load %arg5[%c0_86, %c0_87] : memref<128x512xbf16, #tpu.memory_space<vmem>>, vector<128x512xbf16>
    %cst_88 = arith.constant dense<0.000000e+00> : vector<2x512xf32>
    %338 = tpu.matmul %336, %337, %cst_88 {dimension_numbers = #tpu.dot_dimension_numbers<[1], [0], [0], [1], [0, 0, 1, 1], [], []>} : vector<2x128xbf16>, vector<128x512xbf16>, vector<2x512xf32> -> vector<2x512xf32>
    %339 = arith.addf %338, %11 : vector<2x512xf32>
    %340 = vector.extract_strided_slice %8 {offsets = [7, 0, 0], sizes = [1, 2, 512], strides = [1, 1, 1]} : vector<8x2x512xf32> to vector<1x2x512xf32>
    %341 = vector.shape_cast %340 : vector<1x2x512xf32> to vector<2x512xf32>
    %c0_89 = arith.constant 0 : index
    %c0_90 = arith.constant 0 : index
    %342 = vector.load %arg2[%c0_89, %c0_90] : memref<128x512xbf16, #tpu.memory_space<vmem>>, vector<128x512xbf16>
    %cst_91 = arith.constant dense<0.000000e+00> : vector<2x512xf32>
    %343 = tpu.matmul %335, %342, %cst_91 {dimension_numbers = #tpu.dot_dimension_numbers<[1], [0], [0], [1], [0, 0, 1, 1], [], []>} : vector<2x128xbf16>, vector<128x512xbf16>, vector<2x512xf32> -> vector<2x512xf32>
    %344 = arith.addf %341, %343 : vector<2x512xf32>
    %345 = vector.extract_strided_slice %344 {offsets = [0, 0], sizes = [2, 384], strides = [1, 1]} : vector<2x512xf32> to vector<2x384xf32>
    %346 = arith.negf %345 : vector<2x384xf32>
    %347 = math.exp %346 : vector<2x384xf32>
    %cst_92 = arith.constant 1.000000e+00 : f32
    %348 = vector.broadcast %cst_92 : f32 to vector<2x384xf32>
    %349 = arith.addf %348, %347 : vector<2x384xf32>
    %350 = arith.divf %348, %349 : vector<2x384xf32>
    %351 = vector.extract_strided_slice %344 {offsets = [0, 384], sizes = [2, 128], strides = [1, 1]} : vector<2x512xf32> to vector<2x128xf32>
    %352 = math.tanh %351 : vector<2x128xf32>
    %353 = vector.extract_strided_slice %350 {offsets = [0, 0], sizes = [2, 128], strides = [1, 1]} : vector<2x384xf32> to vector<2x128xf32>
    %354 = vector.extract_strided_slice %350 {offsets = [0, 128], sizes = [2, 128], strides = [1, 1]} : vector<2x384xf32> to vector<2x128xf32>
    %355 = vector.extract_strided_slice %350 {offsets = [0, 256], sizes = [2, 128], strides = [1, 1]} : vector<2x384xf32> to vector<2x128xf32>
    %356 = arith.mulf %354, %312 : vector<2x128xf32>
    %357 = arith.mulf %353, %352 : vector<2x128xf32>
    %358 = arith.addf %356, %357 : vector<2x128xf32>
    %359 = math.tanh %358 : vector<2x128xf32>
    %360 = arith.mulf %355, %359 : vector<2x128xf32>
    %361 = arith.truncf %360 : vector<2x128xf32> to vector<2x128xbf16>
    %c0_93 = arith.constant 0 : index
    %c0_94 = arith.constant 0 : index
    %362 = vector.load %arg4[%c0_93, %c0_94] : memref<128x512xbf16, #tpu.memory_space<vmem>>, vector<128x512xbf16>
    %cst_95 = arith.constant dense<0.000000e+00> : vector<2x512xf32>
    %363 = tpu.matmul %361, %362, %cst_95 {dimension_numbers = #tpu.dot_dimension_numbers<[1], [0], [0], [1], [0, 0, 1, 1], [], []>} : vector<2x128xbf16>, vector<128x512xbf16>, vector<2x512xf32> -> vector<2x512xf32>
    %364 = arith.addf %363, %339 : vector<2x512xf32>
    %365 = vector.extract_strided_slice %364 {offsets = [0, 0], sizes = [2, 384], strides = [1, 1]} : vector<2x512xf32> to vector<2x384xf32>
    %366 = arith.negf %365 : vector<2x384xf32>
    %367 = math.exp %366 : vector<2x384xf32>
    %cst_96 = arith.constant 1.000000e+00 : f32
    %368 = vector.broadcast %cst_96 : f32 to vector<2x384xf32>
    %369 = arith.addf %368, %367 : vector<2x384xf32>
    %370 = arith.divf %368, %369 : vector<2x384xf32>
    %371 = vector.extract_strided_slice %364 {offsets = [0, 384], sizes = [2, 128], strides = [1, 1]} : vector<2x512xf32> to vector<2x128xf32>
    %372 = math.tanh %371 : vector<2x128xf32>
    %373 = vector.extract_strided_slice %370 {offsets = [0, 0], sizes = [2, 128], strides = [1, 1]} : vector<2x384xf32> to vector<2x128xf32>
    %374 = vector.extract_strided_slice %370 {offsets = [0, 128], sizes = [2, 128], strides = [1, 1]} : vector<2x384xf32> to vector<2x128xf32>
    %375 = vector.extract_strided_slice %370 {offsets = [0, 256], sizes = [2, 128], strides = [1, 1]} : vector<2x384xf32> to vector<2x128xf32>
    %376 = arith.mulf %374, %332 : vector<2x128xf32>
    %377 = arith.mulf %373, %372 : vector<2x128xf32>
    %378 = arith.addf %376, %377 : vector<2x128xf32>
    %379 = math.tanh %378 : vector<2x128xf32>
    %380 = arith.mulf %375, %379 : vector<2x128xf32>
    %c0_97 = arith.constant 0 : index
    %c0_98 = arith.constant 0 : index
    %381 = vector.load %arg7[%c0_97, %c0_98] : memref<1x128xf32, #tpu.memory_space<vmem>>, vector<1x128xf32>
    %382 = vector.broadcast %381 : vector<1x128xf32> to vector<2x128xf32>
    %383 = arith.mulf %380, %382 : vector<2x128xf32>
    %cst_99 = arith.constant dense<0.000000e+00> : vector<2xf32>
    %384 = vector.multi_reduction <add>, %383, %cst_99 [1] : vector<2x128xf32> to vector<2xf32>
    %385 = vector.shape_cast %384 : vector<2xf32> to vector<2x1xf32>
    %c0_100 = arith.constant 0 : index
    %c0_101 = arith.constant 0 : index
    %386 = vector.load %arg8[%c0_100, %c0_101] : memref<1x1xf32, #tpu.memory_space<vmem>>, vector<1x1xf32>
    %387 = vector.broadcast %386 : vector<1x1xf32> to vector<2x1xf32>
    %388 = arith.addf %385, %387 : vector<2x1xf32>
    %389 = arith.negf %388 : vector<2x1xf32>
    %390 = math.exp %389 : vector<2x1xf32>
    %cst_102 = arith.constant 1.000000e+00 : f32
    %391 = vector.broadcast %cst_102 : f32 to vector<2x1xf32>
    %392 = arith.addf %391, %390 : vector<2x1xf32>
    %393 = arith.divf %391, %392 : vector<2x1xf32>
    %c0_103 = arith.constant 0 : index
    %c0_104 = arith.constant 0 : index
    %394 = vector.load %arg9[%c0_103, %c0_104] : memref<2x1xf32, #tpu.memory_space<vmem>>, vector<2x1xf32>
    tpu.vector_store %arg9[%c0_103, %c0_104], %393 {strides = array<i32>} : memref<2x1xf32, #tpu.memory_space<vmem>>, vector<2x1xf32>,
    return
  }
}

</mosaic_0001>

<llo_original>
// kernel: lstm_forward.1
$region0: #{lstm_forward.1}
  #allocation0 [shape = 'u32[]', space=smem, size = 0x4, offset = 0x4, fixed_abs, tag = 'smem constant byte address 0x4 - core index']
  #allocation1 [shape = 'u32[144,128]{1,0:T(1,128)}', space=vmem, size = 0x12000, scoped, tag = 'internal scratch']
  #allocation2 [shape = 'f32[1,1]{1,0:T(1,128)S(1)}', space=vmem, size = 0x200, scoped, tag = 'scoped memory for lstm_forward.1']
  %s0 = inlined_call_operand.vmem [shape: f32[8,2,16], index: 0, kind: input, shape index: {}]
  %s1 = inlined_call_operand.vmem [shape: bf16[16,512], index: 1, kind: input, shape index: {}]
  %s2 = inlined_call_operand.hbm [shape: bf16[128,512], index: 2, kind: input, shape index: {}]
  %s3 = inlined_call_operand.vmem [shape: f32[1,512], index: 3, kind: input, shape index: {}]
  %s4 = inlined_call_operand.hbm [shape: bf16[128,512], index: 4, kind: input, shape index: {}]
  %s5 = inlined_call_operand.hbm [shape: bf16[128,512], index: 5, kind: input, shape index: {}]
  %s6 = inlined_call_operand.vmem [shape: f32[1,512], index: 6, kind: input, shape index: {}]
  %s7 = inlined_call_operand.vmem [shape: f32[1,128], index: 7, kind: input, shape index: {}]
  %s8 = inlined_call_operand.<no memory space> [shape: f32[1,1], index: 8, kind: input, shape index: {}]
  %s9 = inlined_call_operand.vmem [shape: f32[2,1], index: 9, kind: output, shape index: {}]
  %s10 = sld [smem:[#allocation0]]
  $region58: #{lstm_forward.1} parent=0
    _
  %s12 = ssub.s32 1, %s10
  %s13 = scalar_select 0, %s12, %s10
  %v14 = vstv %s8
  %15 = vst [vmem:[#allocation2] sm:$0x1] %v14
  $region1: #{lstm_forward.1} parent=0
    #allocation3 [shape = 'u8[131072]{0}', space=vmem, size = 0x20000, scoped, tag = 'input window, operand 2, single buffered']
    #allocation4 [shape = 's32[1]{0}', space=sflag, size = 0x4, scoped, tag = 'scoped memory for lstm_forward.1']
    #allocation5 [shape = 'u8[131072]{0}', space=vmem, size = 0x20000, scoped, tag = 'input window, operand 4, single buffered']
    #allocation6 [shape = 's32[1]{0}', space=sflag, size = 0x4, scoped, tag = 'scoped memory for lstm_forward.1']
    #allocation7 [shape = 'u8[131072]{0}', space=vmem, size = 0x20000, scoped, tag = 'input window, operand 5, single buffered']
    %16 = vsyncpa [#allocation4], 0
    %17 = vsyncpa [#allocation6], 0
    // Predicated region
    $region2: #{lstm_forward.1} parent=1 // pred_check
      _
    $region3: #{lstm_forward.1} parent=1 // pred_check_branch
      %19 = sbr.rel (0) target = $region5
    $region4: #{lstm_forward.1} parent=1 // pred_region
      _
    $region5: #{lstm_forward.1} parent=1 // pred_fallthru
      _
    // Predicated region
    $region6: #{lstm_forward.1} parent=1 // pred_check
      _
    $region7: #{lstm_forward.1} parent=1 // pred_check_branch
      %21 = sbr.rel (0) target = $region9
    $region8: #{lstm_forward.1} parent=1 // pred_region
      _
    $region9: #{lstm_forward.1} parent=1 // pred_fallthru
      _
    // Predicated region
    $region10: #{lstm_forward.1} parent=1 // pred_check
      _
    $region11: #{lstm_forward.1} parent=1 // pred_check_branch
      %23 = sbr.rel (0) target = $region13
    $region12: #{lstm_forward.1} parent=1 // pred_region
      %s25 = ssub.s32 4096, 4096
      %26 = vsyncadd [#allocation4], %s25
      %s27 = sshll.u32 [#allocation3], 4
      %s28 = int_to_ptr.vmem [resolvable:$true] %s27
      %33 = dma.hbm_to_vmem [thread:$0]  %s2, 4096, %s28, [#allocation4], 256, 256, 16
    $region13: #{lstm_forward.1} parent=1 // pred_fallthru
      _
    // Predicated region
    $region14: #{lstm_forward.1} parent=1 // pred_check
      _
    $region15: #{lstm_forward.1} parent=1 // pred_check_branch
      %35 = sbr.rel (0) target = $region17
    $region16: #{lstm_forward.1} parent=1 // pred_region
      _
    $region17: #{lstm_forward.1} parent=1 // pred_fallthru
      _
    // Predicated region
    $region18: #{lstm_forward.1} parent=1 // pred_check
      _
    $region19: #{lstm_forward.1} parent=1 // pred_check_branch
      %37 = sbr.rel (0) target = $region21
    $region20: #{lstm_forward.1} parent=1 // pred_region
      %s39 = ssub.s32 4096, 4096
      %40 = vsyncadd [#allocation6], %s39
      %s41 = sshll.u32 [#allocation5], 4
      %s42 = int_to_ptr.vmem [resolvable:$true] %s41
      %47 = dma.hbm_to_vmem [thread:$0]  %s4, 4096, %s42, [#allocation6], 256, 256, 16
    $region21: #{lstm_forward.1} parent=1 // pred_fallthru
      _
    // Predicated region
    $region22: #{lstm_forward.1} parent=1 // pred_check
      _
    $region23: #{lstm_forward.1} parent=1 // pred_check_branch
      %49 = sbr.rel (0) target = $region25
    $region24: #{lstm_forward.1} parent=1 // pred_region
      %s51 = ssub.s32 4096, 4096
      %52 = vsyncadd [#allocation6], %s51
      %s53 = sshll.u32 [#allocation7], 4
      %s54 = int_to_ptr.vmem [resolvable:$true] %s53
      %59 = dma.hbm_to_vmem [thread:$0]  %s5, 4096, %s54, [#allocation6], 256, 256, 16
    $region25: #{lstm_forward.1} parent=1 // pred_fallthru
      _
    // Predicated region
    $region26: #{lstm_forward.1} parent=1 // pred_check
      _
    $region27: #{lstm_forward.1} parent=1 // pred_check_branch
      %61 = sbr.rel (0) target = $region29
    $region28: #{lstm_forward.1} parent=1 // pred_region
      _
    $region29: #{lstm_forward.1} parent=1 // pred_fallthru
      _
    // Predicated region
    $region30: #{lstm_forward.1} parent=1 // pred_check
      _
    $region31: #{lstm_forward.1} parent=1 // pred_check_branch
      %63 = sbr.rel (0) target = $region33
    $region32: #{lstm_forward.1} parent=1 // pred_region
      _
    $region33: #{lstm_forward.1} parent=1 // pred_fallthru
      _
    // Predicated region
    $region34: #{lstm_forward.1} parent=1 // pred_check
      _
    $region35: #{lstm_forward.1} parent=1 // pred_check_branch
      %65 = sbr.rel (0) target = $region37
    $region36: #{lstm_forward.1} parent=1 // pred_region
      _
    $region37: #{lstm_forward.1} parent=1 // pred_fallthru
      _
    // Predicated region
    $region38: #{lstm_forward.1} parent=1 // pred_check
      _
    $region39: #{lstm_forward.1} parent=1 // pred_check_branch
      %67 = sbr.rel (0) target = $region41
    $region40: #{lstm_forward.1} parent=1 // pred_region
      %68 = dma.done [#allocation4], 4096
    $region41: #{lstm_forward.1} parent=1 // pred_fallthru
      _
    // Predicated region
    $region42: #{lstm_forward.1} parent=1 // pred_check
      _
    $region43: #{lstm_forward.1} parent=1 // pred_check_branch
      %70 = sbr.rel (0) target = $region45
    $region44: #{lstm_forward.1} parent=1 // pred_region
      %71 = dma.done [#allocation6], 4096
    $region45: #{lstm_forward.1} parent=1 // pred_fallthru
      _
    // Predicated region
    $region46: #{lstm_forward.1} parent=1 // pred_check
      _
    $region47: #{lstm_forward.1} parent=1 // pred_check_branch
      %73 = sbr.rel (0) target = $region49
    $region48: #{lstm_forward.1} parent=1 // pred_region
      %74 = dma.done [#allocation6], 4096
    $region49: #{lstm_forward.1} parent=1 // pred_fallthru
      _
    %v76 = vld [vmem:[%s0] sm:$0x3]
    %v77 = vld [vmem:[%s0 + $0x2] sm:$0x3]
    %v78 = vld [vmem:[%s0 + $0x4] sm:$0x3]
    %v79 = vld [vmem:[%s0 + $0x6] sm:$0x3]
    %v80 = vld [vmem:[%s0 + $0x8] sm:$0x3]
    %v81 = vld [vmem:[%s0 + $0xa] sm:$0x3]
    %v82 = vld [vmem:[%s0 + $0xc] sm:$0x3]
    %v83 = vld [vmem:[%s0 + $0xe] sm:$0x3]
    %v92 = vcombine.low %v76, %v77
    %v93 = vcombine.low %v78, %v79
    %v95 = vunpack.c.l.s4 1983009808
    %v96 = vunpack.c.0.s8 %v95
    %v97 = vlaneseq
    %v98 = vshrl.u32 %v97, 7
    %v99 = vsub.s32 %v96, %v98
    %v100 = vrot.slane %v92, %v99
    %v102 = vunpack.c.l.s4 1983009808
    %v103 = vunpack.c.0.s8 %v102
    %v104 = vlaneseq
    %v105 = vshrl.u32 %v104, 7
    %v106 = vsub.s32 %v103, %v105
    %v107 = vrot.slane %v93, %v106
    %v108 = vcombine.low %v100, %v107
    %v109 = vcombine.low %v80, %v81
    %v110 = vcombine.low %v82, %v83
    %v112 = vunpack.c.l.s4 1983009808
    %v113 = vunpack.c.0.s8 %v112
    %v114 = vlaneseq
    %v115 = vshrl.u32 %v114, 7
    %v116 = vsub.s32 %v113, %v115
    %v117 = vrot.slane %v109, %v116
    %v119 = vunpack.c.l.s4 1983009808
    %v120 = vunpack.c.0.s8 %v119
    %v121 = vlaneseq
    %v122 = vshrl.u32 %v121, 7
    %v123 = vsub.s32 %v120, %v122
    %v124 = vrot.slane %v110, %v123
    %v125 = vcombine.low %v117, %v124
    %v128 = vpack.c.bf16 %v125, %v108
    %v129 = vld [vmem:[%s1] sm:$0xff]
    %v130 = vld [vmem:[%s1 + $0x8] sm:$0xff]
    %v131 = vld [vmem:[%s1 + $0x10] sm:$0xff]
    %v132 = vld [vmem:[%s1 + $0x18] sm:$0xff]
    %v133 = vld [vmem:[%s3] sm:$0xf]
    %v135 = vlaneseq
    %v136 = vshrl.u32 %v135, 7
    %v137 = vsub.s32 0, %v136
    %v138 = vrot.slane %v133, %v137
    %v139 = vlaneseq
    %v140 = vshrl.u32 %v139, 7
    %v141 = vsub.s32 1, %v140
    %v142 = vrot.slane %v133, %v141
    %v143 = vlaneseq
    %v144 = vshrl.u32 %v143, 7
    %v145 = vsub.s32 2, %v144
    %v146 = vrot.slane %v133, %v145
    %v147 = vlaneseq
    %v148 = vshrl.u32 %v147, 7
    %v149 = vsub.s32 3, %v148
    %v150 = vrot.slane %v133, %v149
    %v159 = vunpack.c.l.b16 %v129
    %v160 = vunpack.c.h.b16 %v129
    %v161 = vunpack.c.l.b16 %v130
    %v162 = vunpack.c.h.b16 %v130
    %v163 = vunpack.c.l.b16 %v131
    %v164 = vunpack.c.h.b16 %v131
    %v165 = vunpack.c.l.b16 %v132
    %v166 = vunpack.c.h.b16 %v132
    %v167 = vpack.c.b16 %v163, %v159
    %v168 = vpack.c.b16 %v164, %v160
    %v169 = vpack.c.b16 %v165, %v161
    %v170 = vpack.c.b16 %v166, %v162
    %vm175 = vcmask 130048
    %v177 = vsel %vm175, %v128, 0
    %179 = vmatprep.subr.bf16.mxu0 %v168
    %180 = vmatpush1.bf16.msra.mxu0 %v167
    %181 = vmatprep.subr.bf16.mxu0 0
    %182 = vmatpush1.bf16.msra.mxu0 0
    %183 = vmatprep.subr.bf16.mxu0 0
    %184 = vmatpush1.bf16.msra.mxu0 0
    %185 = vmatprep.subr.bf16.mxu0 0
    %186 = vmatpush1.bf16.msra.mxu0 0
    %187 = vmatprep.subr.bf16.mxu0 0
    %188 = vmatpush1.bf16.msra.mxu0 0
    %189 = vmatprep.subr.bf16.mxu0 0
    %190 = vmatpush1.bf16.msra.mxu0 0
    %191 = vmatprep.subr.bf16.mxu0 0
    %192 = vmatpush1.bf16.msra.mxu0 0
    %193 = vmatprep.subr.bf16.mxu0 0
    %194 = vmatpush1.bf16.msra.mxu0 0
    %195 = vmatprep.subr.bf16.mxu0 0
    %196 = vmatpush1.bf16.msra.mxu0 0
    %197 = vmatprep.subr.bf16.mxu0 0
    %198 = vmatpush1.bf16.msra.mxu0 0
    %199 = vmatprep.subr.bf16.mxu0 0
    %200 = vmatpush1.bf16.msra.mxu0 0
    %201 = vmatprep.subr.bf16.mxu0 0
    %202 = vmatpush1.bf16.msra.mxu0 0
    %203 = vmatprep.subr.bf16.mxu0 0
    %204 = vmatpush1.bf16.msra.mxu0 0
    %205 = vmatprep.subr.bf16.mxu0 0
    %206 = vmatpush1.bf16.msra.mxu0 0
    %207 = vmatprep.subr.bf16.mxu0 0
    %208 = vmatpush1.bf16.msra.mxu0 0
    %209 = vmatprep.subr.bf16.mxu0 0
    %210 = vmatpush1.bf16.msra.mxu0 0
    %211 = vmatprep.mubr.bf16.mxu0 0
    %212 = vmatmul.mubr.bf16.gmra.mrb[0].mxu0 %v177
    %v213 = vpop.f32.mrb[0].mxu0
    %v214 = vadd.f32 %v138, %v213
    %v215 = vpop.f32.mrb[0].mxu0
    %v216 = vadd.f32 %v142, %v215
    %v217 = vpop.f32.mrb[0].mxu0
    %v218 = vadd.f32 %v138, %v217
    %v219 = vpop.f32.mrb[0].mxu0
    %v220 = vadd.f32 %v142, %v219
    %221 = vdwg.mxu0
    %222 = vmatprep.subr.bf16.mxu0 %v170
    %223 = vmatpush1.bf16.msra.mxu0 %v169
    %224 = vmatprep.subr.bf16.mxu0 0
    %225 = vmatpush1.bf16.msra.mxu0 0
    %226 = vmatprep.subr.bf16.mxu0 0
    %227 = vmatpush1.bf16.msra.mxu0 0
    %228 = vmatprep.subr.bf16.mxu0 0
    %229 = vmatpush1.bf16.msra.mxu0 0
    %230 = vmatprep.subr.bf16.mxu0 0
    %231 = vmatpush1.bf16.msra.mxu0 0
    %232 = vmatprep.subr.bf16.mxu0 0
    %233 = vmatpush1.bf16.msra.mxu0 0
    %234 = vmatprep.subr.bf16.mxu0 0
    %235 = vmatpush1.bf16.msra.mxu0 0
    %236 = vmatprep.subr.bf16.mxu0 0
    %237 = vmatpush1.bf16.msra.mxu0 0
    %238 = vmatprep.subr.bf16.mxu0 0
    %239 = vmatpush1.bf16.msra.mxu0 0
    %240 = vmatprep.subr.bf16.mxu0 0
    %241 = vmatpush1.bf16.msra.mxu0 0
    %242 = vmatprep.subr.bf16.mxu0 0
    %243 = vmatpush1.bf16.msra.mxu0 0
    %244 = vmatprep.subr.bf16.mxu0 0
    %245 = vmatpush1.bf16.msra.mxu0 0
    %246 = vmatprep.subr.bf16.mxu0 0
    %247 = vmatpush1.bf16.msra.mxu0 0
    %248 = vmatprep.subr.bf16.mxu0 0
    %249 = vmatpush1.bf16.msra.mxu0 0
    %250 = vmatprep.subr.bf16.mxu0 0
    %251 = vmatpush1.bf16.msra.mxu0 0
    %252 = vmatprep.subr.bf16.mxu0 0
    %253 = vmatpush1.bf16.msra.mxu0 0
    %254 = vmatprep.mubr.bf16.mxu0 0
    %255 = vmatmul.mubr.bf16.gmra.mrb[0].mxu0 %v177
    %v256 = vpop.f32.mrb[0].mxu0
    %v257 = vadd.f32 %v146, %v256
    %v258 = vpop.f32.mrb[0].mxu0
    %v259 = vadd.f32 %v150, %v258
    %v260 = vpop.f32.mrb[0].mxu0
    %v261 = vadd.f32 %v146, %v260
    %v262 = vpop.f32.mrb[0].mxu0
    %v263 = vadd.f32 %v150, %v262
    %264 = vdwg.mxu0
    %v273 = vcombine.low %v214, %v216
    %v274 = vcombine.high %v214, %v216
    %v275 = vcombine.low %v257, %v259
    %v276 = vcombine.high %v257, %v259
    %v278 = vunpack.c.l.s4 1983009808
    %v279 = vunpack.c.0.s8 %v278
    %v280 = vlaneseq
    %v281 = vshrl.u32 %v280, 7
    %v282 = vsub.s32 %v279, %v281
    %v283 = vrot.slane %v273, %v282
    %v285 = vunpack.c.l.s4 1983009808
    %v286 = vunpack.c.0.s8 %v285
    %v287 = vlaneseq
    %v288 = vshrl.u32 %v287, 7
    %v289 = vsub.s32 %v286, %v288
    %v290 = vrot.slane %v274, %v289
    %v292 = vunpack.c.l.s4 1983009808
    %v293 = vunpack.c.0.s8 %v292
    %v294 = vlaneseq
    %v295 = vshrl.u32 %v294, 7
    %v296 = vsub.s32 %v293, %v295
    %v297 = vrot.slane %v275, %v296
    %v299 = vunpack.c.l.s4 1983009808
    %v300 = vunpack.c.0.s8 %v299
    %v301 = vlaneseq
    %v302 = vshrl.u32 %v301, 7
    %v303 = vsub.s32 %v300, %v302
    %v304 = vrot.slane %v276, %v303
    %v305 = vcombine.low %v283, %v297
    %v306 = vcombine.high %v283, %v297
    %v307 = vcombine.low %v290, %v304
    %v308 = vcombine.high %v290, %v304
    %v309 = vcombine.low %v218, %v220
    %v310 = vcombine.high %v218, %v220
    %v311 = vcombine.low %v261, %v263
    %v312 = vcombine.high %v261, %v263
    %v314 = vunpack.c.l.s4 1983009808
    %v315 = vunpack.c.0.s8 %v314
    %v316 = vlaneseq
    %v317 = vshrl.u32 %v316, 7
    %v318 = vsub.s32 %v315, %v317
    %v319 = vrot.slane %v309, %v318
    %v321 = vunpack.c.l.s4 1983009808
    %v322 = vunpack.c.0.s8 %v321
    %v323 = vlaneseq
    %v324 = vshrl.u32 %v323, 7
    %v325 = vsub.s32 %v322, %v324
    %v326 = vrot.slane %v310, %v325
    %v328 = vunpack.c.l.s4 1983009808
    %v329 = vunpack.c.0.s8 %v328
    %v330 = vlaneseq
    %v331 = vshrl.u32 %v330, 7
    %v332 = vsub.s32 %v329, %v331
    %v333 = vrot.slane %v311, %v332
    %v335 = vunpack.c.l.s4 1983009808
    %v336 = vunpack.c.0.s8 %v335
    %v337 = vlaneseq
    %v338 = vshrl.u32 %v337, 7
    %v339 = vsub.s32 %v336, %v338
    %v340 = vrot.slane %v312, %v339
    %v341 = vcombine.low %v319, %v333
    %v342 = vcombine.high %v319, %v333
    %v343 = vcombine.low %v326, %v340
    %v344 = vcombine.high %v326, %v340
    %v353 = vld [vmem:[%s6] sm:$0xf]
    %v355 = vlaneseq
    %v356 = vshrl.u32 %v355, 7
    %v357 = vsub.s32 0, %v356
    %v358 = vrot.slane %v353, %v357
    %v359 = vlaneseq
    %v360 = vshrl.u32 %v359, 7
    %v361 = vsub.s32 1, %v360
    %v362 = vrot.slane %v353, %v361
    %v363 = vlaneseq
    %v364 = vshrl.u32 %v363, 7
    %v365 = vsub.s32 2, %v364
    %v366 = vrot.slane %v353, %v365
    %v367 = vlaneseq
    %v368 = vshrl.u32 %v367, 7
    %v369 = vsub.s32 3, %v368
    %v370 = vrot.slane %v353, %v369
    %v375 = vld [vmem:[#allocation7] sm:$0xff]
    %v376 = vld [vmem:[#allocation7 + $0x8] sm:$0xff]
    %v377 = vld [vmem:[#allocation7 + $0x10] sm:$0xff]
    %v378 = vld [vmem:[#allocation7 + $0x18] sm:$0xff]
    %v379 = vld [vmem:[#allocation7 + $0x20] sm:$0xff]
    %v380 = vld [vmem:[#allocation7 + $0x28] sm:$0xff]
    %v381 = vld [vmem:[#allocation7 + $0x30] sm:$0xff]
    %v382 = vld [vmem:[#allocation7 + $0x38] sm:$0xff]
    %v383 = vld [vmem:[#allocation7 + $0x40] sm:$0xff]
    %v384 = vld [vmem:[#allocation7 + $0x48] sm:$0xff]
    %v385 = vld [vmem:[#allocation7 + $0x50] sm:$0xff]
    %v386 = vld [vmem:[#allocation7 + $0x58] sm:$0xff]
    %v387 = vld [vmem:[#allocation7 + $0x60] sm:$0xff]
    %v388 = vld [vmem:[#allocation7 + $0x68] sm:$0xff]
    %v389 = vld [vmem:[#allocation7 + $0x70] sm:$0xff]
    %v390 = vld [vmem:[#allocation7 + $0x78] sm:$0xff]
    %v391 = vld [vmem:[#allocation7 + $0x80] sm:$0xff]
    %v392 = vld [vmem:[#allocation7 + $0x88] sm:$0xff]
    %v393 = vld [vmem:[#allocation7 + $0x90] sm:$0xff]
    %v394 = vld [vmem:[#allocation7 + $0x98] sm:$0xff]
    %v395 = vld [vmem:[#allocation7 + $0xa0] sm:$0xff]
    %v396 = vld [vmem:[#allocation7 + $0xa8] sm:$0xff]
    %v397 = vld [vmem:[#allocation7 + $0xb0] sm:$0xff]
    %v398 = vld [vmem:[#allocation7 + $0xb8] sm:$0xff]
    %v399 = vld [vmem:[#allocation7 + $0xc0] sm:$0xff]
    %v400 = vld [vmem:[#allocation7 + $0xc8] sm:$0xff]
    %v401 = vld [vmem:[#allocation7 + $0xd0] sm:$0xff]
    %v402 = vld [vmem:[#allocation7 + $0xd8] sm:$0xff]
    %v403 = vld [vmem:[#allocation7 + $0xe0] sm:$0xff]
    %v404 = vld [vmem:[#allocation7 + $0xe8] sm:$0xff]
    %v405 = vld [vmem:[#allocation7 + $0xf0] sm:$0xff]
    %v406 = vld [vmem:[#allocation7 + $0xf8] sm:$0xff]
    %v439 = vunpack.c.l.b16 %v375
    %v440 = vunpack.c.h.b16 %v375
    %v441 = vunpack.c.l.b16 %v376
    %v442 = vunpack.c.h.b16 %v376
    %v443 = vunpack.c.l.b16 %v377
    %v444 = vunpack.c.h.b16 %v377
    %v445 = vunpack.c.l.b16 %v378
    %v446 = vunpack.c.h.b16 %v378
    %v447 = vunpack.c.l.b16 %v379
    %v448 = vunpack.c.h.b16 %v379
    %v449 = vunpack.c.l.b16 %v380
    %v450 = vunpack.c.h.b16 %v380
    %v451 = vunpack.c.l.b16 %v381
    %v452 = vunpack.c.h.b16 %v381
    %v453 = vunpack.c.l.b16 %v382
    %v454 = vunpack.c.h.b16 %v382
    %v455 = vunpack.c.l.b16 %v383
    %v456 = vunpack.c.h.b16 %v383
    %v457 = vunpack.c.l.b16 %v384
    %v458 = vunpack.c.h.b16 %v384
    %v459 = vunpack.c.l.b16 %v385
    %v460 = vunpack.c.h.b16 %v385
    %v461 = vunpack.c.l.b16 %v386
    %v462 = vunpack.c.h.b16 %v386
    %v463 = vunpack.c.l.b16 %v387
    %v464 = vunpack.c.h.b16 %v387
    %v465 = vunpack.c.l.b16 %v388
    %v466 = vunpack.c.h.b16 %v388
    %v467 = vunpack.c.l.b16 %v389
    %v468 = vunpack.c.h.b16 %v389
    %v469 = vunpack.c.l.b16 %v390
    %v470 = vunpack.c.h.b16 %v390
    %v471 = vunpack.c.l.b16 %v391
    %v472 = vunpack.c.h.b16 %v391
    %v473 = vunpack.c.l.b16 %v392
    %v474 = vunpack.c.h.b16 %v392
    %v475 = vunpack.c.l.b16 %v393
    %v476 = vunpack.c.h.b16 %v393
    %v477 = vunpack.c.l.b16 %v394
    %v478 = vunpack.c.h.b16 %v394
    %v479 = vunpack.c.l.b16 %v395
    %v480 = vunpack.c.h.b16 %v395
    %v481 = vunpack.c.l.b16 %v396
    %v482 = vunpack.c.h.b16 %v396
    %v483 = vunpack.c.l.b16 %v397
    %v484 = vunpack.c.h.b16 %v397
    %v485 = vunpack.c.l.b16 %v398
    %v486 = vunpack.c.h.b16 %v398
    %v487 = vunpack.c.l.b16 %v399
    %v488 = vunpack.c.h.b16 %v399
    %v489 = vunpack.c.l.b16 %v400
    %v490 = vunpack.c.h.b16 %v400
    %v491 = vunpack.c.l.b16 %v401
    %v492 = vunpack.c.h.b16 %v401
    %v493 = vunpack.c.l.b16 %v402
    %v494 = vunpack.c.h.b16 %v402
    %v495 = vunpack.c.l.b16 %v403
    %v496 = vunpack.c.h.b16 %v403
    %v497 = vunpack.c.l.b16 %v404
    %v498 = vunpack.c.h.b16 %v404
    %v499 = vunpack.c.l.b16 %v405
    %v500 = vunpack.c.h.b16 %v405
    %v501 = vunpack.c.l.b16 %v406
    %v502 = vunpack.c.h.b16 %v406
    %v503 = vpack.c.b16 %v443, %v439
    %v504 = vpack.c.b16 %v444, %v440
    %v505 = vpack.c.b16 %v445, %v441
    %v506 = vpack.c.b16 %v446, %v442
    %v507 = vpack.c.b16 %v451, %v447
    %v508 = vpack.c.b16 %v452, %v448
    %v509 = vpack.c.b16 %v453, %v449
    %v510 = vpack.c.b16 %v454, %v450
    %v511 = vpack.c.b16 %v459, %v455
    %v512 = vpack.c.b16 %v460, %v456
    %v513 = vpack.c.b16 %v461, %v457
    %v514 = vpack.c.b16 %v462, %v458
    %v515 = vpack.c.b16 %v467, %v463
    %v516 = vpack.c.b16 %v468, %v464
    %v517 = vpack.c.b16 %v469, %v465
    %v518 = vpack.c.b16 %v470, %v466
    %v519 = vpack.c.b16 %v475, %v471
    %v520 = vpack.c.b16 %v476, %v472
    %v521 = vpack.c.b16 %v477, %v473
    %v522 = vpack.c.b16 %v478, %v474
    %v523 = vpack.c.b16 %v483, %v479
    %v524 = vpack.c.b16 %v484, %v480
    %v525 = vpack.c.b16 %v485, %v481
    %v526 = vpack.c.b16 %v486, %v482
    %v527 = vpack.c.b16 %v491, %v487
    %v528 = vpack.c.b16 %v492, %v488
    %v529 = vpack.c.b16 %v493, %v489
    %v530 = vpack.c.b16 %v494, %v490
    %v531 = vpack.c.b16 %v499, %v495
    %v532 = vpack.c.b16 %v500, %v496
    %v533 = vpack.c.b16 %v501, %v497
    %v534 = vpack.c.b16 %v502, %v498
    %567 = vmatprep.subr.bf16.mxu0 %v504
    %568 = vmatpush1.bf16.msra.mxu0 %v503
    %569 = vmatprep.subr.bf16.mxu0 %v508
    %570 = vmatpush1.bf16.msra.mxu0 %v507
    %571 = vmatprep.subr.bf16.mxu0 %v512
    %572 = vmatpush1.bf16.msra.mxu0 %v511
    %573 = vmatprep.subr.bf16.mxu0 %v516
    %574 = vmatpush1.bf16.msra.mxu0 %v515
    %575 = vmatprep.subr.bf16.mxu0 %v520
    %576 = vmatpush1.bf16.msra.mxu0 %v519
    %577 = vmatprep.subr.bf16.mxu0 %v524
    %578 = vmatpush1.bf16.msra.mxu0 %v523
    %579 = vmatprep.subr.bf16.mxu0 %v528
    %580 = vmatpush1.bf16.msra.mxu0 %v527
    %581 = vmatprep.subr.bf16.mxu0 %v532
    %582 = vmatpush1.bf16.msra.mxu0 %v531
    %583 = vmatprep.subr.bf16.mxu0 0
    %584 = vmatpush1.bf16.msra.mxu0 0
    %585 = vmatprep.subr.bf16.mxu0 0
    %586 = vmatpush1.bf16.msra.mxu0 0
    %587 = vmatprep.subr.bf16.mxu0 0
    %588 = vmatpush1.bf16.msra.mxu0 0
    %589 = vmatprep.subr.bf16.mxu0 0
    %590 = vmatpush1.bf16.msra.mxu0 0
    %591 = vmatprep.subr.bf16.mxu0 0
    %592 = vmatpush1.bf16.msra.mxu0 0
    %593 = vmatprep.subr.bf16.mxu0 0
    %594 = vmatpush1.bf16.msra.mxu0 0
    %595 = vmatprep.subr.bf16.mxu0 0
    %596 = vmatpush1.bf16.msra.mxu0 0
    %597 = vmatprep.subr.bf16.mxu0 0
    %598 = vmatpush1.bf16.msra.mxu0 0
    %599 = vmatprep.mubr.bf16.mxu0 0
    %600 = vmatmul.mubr.bf16.gmra.mrb[0].mxu0 0
    %v601 = vpop.f32.mrb[0].mxu0
    %v602 = vadd.f32 %v358, %v601
    %v603 = vpop.f32.mrb[0].mxu0
    %v604 = vadd.f32 %v362, %v603
    %v605 = vpop.f32.mrb[0].mxu0
    %v606 = vpop.f32.mrb[0].mxu0
    %607 = vdwg.mxu0
    %608 = vmatprep.subr.bf16.mxu0 %v506
    %609 = vmatpush1.bf16.msra.mxu0 %v505
    %610 = vmatprep.subr.bf16.mxu0 %v510
    %611 = vmatpush1.bf16.msra.mxu0 %v509
    %612 = vmatprep.subr.bf16.mxu0 %v514
    %613 = vmatpush1.bf16.msra.mxu0 %v513
    %614 = vmatprep.subr.bf16.mxu0 %v518
    %615 = vmatpush1.bf16.msra.mxu0 %v517
    %616 = vmatprep.subr.bf16.mxu0 %v522
    %617 = vmatpush1.bf16.msra.mxu0 %v521
    %618 = vmatprep.subr.bf16.mxu0 %v526
    %619 = vmatpush1.bf16.msra.mxu0 %v525
    %620 = vmatprep.subr.bf16.mxu0 %v530
    %621 = vmatpush1.bf16.msra.mxu0 %v529
    %622 = vmatprep.subr.bf16.mxu0 %v534
    %623 = vmatpush1.bf16.msra.mxu0 %v533
    %624 = vmatprep.subr.bf16.mxu0 0
    %625 = vmatpush1.bf16.msra.mxu0 0
    %626 = vmatprep.subr.bf16.mxu0 0
    %627 = vmatpush1.bf16.msra.mxu0 0
    %628 = vmatprep.subr.bf16.mxu0 0
    %629 = vmatpush1.bf16.msra.mxu0 0
    %630 = vmatprep.subr.bf16.mxu0 0
    %631 = vmatpush1.bf16.msra.mxu0 0
    %632 = vmatprep.subr.bf16.mxu0 0
    %633 = vmatpush1.bf16.msra.mxu0 0
    %634 = vmatprep.subr.bf16.mxu0 0
    %635 = vmatpush1.bf16.msra.mxu0 0
    %636 = vmatprep.subr.bf16.mxu0 0
    %637 = vmatpush1.bf16.msra.mxu0 0
    %638 = vmatprep.subr.bf16.mxu0 0
    %639 = vmatpush1.bf16.msra.mxu0 0
    %640 = vmatprep.mubr.bf16.mxu0 0
    %641 = vmatmul.mubr.bf16.gmra.mrb[0].mxu0 0
    %v642 = vpop.f32.mrb[0].mxu0
    %v643 = vadd.f32 %v366, %v642
    %v644 = vpop.f32.mrb[0].mxu0
    %v645 = vadd.f32 %v370, %v644
    %v646 = vpop.f32.mrb[0].mxu0
    %v647 = vpop.f32.mrb[0].mxu0
    %648 = vdwg.mxu0
    %v649 = vld [vmem:[#allocation3] sm:$0xff]
    %v650 = vld [vmem:[#allocation3 + $0x8] sm:$0xff]
    %v651 = vld [vmem:[#allocation3 + $0x10] sm:$0xff]
    %v652 = vld [vmem:[#allocation3 + $0x18] sm:$0xff]
    %v653 = vld [vmem:[#allocation3 + $0x20] sm:$0xff]
    %v654 = vld [vmem:[#allocation3 + $0x28] sm:$0xff]
    %v655 = vld [vmem:[#allocation3 + $0x30] sm:$0xff]
    %v656 = vld [vmem:[#allocation3 + $0x38] sm:$0xff]
    %v657 = vld [vmem:[#allocation3 + $0x40] sm:$0xff]
    %v658 = vld [vmem:[#allocation3 + $0x48] sm:$0xff]
    %v659 = vld [vmem:[#allocation3 + $0x50] sm:$0xff]
    %v660 = vld [vmem:[#allocation3 + $0x58] sm:$0xff]
    %v661 = vld [vmem:[#allocation3 + $0x60] sm:$0xff]
    %v662 = vld [vmem:[#allocation3 + $0x68] sm:$0xff]
    %v663 = vld [vmem:[#allocation3 + $0x70] sm:$0xff]
    %v664 = vld [vmem:[#allocation3 + $0x78] sm:$0xff]
    %v665 = vld [vmem:[#allocation3 + $0x80] sm:$0xff]
    %v666 = vld [vmem:[#allocation3 + $0x88] sm:$0xff]
    %v667 = vld [vmem:[#allocation3 + $0x90] sm:$0xff]
    %v668 = vld [vmem:[#allocation3 + $0x98] sm:$0xff]
    %v669 = vld [vmem:[#allocation3 + $0xa0] sm:$0xff]
    %v670 = vld [vmem:[#allocation3 + $0xa8] sm:$0xff]
    %v671 = vld [vmem:[#allocation3 + $0xb0] sm:$0xff]
    %v672 = vld [vmem:[#allocation3 + $0xb8] sm:$0xff]
    %v673 = vld [vmem:[#allocation3 + $0xc0] sm:$0xff]
    %v674 = vld [vmem:[#allocation3 + $0xc8] sm:$0xff]
    %v675 = vld [vmem:[#allocation3 + $0xd0] sm:$0xff]
    %v676 = vld [vmem:[#allocation3 + $0xd8] sm:$0xff]
    %v677 = vld [vmem:[#allocation3 + $0xe0] sm:$0xff]
    %v678 = vld [vmem:[#allocation3 + $0xe8] sm:$0xff]
    %v679 = vld [vmem:[#allocation3 + $0xf0] sm:$0xff]
    %v680 = vld [vmem:[#allocation3 + $0xf8] sm:$0xff]
    %v713 = vunpack.c.l.b16 %v649
    %v714 = vunpack.c.h.b16 %v649
    %v715 = vunpack.c.l.b16 %v650
    %v716 = vunpack.c.h.b16 %v650
    %v717 = vunpack.c.l.b16 %v651
    %v718 = vunpack.c.h.b16 %v651
    %v719 = vunpack.c.l.b16 %v652
    %v720 = vunpack.c.h.b16 %v652
    %v721 = vunpack.c.l.b16 %v653
    %v722 = vunpack.c.h.b16 %v653
    %v723 = vunpack.c.l.b16 %v654
    %v724 = vunpack.c.h.b16 %v654
    %v725 = vunpack.c.l.b16 %v655
    %v726 = vunpack.c.h.b16 %v655
    %v727 = vunpack.c.l.b16 %v656
    %v728 = vunpack.c.h.b16 %v656
    %v729 = vunpack.c.l.b16 %v657
    %v730 = vunpack.c.h.b16 %v657
    %v731 = vunpack.c.l.b16 %v658
    %v732 = vunpack.c.h.b16 %v658
    %v733 = vunpack.c.l.b16 %v659
    %v734 = vunpack.c.h.b16 %v659
    %v735 = vunpack.c.l.b16 %v660
    %v736 = vunpack.c.h.b16 %v660
    %v737 = vunpack.c.l.b16 %v661
    %v738 = vunpack.c.h.b16 %v661
    %v739 = vunpack.c.l.b16 %v662
    %v740 = vunpack.c.h.b16 %v662
    %v741 = vunpack.c.l.b16 %v663
    %v742 = vunpack.c.h.b16 %v663
    %v743 = vunpack.c.l.b16 %v664
    %v744 = vunpack.c.h.b16 %v664
    %v745 = vunpack.c.l.b16 %v665
    %v746 = vunpack.c.h.b16 %v665
    %v747 = vunpack.c.l.b16 %v666
    %v748 = vunpack.c.h.b16 %v666
    %v749 = vunpack.c.l.b16 %v667
    %v750 = vunpack.c.h.b16 %v667
    %v751 = vunpack.c.l.b16 %v668
    %v752 = vunpack.c.h.b16 %v668
    %v753 = vunpack.c.l.b16 %v669
    %v754 = vunpack.c.h.b16 %v669
    %v755 = vunpack.c.l.b16 %v670
    %v756 = vunpack.c.h.b16 %v670
    %v757 = vunpack.c.l.b16 %v671
    %v758 = vunpack.c.h.b16 %v671
    %v759 = vunpack.c.l.b16 %v672
    %v760 = vunpack.c.h.b16 %v672
    %v761 = vunpack.c.l.b16 %v673
    %v762 = vunpack.c.h.b16 %v673
    %v763 = vunpack.c.l.b16 %v674
    %v764 = vunpack.c.h.b16 %v674
    %v765 = vunpack.c.l.b16 %v675
    %v766 = vunpack.c.h.b16 %v675
    %v767 = vunpack.c.l.b16 %v676
    %v768 = vunpack.c.h.b16 %v676
    %v769 = vunpack.c.l.b16 %v677
    %v770 = vunpack.c.h.b16 %v677
    %v771 = vunpack.c.l.b16 %v678
    %v772 = vunpack.c.h.b16 %v678
    %v773 = vunpack.c.l.b16 %v679
    %v774 = vunpack.c.h.b16 %v679
    %v775 = vunpack.c.l.b16 %v680
    %v776 = vunpack.c.h.b16 %v680
    %v777 = vpack.c.b16 %v717, %v713
    %v778 = vpack.c.b16 %v718, %v714
    %v779 = vpack.c.b16 %v719, %v715
    %v780 = vpack.c.b16 %v720, %v716
    %v781 = vpack.c.b16 %v725, %v721
    %v782 = vpack.c.b16 %v726, %v722
    %v783 = vpack.c.b16 %v727, %v723
    %v784 = vpack.c.b16 %v728, %v724
    %v785 = vpack.c.b16 %v733, %v729
    %v786 = vpack.c.b16 %v734, %v730
    %v787 = vpack.c.b16 %v735, %v731
    %v788 = vpack.c.b16 %v736, %v732
    %v789 = vpack.c.b16 %v741, %v737
    %v790 = vpack.c.b16 %v742, %v738
    %v791 = vpack.c.b16 %v743, %v739
    %v792 = vpack.c.b16 %v744, %v740
    %v793 = vpack.c.b16 %v749, %v745
    %v794 = vpack.c.b16 %v750, %v746
    %v795 = vpack.c.b16 %v751, %v747
    %v796 = vpack.c.b16 %v752, %v748
    %v797 = vpack.c.b16 %v757, %v753
    %v798 = vpack.c.b16 %v758, %v754
    %v799 = vpack.c.b16 %v759, %v755
    %v800 = vpack.c.b16 %v760, %v756
    %v801 = vpack.c.b16 %v765, %v761
    %v802 = vpack.c.b16 %v766, %v762
    %v803 = vpack.c.b16 %v767, %v763
    %v804 = vpack.c.b16 %v768, %v764
    %v805 = vpack.c.b16 %v773, %v769
    %v806 = vpack.c.b16 %v774, %v770
    %v807 = vpack.c.b16 %v775, %v771
    %v808 = vpack.c.b16 %v776, %v772
    %841 = vmatprep.subr.bf16.mxu0 %v778
    %842 = vmatpush1.bf16.msra.mxu0 %v777
    %843 = vmatprep.subr.bf16.mxu0 %v782
    %844 = vmatpush1.bf16.msra.mxu0 %v781
    %845 = vmatprep.subr.bf16.mxu0 %v786
    %846 = vmatpush1.bf16.msra.mxu0 %v785
    %847 = vmatprep.subr.bf16.mxu0 %v790
    %848 = vmatpush1.bf16.msra.mxu0 %v789
    %849 = vmatprep.subr.bf16.mxu0 %v794
    %850 = vmatpush1.bf16.msra.mxu0 %v793
    %851 = vmatprep.subr.bf16.mxu0 %v798
    %852 = vmatpush1.bf16.msra.mxu0 %v797
    %853 = vmatprep.subr.bf16.mxu0 %v802
    %854 = vmatpush1.bf16.msra.mxu0 %v801
    %855 = vmatprep.subr.bf16.mxu0 %v806
    %856 = vmatpush1.bf16.msra.mxu0 %v805
    %857 = vmatprep.subr.bf16.mxu0 0
    %858 = vmatpush1.bf16.msra.mxu0 0
    %859 = vmatprep.subr.bf16.mxu0 0
    %860 = vmatpush1.bf16.msra.mxu0 0
    %861 = vmatprep.subr.bf16.mxu0 0
    %862 = vmatpush1.bf16.msra.mxu0 0
    %863 = vmatprep.subr.bf16.mxu0 0
    %864 = vmatpush1.bf16.msra.mxu0 0
    %865 = vmatprep.subr.bf16.mxu0 0
    %866 = vmatpush1.bf16.msra.mxu0 0
    %867 = vmatprep.subr.bf16.mxu0 0
    %868 = vmatpush1.bf16.msra.mxu0 0
    %869 = vmatprep.subr.bf16.mxu0 0
    %870 = vmatpush1.bf16.msra.mxu0 0
    %871 = vmatprep.subr.bf16.mxu0 0
    %872 = vmatpush1.bf16.msra.mxu0 0
    %873 = vmatprep.mubr.bf16.mxu0 0
    %874 = vmatmul.mubr.bf16.gmra.mrb[0].mxu0 0
    %v875 = vpop.f32.mrb[0].mxu0
    %v876 = vadd.f32 0.0, %v875
    %v877 = vpop.f32.mrb[0].mxu0
    %v878 = vadd.f32 0.0, %v877
    %v879 = vpop.f32.mrb[0].mxu0
    %v880 = vpop.f32.mrb[0].mxu0
    %881 = vdwg.mxu0
    %882 = vmatprep.subr.bf16.mxu0 %v780
    %883 = vmatpush1.bf16.msra.mxu0 %v779
    %884 = vmatprep.subr.bf16.mxu0 %v784
    %885 = vmatpush1.bf16.msra.mxu0 %v783
    %886 = vmatprep.subr.bf16.mxu0 %v788
    %887 = vmatpush1.bf16.msra.mxu0 %v787
    %888 = vmatprep.subr.bf16.mxu0 %v792
    %889 = vmatpush1.bf16.msra.mxu0 %v791
    %890 = vmatprep.subr.bf16.mxu0 %v796
    %891 = vmatpush1.bf16.msra.mxu0 %v795
    %892 = vmatprep.subr.bf16.mxu0 %v800
    %893 = vmatpush1.bf16.msra.mxu0 %v799
    %894 = vmatprep.subr.bf16.mxu0 %v804
    %895 = vmatpush1.bf16.msra.mxu0 %v803
    %896 = vmatprep.subr.bf16.mxu0 %v808
    %897 = vmatpush1.bf16.msra.mxu0 %v807
    %898 = vmatprep.subr.bf16.mxu0 0
    %899 = vmatpush1.bf16.msra.mxu0 0
    %900 = vmatprep.subr.bf16.mxu0 0
    %901 = vmatpush1.bf16.msra.mxu0 0
    %902 = vmatprep.subr.bf16.mxu0 0
    %903 = vmatpush1.bf16.msra.mxu0 0
    %904 = vmatprep.subr.bf16.mxu0 0
    %905 = vmatpush1.bf16.msra.mxu0 0
    %906 = vmatprep.subr.bf16.mxu0 0
    %907 = vmatpush1.bf16.msra.mxu0 0
    %908 = vmatprep.subr.bf16.mxu0 0
    %909 = vmatpush1.bf16.msra.mxu0 0
    %910 = vmatprep.subr.bf16.mxu0 0
    %911 = vmatpush1.bf16.msra.mxu0 0
    %912 = vmatprep.subr.bf16.mxu0 0
    %913 = vmatpush1.bf16.msra.mxu0 0
    %914 = vmatprep.mubr.bf16.mxu0 0
    %915 = vmatmul.mubr.bf16.gmra.mrb[0].mxu0 0
    %v916 = vpop.f32.mrb[0].mxu0
    %v917 = vadd.f32 0.0, %v916
    %v918 = vpop.f32.mrb[0].mxu0
    %v919 = vadd.f32 0.0, %v918
    %v920 = vpop.f32.mrb[0].mxu0
    %v921 = vpop.f32.mrb[0].mxu0
    %922 = vdwg.mxu0
    %v927 = vcombine.low %v876, %v878
    %v928 = vcombine.low %v917, %v919
    %v930 = vunpack.c.l.s4 1983009808
    %v931 = vunpack.c.0.s8 %v930
    %v932 = vlaneseq
    %v933 = vshrl.u32 %v932, 7
    %v934 = vsub.s32 %v931, %v933
    %v935 = vrot.slane %v927, %v934
    %v937 = vunpack.c.l.s4 1983009808
    %v938 = vunpack.c.0.s8 %v937
    %v939 = vlaneseq
    %v940 = vshrl.u32 %v939, 7
    %v941 = vsub.s32 %v938, %v940
    %v942 = vrot.slane %v928, %v941
    %v943 = vcombine.low %v935, %v942
    %v945 = vadd.f32 %v305, %v943
    %v946 = vxor.u32 %v945, 2147483648
    %v947 = vmul.f32 %v946, 1.442695
    %v948 = vpow.pop %v947
    %v949 = vadd.f32 %v948, 1.0
    %v950 = vrcp.pop %v949
    %v951 = vmul.f32 1.0, %v950
    %v953 = vrot.slane %v945, 6
    %v955 = vtanh.pop %v953
    %v957 = vrot.slane %v951, 2
    %v959 = vmul.f32 %v957, 0.0
    %v960 = vmul.f32 %v951, %v955
    %v961 = vadd.f32 %v959, %v960
    %v962 = vtanh.pop %v961
    %v963 = vrot.slane %v951, 4
    %v965 = vmul.f32 %v963, %v962
    %v966 = vpack.c.bf16 %v965, %v965
    %v967 = vld [vmem:[#allocation5] sm:$0xff]
    %v968 = vld [vmem:[#allocation5 + $0x8] sm:$0xff]
    %v969 = vld [vmem:[#allocation5 + $0x10] sm:$0xff]
    %v970 = vld [vmem:[#allocation5 + $0x18] sm:$0xff]
    %v971 = vld [vmem:[#allocation5 + $0x20] sm:$0xff]
    %v972 = vld [vmem:[#allocation5 + $0x28] sm:$0xff]
    %v973 = vld [vmem:[#allocation5 + $0x30] sm:$0xff]
    %v974 = vld [vmem:[#allocation5 + $0x38] sm:$0xff]
    %v975 = vld [vmem:[#allocation5 + $0x40] sm:$0xff]
    %v976 = vld [vmem:[#allocation5 + $0x48] sm:$0xff]
    %v977 = vld [vmem:[#allocation5 + $0x50] sm:$0xff]
    %v978 = vld [vmem:[#allocation5 + $0x58] sm:$0xff]
    %v979 = vld [vmem:[#allocation5 + $0x60] sm:$0xff]
    %v980 = vld [vmem:[#allocation5 + $0x68] sm:$0xff]
    %v981 = vld [vmem:[#allocation5 + $0x70] sm:$0xff]
    %v982 = vld [vmem:[#allocation5 + $0x78] sm:$0xff]
    %v983 = vld [vmem:[#allocation5 + $0x80] sm:$0xff]
    %v984 = vld [vmem:[#allocation5 + $0x88] sm:$0xff]
    %v985 = vld [vmem:[#allocation5 + $0x90] sm:$0xff]
    %v986 = vld [vmem:[#allocation5 + $0x98] sm:$0xff]
    %v987 = vld [vmem:[#allocation5 + $0xa0] sm:$0xff]
    %v988 = vld [vmem:[#allocation5 + $0xa8] sm:$0xff]
    %v989 = vld [vmem:[#allocation5 + $0xb0] sm:$0xff]
    %v990 = vld [vmem:[#allocation5 + $0xb8] sm:$0xff]
    %v991 = vld [vmem:[#allocation5 + $0xc0] sm:$0xff]
    %v992 = vld [vmem:[#allocation5 + $0xc8] sm:$0xff]
    %v993 = vld [vmem:[#allocation5 + $0xd0] sm:$0xff]
    %v994 = vld [vmem:[#allocation5 + $0xd8] sm:$0xff]
    %v995 = vld [vmem:[#allocation5 + $0xe0] sm:$0xff]
    %v996 = vld [vmem:[#allocation5 + $0xe8] sm:$0xff]
    %v997 = vld [vmem:[#allocation5 + $0xf0] sm:$0xff]
    %v998 = vld [vmem:[#allocation5 + $0xf8] sm:$0xff]
    %v1031 = vunpack.c.l.b16 %v967
    %v1032 = vunpack.c.h.b16 %v967
    %v1033 = vunpack.c.l.b16 %v968
    %v1034 = vunpack.c.h.b16 %v968
    %v1035 = vunpack.c.l.b16 %v969
    %v1036 = vunpack.c.h.b16 %v969
    %v1037 = vunpack.c.l.b16 %v970
    %v1038 = vunpack.c.h.b16 %v970
    %v1039 = vunpack.c.l.b16 %v971
    %v1040 = vunpack.c.h.b16 %v971
    %v1041 = vunpack.c.l.b16 %v972
    %v1042 = vunpack.c.h.b16 %v972
    %v1043 = vunpack.c.l.b16 %v973
    %v1044 = vunpack.c.h.b16 %v973
    %v1045 = vunpack.c.l.b16 %v974
    %v1046 = vunpack.c.h.b16 %v974
    %v1047 = vunpack.c.l.b16 %v975
    %v1048 = vunpack.c.h.b16 %v975
    %v1049 = vunpack.c.l.b16 %v976
    %v1050 = vunpack.c.h.b16 %v976
    %v1051 = vunpack.c.l.b16 %v977
    %v1052 = vunpack.c.h.b16 %v977
    %v1053 = vunpack.c.l.b16 %v978
    %v1054 = vunpack.c.h.b16 %v978
    %v1055 = vunpack.c.l.b16 %v979
    %v1056 = vunpack.c.h.b16 %v979
    %v1057 = vunpack.c.l.b16 %v980
    %v1058 = vunpack.c.h.b16 %v980
    %v1059 = vunpack.c.l.b16 %v981
    %v1060 = vunpack.c.h.b16 %v981
    %v1061 = vunpack.c.l.b16 %v982
    %v1062 = vunpack.c.h.b16 %v982
    %v1063 = vunpack.c.l.b16 %v983
    %v1064 = vunpack.c.h.b16 %v983
    %v1065 = vunpack.c.l.b16 %v984
    %v1066 = vunpack.c.h.b16 %v984
    %v1067 = vunpack.c.l.b16 %v985
    %v1068 = vunpack.c.h.b16 %v985
    %v1069 = vunpack.c.l.b16 %v986
    %v1070 = vunpack.c.h.b16 %v986
    %v1071 = vunpack.c.l.b16 %v987
    %v1072 = vunpack.c.h.b16 %v987
    %v1073 = vunpack.c.l.b16 %v988
    %v1074 = vunpack.c.h.b16 %v988
    %v1075 = vunpack.c.l.b16 %v989
    %v1076 = vunpack.c.h.b16 %v989
    %v1077 = vunpack.c.l.b16 %v990
    %v1078 = vunpack.c.h.b16 %v990
    %v1079 = vunpack.c.l.b16 %v991
    %v1080 = vunpack.c.h.b16 %v991
    %v1081 = vunpack.c.l.b16 %v992
    %v1082 = vunpack.c.h.b16 %v992
    %v1083 = vunpack.c.l.b16 %v993
    %v1084 = vunpack.c.h.b16 %v993
    %v1085 = vunpack.c.l.b16 %v994
    %v1086 = vunpack.c.h.b16 %v994
    %v1087 = vunpack.c.l.b16 %v995
    %v1088 = vunpack.c.h.b16 %v995
    %v1089 = vunpack.c.l.b16 %v996
    %v1090 = vunpack.c.h.b16 %v996
    %v1091 = vunpack.c.l.b16 %v997
    %v1092 = vunpack.c.h.b16 %v997
    %v1093 = vunpack.c.l.b16 %v998
    %v1094 = vunpack.c.h.b16 %v998
    %v1095 = vpack.c.b16 %v1035, %v1031
    %v1096 = vpack.c.b16 %v1036, %v1032
    %v1097 = vpack.c.b16 %v1037, %v1033
    %v1098 = vpack.c.b16 %v1038, %v1034
    %v1099 = vpack.c.b16 %v1043, %v1039
    %v1100 = vpack.c.b16 %v1044, %v1040
    %v1101 = vpack.c.b16 %v1045, %v1041
    %v1102 = vpack.c.b16 %v1046, %v1042
    %v1103 = vpack.c.b16 %v1051, %v1047
    %v1104 = vpack.c.b16 %v1052, %v1048
    %v1105 = vpack.c.b16 %v1053, %v1049
    %v1106 = vpack.c.b16 %v1054, %v1050
    %v1107 = vpack.c.b16 %v1059, %v1055
    %v1108 = vpack.c.b16 %v1060, %v1056
    %v1109 = vpack.c.b16 %v1061, %v1057
    %v1110 = vpack.c.b16 %v1062, %v1058
    %v1111 = vpack.c.b16 %v1067, %v1063
    %v1112 = vpack.c.b16 %v1068, %v1064
    %v1113 = vpack.c.b16 %v1069, %v1065
    %v1114 = vpack.c.b16 %v1070, %v1066
    %v1115 = vpack.c.b16 %v1075, %v1071
    %v1116 = vpack.c.b16 %v1076, %v1072
    %v1117 = vpack.c.b16 %v1077, %v1073
    %v1118 = vpack.c.b16 %v1078, %v1074
    %v1119 = vpack.c.b16 %v1083, %v1079
    %v1120 = vpack.c.b16 %v1084, %v1080
    %v1121 = vpack.c.b16 %v1085, %v1081
    %v1122 = vpack.c.b16 %v1086, %v1082
    %v1123 = vpack.c.b16 %v1091, %v1087
    %v1124 = vpack.c.b16 %v1092, %v1088
    %v1125 = vpack.c.b16 %v1093, %v1089
    %v1126 = vpack.c.b16 %v1094, %v1090
    %1159 = vmatprep.subr.bf16.mxu0 %v1096
    %1160 = vmatpush1.bf16.msra.mxu0 %v1095
    %1161 = vmatprep.subr.bf16.mxu0 %v1100
    %1162 = vmatpush1.bf16.msra.mxu0 %v1099
    %1163 = vmatprep.subr.bf16.mxu0 %v1104
    %1164 = vmatpush1.bf16.msra.mxu0 %v1103
    %1165 = vmatprep.subr.bf16.mxu0 %v1108
    %1166 = vmatpush1.bf16.msra.mxu0 %v1107
    %1167 = vmatprep.subr.bf16.mxu0 %v1112
    %1168 = vmatpush1.bf16.msra.mxu0 %v1111
    %1169 = vmatprep.subr.bf16.mxu0 %v1116
    %1170 = vmatpush1.bf16.msra.mxu0 %v1115
    %1171 = vmatprep.subr.bf16.mxu0 %v1120
    %1172 = vmatpush1.bf16.msra.mxu0 %v1119
    %1173 = vmatprep.subr.bf16.mxu0 %v1124
    %1174 = vmatpush1.bf16.msra.mxu0 %v1123
    %1175 = vmatprep.subr.bf16.mxu0 0
    %1176 = vmatpush1.bf16.msra.mxu0 0
    %1177 = vmatprep.subr.bf16.mxu0 0
    %1178 = vmatpush1.bf16.msra.mxu0 0
    %1179 = vmatprep.subr.bf16.mxu0 0
    %1180 = vmatpush1.bf16.msra.mxu0 0
    %1181 = vmatprep.subr.bf16.mxu0 0
    %1182 = vmatpush1.bf16.msra.mxu0 0
    %1183 = vmatprep.subr.bf16.mxu0 0
    %1184 = vmatpush1.bf16.msra.mxu0 0
    %1185 = vmatprep.subr.bf16.mxu0 0
    %1186 = vmatpush1.bf16.msra.mxu0 0
    %1187 = vmatprep.subr.bf16.mxu0 0
    %1188 = vmatpush1.bf16.msra.mxu0 0
    %1189 = vmatprep.subr.bf16.mxu0 0
    %1190 = vmatpush1.bf16.msra.mxu0 0
    %1191 = vmatprep.mubr.bf16.mxu0 0
    %1192 = vmatmul.mubr.bf16.gmra.mrb[0].mxu0 %v966
    %v1193 = vpop.f32.mrb[0].mxu0
    %v1194 = vadd.f32 %v602, %v1193
    %v1195 = vpop.f32.mrb[0].mxu0
    %v1196 = vadd.f32 %v604, %v1195
    %v1197 = vpop.f32.mrb[0].mxu0
    %v1198 = vpop.f32.mrb[0].mxu0
    %1199 = vdwg.mxu0
    %1200 = vmatprep.subr.bf16.mxu0 %v1098
    %1201 = vmatpush1.bf16.msra.mxu0 %v1097
    %1202 = vmatprep.subr.bf16.mxu0 %v1102
    %1203 = vmatpush1.bf16.msra.mxu0 %v1101
    %1204 = vmatprep.subr.bf16.mxu0 %v1106
    %1205 = vmatpush1.bf16.msra.mxu0 %v1105
    %1206 = vmatprep.subr.bf16.mxu0 %v1110
    %1207 = vmatpush1.bf16.msra.mxu0 %v1109
    %1208 = vmatprep.subr.bf16.mxu0 %v1114
    %1209 = vmatpush1.bf16.msra.mxu0 %v1113
    %1210 = vmatprep.subr.bf16.mxu0 %v1118
    %1211 = vmatpush1.bf16.msra.mxu0 %v1117
    %1212 = vmatprep.subr.bf16.mxu0 %v1122
    %1213 = vmatpush1.bf16.msra.mxu0 %v1121
    %1214 = vmatprep.subr.bf16.mxu0 %v1126
    %1215 = vmatpush1.bf16.msra.mxu0 %v1125
    %1216 = vmatprep.subr.bf16.mxu0 0
    %1217 = vmatpush1.bf16.msra.mxu0 0
    %1218 = vmatprep.subr.bf16.mxu0 0
    %1219 = vmatpush1.bf16.msra.mxu0 0
    %1220 = vmatprep.subr.bf16.mxu0 0
    %1221 = vmatpush1.bf16.msra.mxu0 0
    %1222 = vmatprep.subr.bf16.mxu0 0
    %1223 = vmatpush1.bf16.msra.mxu0 0
    %1224 = vmatprep.subr.bf16.mxu0 0
    %1225 = vmatpush1.bf16.msra.mxu0 0
    %1226 = vmatprep.subr.bf16.mxu0 0
    %1227 = vmatpush1.bf16.msra.mxu0 0
    %1228 = vmatprep.subr.bf16.mxu0 0
    %1229 = vmatpush1.bf16.msra.mxu0 0
    %1230 = vmatprep.subr.bf16.mxu0 0
    %1231 = vmatpush1.bf16.msra.mxu0 0
    %1232 = vmatprep.mubr.bf16.mxu0 0
    %1233 = vmatmul.mubr.bf16.gmra.mrb[0].mxu0 %v966
    %v1234 = vpop.f32.mrb[0].mxu0
    %v1235 = vadd.f32 %v643, %v1234
    %v1236 = vpop.f32.mrb[0].mxu0
    %v1237 = vadd.f32 %v645, %v1236
    %v1238 = vpop.f32.mrb[0].mxu0
    %v1239 = vpop.f32.mrb[0].mxu0
    %1240 = vdwg.mxu0
    %v1241 = vxor.u32 %v1194, 2147483648
    %v1242 = vxor.u32 %v1196, 2147483648
    %v1243 = vxor.u32 %v1235, 2147483648
    %v1244 = vmul.f32 %v1241, 1.442695
    %v1245 = vpow.pop %v1244
    %v1246 = vmul.f32 %v1242, 1.442695
    %v1247 = vpow.pop %v1246
    %v1248 = vmul.f32 %v1243, 1.442695
    %v1249 = vpow.pop %v1248
    %v1250 = vadd.f32 %v1245, 1.0
    %v1251 = vadd.f32 %v1247, 1.0
    %v1252 = vadd.f32 %v1249, 1.0
    %v1253 = vrcp.pop %v1250
    %v1254 = vmul.f32 1.0, %v1253
    %v1255 = vrcp.pop %v1251
    %v1256 = vmul.f32 1.0, %v1255
    %v1257 = vrcp.pop %v1252
    %v1258 = vmul.f32 1.0, %v1257
    %v1259 = vtanh.pop %v1237
    %v1260 = vmul.f32 %v1256, 0.0
    %v1261 = vmul.f32 %v1254, %v1259
    %v1262 = vadd.f32 %v1260, %v1261
    %v1263 = vtanh.pop %v1262
    %v1264 = vmul.f32 %v1258, %v1263
    %v1265 = vpack.c.bf16 %v1264, %v1264
    %1266 = vmatprep.subr.bf16.mxu0 %v504
    %1267 = vmatpush1.bf16.msra.mxu0 %v503
    %1268 = vmatprep.subr.bf16.mxu0 %v508
    %1269 = vmatpush1.bf16.msra.mxu0 %v507
    %1270 = vmatprep.subr.bf16.mxu0 %v512
    %1271 = vmatpush1.bf16.msra.mxu0 %v511
    %1272 = vmatprep.subr.bf16.mxu0 %v516
    %1273 = vmatpush1.bf16.msra.mxu0 %v515
    %1274 = vmatprep.subr.bf16.mxu0 %v520
    %1275 = vmatpush1.bf16.msra.mxu0 %v519
    %1276 = vmatprep.subr.bf16.mxu0 %v524
    %1277 = vmatpush1.bf16.msra.mxu0 %v523
    %1278 = vmatprep.subr.bf16.mxu0 %v528
    %1279 = vmatpush1.bf16.msra.mxu0 %v527
    %1280 = vmatprep.subr.bf16.mxu0 %v532
    %1281 = vmatpush1.bf16.msra.mxu0 %v531
    %1282 = vmatprep.subr.bf16.mxu0 0
    %1283 = vmatpush1.bf16.msra.mxu0 0
    %1284 = vmatprep.subr.bf16.mxu0 0
    %1285 = vmatpush1.bf16.msra.mxu0 0
    %1286 = vmatprep.subr.bf16.mxu0 0
    %1287 = vmatpush1.bf16.msra.mxu0 0
    %1288 = vmatprep.subr.bf16.mxu0 0
    %1289 = vmatpush1.bf16.msra.mxu0 0
    %1290 = vmatprep.subr.bf16.mxu0 0
    %1291 = vmatpush1.bf16.msra.mxu0 0
    %1292 = vmatprep.subr.bf16.mxu0 0
    %1293 = vmatpush1.bf16.msra.mxu0 0
    %1294 = vmatprep.subr.bf16.mxu0 0
    %1295 = vmatpush1.bf16.msra.mxu0 0
    %1296 = vmatprep.subr.bf16.mxu0 0
    %1297 = vmatpush1.bf16.msra.mxu0 0
    %1298 = vmatprep.mubr.bf16.mxu0 0
    %1299 = vmatmul.mubr.bf16.gmra.mrb[0].mxu0 %v1265
    %v1300 = vpop.f32.mrb[0].mxu0
    %v1301 = vadd.f32 %v358, %v1300
    %v1302 = vpop.f32.mrb[0].mxu0
    %v1303 = vadd.f32 %v362, %v1302
    %v1304 = vpop.f32.mrb[0].mxu0
    %v1305 = vpop.f32.mrb[0].mxu0
    %1306 = vdwg.mxu0
    %1307 = vmatprep.subr.bf16.mxu0 %v506
    %1308 = vmatpush1.bf16.msra.mxu0 %v505
    %1309 = vmatprep.subr.bf16.mxu0 %v510
    %1310 = vmatpush1.bf16.msra.mxu0 %v509
    %1311 = vmatprep.subr.bf16.mxu0 %v514
    %1312 = vmatpush1.bf16.msra.mxu0 %v513
    %1313 = vmatprep.subr.bf16.mxu0 %v518
    %1314 = vmatpush1.bf16.msra.mxu0 %v517
    %1315 = vmatprep.subr.bf16.mxu0 %v522
    %1316 = vmatpush1.bf16.msra.mxu0 %v521
    %1317 = vmatprep.subr.bf16.mxu0 %v526
    %1318 = vmatpush1.bf16.msra.mxu0 %v525
    %1319 = vmatprep.subr.bf16.mxu0 %v530
    %1320 = vmatpush1.bf16.msra.mxu0 %v529
    %1321 = vmatprep.subr.bf16.mxu0 %v534
    %1322 = vmatpush1.bf16.msra.mxu0 %v533
    %1323 = vmatprep.subr.bf16.mxu0 0
    %1324 = vmatpush1.bf16.msra.mxu0 0
    %1325 = vmatprep.subr.bf16.mxu0 0
    %1326 = vmatpush1.bf16.msra.mxu0 0
    %1327 = vmatprep.subr.bf16.mxu0 0
    %1328 = vmatpush1.bf16.msra.mxu0 0
    %1329 = vmatprep.subr.bf16.mxu0 0
    %1330 = vmatpush1.bf16.msra.mxu0 0
    %1331 = vmatprep.subr.bf16.mxu0 0
    %1332 = vmatpush1.bf16.msra.mxu0 0
    %1333 = vmatprep.subr.bf16.mxu0 0
    %1334 = vmatpush1.bf16.msra.mxu0 0
    %1335 = vmatprep.subr.bf16.mxu0 0
    %1336 = vmatpush1.bf16.msra.mxu0 0
    %1337 = vmatprep.subr.bf16.mxu0 0
    %1338 = vmatpush1.bf16.msra.mxu0 0
    %1339 = vmatprep.mubr.bf16.mxu0 0
    %1340 = vmatmul.mubr.bf16.gmra.mrb[0].mxu0 %v1265
    %v1341 = vpop.f32.mrb[0].mxu0
    %v1342 = vadd.f32 %v366, %v1341
    %v1343 = vpop.f32.mrb[0].mxu0
    %v1344 = vadd.f32 %v370, %v1343
    %v1345 = vpop.f32.mrb[0].mxu0
    %v1346 = vpop.f32.mrb[0].mxu0
    %1347 = vdwg.mxu0
    %1348 = vmatprep.subr.bf16.mxu0 %v778
    %1349 = vmatpush1.bf16.msra.mxu0 %v777
    %1350 = vmatprep.subr.bf16.mxu0 %v782
    %1351 = vmatpush1.bf16.msra.mxu0 %v781
    %1352 = vmatprep.subr.bf16.mxu0 %v786
    %1353 = vmatpush1.bf16.msra.mxu0 %v785
    %1354 = vmatprep.subr.bf16.mxu0 %v790
    %1355 = vmatpush1.bf16.msra.mxu0 %v789
    %1356 = vmatprep.subr.bf16.mxu0 %v794
    %1357 = vmatpush1.bf16.msra.mxu0 %v793
    %1358 = vmatprep.subr.bf16.mxu0 %v798
    %1359 = vmatpush1.bf16.msra.mxu0 %v797
    %1360 = vmatprep.subr.bf16.mxu0 %v802
    %1361 = vmatpush1.bf16.msra.mxu0 %v801
    %1362 = vmatprep.subr.bf16.mxu0 %v806
    %1363 = vmatpush1.bf16.msra.mxu0 %v805
    %1364 = vmatprep.subr.bf16.mxu0 0
    %1365 = vmatpush1.bf16.msra.mxu0 0
    %1366 = vmatprep.subr.bf16.mxu0 0
    %1367 = vmatpush1.bf16.msra.mxu0 0
    %1368 = vmatprep.subr.bf16.mxu0 0
    %1369 = vmatpush1.bf16.msra.mxu0 0
    %1370 = vmatprep.subr.bf16.mxu0 0
    %1371 = vmatpush1.bf16.msra.mxu0 0
    %1372 = vmatprep.subr.bf16.mxu0 0
    %1373 = vmatpush1.bf16.msra.mxu0 0
    %1374 = vmatprep.subr.bf16.mxu0 0
    %1375 = vmatpush1.bf16.msra.mxu0 0
    %1376 = vmatprep.subr.bf16.mxu0 0
    %1377 = vmatpush1.bf16.msra.mxu0 0
    %1378 = vmatprep.subr.bf16.mxu0 0
    %1379 = vmatpush1.bf16.msra.mxu0 0
    %1380 = vmatprep.mubr.bf16.mxu0 0
    %1381 = vmatmul.mubr.bf16.gmra.mrb[0].mxu0 %v966
    %v1382 = vpop.f32.mrb[0].mxu0
    %v1383 = vadd.f32 0.0, %v1382
    %v1384 = vpop.f32.mrb[0].mxu0
    %v1385 = vadd.f32 0.0, %v1384
    %v1386 = vpop.f32.mrb[0].mxu0
    %v1387 = vpop.f32.mrb[0].mxu0
    %1388 = vdwg.mxu0
    %1389 = vmatprep.subr.bf16.mxu0 %v780
    %1390 = vmatpush1.bf16.msra.mxu0 %v779
    %1391 = vmatprep.subr.bf16.mxu0 %v784
    %1392 = vmatpush1.bf16.msra.mxu0 %v783
    %1393 = vmatprep.subr.bf16.mxu0 %v788
    %1394 = vmatpush1.bf16.msra.mxu0 %v787
    %1395 = vmatprep.subr.bf16.mxu0 %v792
    %1396 = vmatpush1.bf16.msra.mxu0 %v791
    %1397 = vmatprep.subr.bf16.mxu0 %v796
    %1398 = vmatpush1.bf16.msra.mxu0 %v795
    %1399 = vmatprep.subr.bf16.mxu0 %v800
    %1400 = vmatpush1.bf16.msra.mxu0 %v799
    %1401 = vmatprep.subr.bf16.mxu0 %v804
    %1402 = vmatpush1.bf16.msra.mxu0 %v803
    %1403 = vmatprep.subr.bf16.mxu0 %v808
    %1404 = vmatpush1.bf16.msra.mxu0 %v807
    %1405 = vmatprep.subr.bf16.mxu0 0
    %1406 = vmatpush1.bf16.msra.mxu0 0
    %1407 = vmatprep.subr.bf16.mxu0 0
    %1408 = vmatpush1.bf16.msra.mxu0 0
    %1409 = vmatprep.subr.bf16.mxu0 0
    %1410 = vmatpush1.bf16.msra.mxu0 0
    %1411 = vmatprep.subr.bf16.mxu0 0
    %1412 = vmatpush1.bf16.msra.mxu0 0
    %1413 = vmatprep.subr.bf16.mxu0 0
    %1414 = vmatpush1.bf16.msra.mxu0 0
    %1415 = vmatprep.subr.bf16.mxu0 0
    %1416 = vmatpush1.bf16.msra.mxu0 0
    %1417 = vmatprep.subr.bf16.mxu0 0
    %1418 = vmatpush1.bf16.msra.mxu0 0
    %1419 = vmatprep.subr.bf16.mxu0 0
    %1420 = vmatpush1.bf16.msra.mxu0 0
    %1421 = vmatprep.mubr.bf16.mxu0 0
    %1422 = vmatmul.mubr.bf16.gmra.mrb[0].mxu0 %v966
    %v1423 = vpop.f32.mrb[0].mxu0
    %v1424 = vadd.f32 0.0, %v1423
    %v1425 = vpop.f32.mrb[0].mxu0
    %v1426 = vadd.f32 0.0, %v1425
    %v1427 = vpop.f32.mrb[0].mxu0
    %v1428 = vpop.f32.mrb[0].mxu0
    %1429 = vdwg.mxu0
    %v1434 = vcombine.low %v1383, %v1385
    %v1435 = vcombine.low %v1424, %v1426
    %v1437 = vunpack.c.l.s4 1983009808
    %v1438 = vunpack.c.0.s8 %v1437
    %v1439 = vlaneseq
    %v1440 = vshrl.u32 %v1439, 7
    %v1441 = vsub.s32 %v1438, %v1440
    %v1442 = vrot.slane %v1434, %v1441
    %v1444 = vunpack.c.l.s4 1983009808
    %v1445 = vunpack.c.0.s8 %v1444
    %v1446 = vlaneseq
    %v1447 = vshrl.u32 %v1446, 7
    %v1448 = vsub.s32 %v1445, %v1447
    %v1449 = vrot.slane %v1435, %v1448
    %v1450 = vcombine.low %v1442, %v1449
    %v1452 = vadd.f32 %v306, %v1450
    %v1453 = vxor.u32 %v1452, 2147483648
    %v1454 = vmul.f32 %v1453, 1.442695
    %v1455 = vpow.pop %v1454
    %v1456 = vadd.f32 %v1455, 1.0
    %v1457 = vrcp.pop %v1456
    %v1458 = vmul.f32 1.0, %v1457
    %v1460 = vrot.slane %v1452, 6
    %v1462 = vtanh.pop %v1460
    %v1464 = vrot.slane %v1458, 2
    %v1466 = vmul.f32 %v1464, %v961
    %v1467 = vmul.f32 %v1458, %v1462
    %v1468 = vadd.f32 %v1466, %v1467
    %v1469 = vtanh.pop %v1468
    %v1470 = vrot.slane %v1458, 4
    %v1472 = vmul.f32 %v1470, %v1469
    %v1473 = vpack.c.bf16 %v1472, %v1472
    %1474 = vmatprep.subr.bf16.mxu0 %v1096
    %1475 = vmatpush1.bf16.msra.mxu0 %v1095
    %1476 = vmatprep.subr.bf16.mxu0 %v1100
    %1477 = vmatpush1.bf16.msra.mxu0 %v1099
    %1478 = vmatprep.subr.bf16.mxu0 %v1104
    %1479 = vmatpush1.bf16.msra.mxu0 %v1103
    %1480 = vmatprep.subr.bf16.mxu0 %v1108
    %1481 = vmatpush1.bf16.msra.mxu0 %v1107
    %1482 = vmatprep.subr.bf16.mxu0 %v1112
    %1483 = vmatpush1.bf16.msra.mxu0 %v1111
    %1484 = vmatprep.subr.bf16.mxu0 %v1116
    %1485 = vmatpush1.bf16.msra.mxu0 %v1115
    %1486 = vmatprep.subr.bf16.mxu0 %v1120
    %1487 = vmatpush1.bf16.msra.mxu0 %v1119
    %1488 = vmatprep.subr.bf16.mxu0 %v1124
    %1489 = vmatpush1.bf16.msra.mxu0 %v1123
    %1490 = vmatprep.subr.bf16.mxu0 0
    %1491 = vmatpush1.bf16.msra.mxu0 0
    %1492 = vmatprep.subr.bf16.mxu0 0
    %1493 = vmatpush1.bf16.msra.mxu0 0
    %1494 = vmatprep.subr.bf16.mxu0 0
    %1495 = vmatpush1.bf16.msra.mxu0 0
    %1496 = vmatprep.subr.bf16.mxu0 0
    %1497 = vmatpush1.bf16.msra.mxu0 0
    %1498 = vmatprep.subr.bf16.mxu0 0
    %1499 = vmatpush1.bf16.msra.mxu0 0
    %1500 = vmatprep.subr.bf16.mxu0 0
    %1501 = vmatpush1.bf16.msra.mxu0 0
    %1502 = vmatprep.subr.bf16.mxu0 0
    %1503 = vmatpush1.bf16.msra.mxu0 0
    %1504 = vmatprep.subr.bf16.mxu0 0
    %1505 = vmatpush1.bf16.msra.mxu0 0
    %1506 = vmatprep.mubr.bf16.mxu0 0
    %1507 = vmatmul.mubr.bf16.gmra.mrb[0].mxu0 %v1473
    %v1508 = vpop.f32.mrb[0].mxu0
    %v1509 = vadd.f32 %v1301, %v1508
    %v1510 = vpop.f32.mrb[0].mxu0
    %v1511 = vadd.f32 %v1303, %v1510
    %v1512 = vpop.f32.mrb[0].mxu0
    %v1513 = vpop.f32.mrb[0].mxu0
    %1514 = vdwg.mxu0
    %1515 = vmatprep.subr.bf16.mxu0 %v1098
    %1516 = vmatpush1.bf16.msra.mxu0 %v1097
    %1517 = vmatprep.subr.bf16.mxu0 %v1102
    %1518 = vmatpush1.bf16.msra.mxu0 %v1101
    %1519 = vmatprep.subr.bf16.mxu0 %v1106
    %1520 = vmatpush1.bf16.msra.mxu0 %v1105
    %1521 = vmatprep.subr.bf16.mxu0 %v1110
    %1522 = vmatpush1.bf16.msra.mxu0 %v1109
    %1523 = vmatprep.subr.bf16.mxu0 %v1114
    %1524 = vmatpush1.bf16.msra.mxu0 %v1113
    %1525 = vmatprep.subr.bf16.mxu0 %v1118
    %1526 = vmatpush1.bf16.msra.mxu0 %v1117
    %1527 = vmatprep.subr.bf16.mxu0 %v1122
    %1528 = vmatpush1.bf16.msra.mxu0 %v1121
    %1529 = vmatprep.subr.bf16.mxu0 %v1126
    %1530 = vmatpush1.bf16.msra.mxu0 %v1125
    %1531 = vmatprep.subr.bf16.mxu0 0
    %1532 = vmatpush1.bf16.msra.mxu0 0
    %1533 = vmatprep.subr.bf16.mxu0 0
    %1534 = vmatpush1.bf16.msra.mxu0 0
    %1535 = vmatprep.subr.bf16.mxu0 0
    %1536 = vmatpush1.bf16.msra.mxu0 0
    %1537 = vmatprep.subr.bf16.mxu0 0
    %1538 = vmatpush1.bf16.msra.mxu0 0
    %1539 = vmatprep.subr.bf16.mxu0 0
    %1540 = vmatpush1.bf16.msra.mxu0 0
    %1541 = vmatprep.subr.bf16.mxu0 0
    %1542 = vmatpush1.bf16.msra.mxu0 0
    %1543 = vmatprep.subr.bf16.mxu0 0
    %1544 = vmatpush1.bf16.msra.mxu0 0
    %1545 = vmatprep.subr.bf16.mxu0 0
    %1546 = vmatpush1.bf16.msra.mxu0 0
    %1547 = vmatprep.mubr.bf16.mxu0 0
    %1548 = vmatmul.mubr.bf16.gmra.mrb[0].mxu0 %v1473
    %v1549 = vpop.f32.mrb[0].mxu0
    %v1550 = vadd.f32 %v1342, %v1549
    %v1551 = vpop.f32.mrb[0].mxu0
    %v1552 = vadd.f32 %v1344, %v1551
    %v1553 = vpop.f32.mrb[0].mxu0
    %v1554 = vpop.f32.mrb[0].mxu0
    %1555 = vdwg.mxu0
    %v1556 = vxor.u32 %v1509, 2147483648
    %v1557 = vxor.u32 %v1511, 2147483648
    %v1558 = vxor.u32 %v1550, 2147483648
    %v1559 = vmul.f32 %v1556, 1.442695
    %v1560 = vpow.pop %v1559
    %v1561 = vmul.f32 %v1557, 1.442695
    %v1562 = vpow.pop %v1561
    %v1563 = vmul.f32 %v1558, 1.442695
    %v1564 = vpow.pop %v1563
    %v1565 = vadd.f32 %v1560, 1.0
    %v1566 = vadd.f32 %v1562, 1.0
    %v1567 = vadd.f32 %v1564, 1.0
    %v1568 = vrcp.pop %v1565
    %v1569 = vmul.f32 1.0, %v1568
    %v1570 = vrcp.pop %v1566
    %v1571 = vmul.f32 1.0, %v1570
    %v1572 = vrcp.pop %v1567
    %v1573 = vmul.f32 1.0, %v1572
    %v1574 = vtanh.pop %v1552
    %v1575 = vmul.f32 %v1571, %v1262
    %v1576 = vmul.f32 %v1569, %v1574
    %v1577 = vadd.f32 %v1575, %v1576
    %v1578 = vtanh.pop %v1577
    %v1579 = vmul.f32 %v1573, %v1578
    %v1580 = vpack.c.bf16 %v1579, %v1579
    %1581 = vmatprep.subr.bf16.mxu0 %v504
    %1582 = vmatpush1.bf16.msra.mxu0 %v503
    %1583 = vmatprep.subr.bf16.mxu0 %v508
    %1584 = vmatpush1.bf16.msra.mxu0 %v507
    %1585 = vmatprep.subr.bf16.mxu0 %v512
    %1586 = vmatpush1.bf16.msra.mxu0 %v511
    %1587 = vmatprep.subr.bf16.mxu0 %v516
    %1588 = vmatpush1.bf16.msra.mxu0 %v515
    %1589 = vmatprep.subr.bf16.mxu0 %v520
    %1590 = vmatpush1.bf16.msra.mxu0 %v519
    %1591 = vmatprep.subr.bf16.mxu0 %v524
    %1592 = vmatpush1.bf16.msra.mxu0 %v523
    %1593 = vmatprep.subr.bf16.mxu0 %v528
    %1594 = vmatpush1.bf16.msra.mxu0 %v527
    %1595 = vmatprep.subr.bf16.mxu0 %v532
    %1596 = vmatpush1.bf16.msra.mxu0 %v531
    %1597 = vmatprep.subr.bf16.mxu0 0
    %1598 = vmatpush1.bf16.msra.mxu0 0
    %1599 = vmatprep.subr.bf16.mxu0 0
    %1600 = vmatpush1.bf16.msra.mxu0 0
    %1601 = vmatprep.subr.bf16.mxu0 0
    %1602 = vmatpush1.bf16.msra.mxu0 0
    %1603 = vmatprep.subr.bf16.mxu0 0
    %1604 = vmatpush1.bf16.msra.mxu0 0
    %1605 = vmatprep.subr.bf16.mxu0 0
    %1606 = vmatpush1.bf16.msra.mxu0 0
    %1607 = vmatprep.subr.bf16.mxu0 0
    %1608 = vmatpush1.bf16.msra.mxu0 0
    %1609 = vmatprep.subr.bf16.mxu0 0
    %1610 = vmatpush1.bf16.msra.mxu0 0
    %1611 = vmatprep.subr.bf16.mxu0 0
    %1612 = vmatpush1.bf16.msra.mxu0 0
    %1613 = vmatprep.mubr.bf16.mxu0 0
    %1614 = vmatmul.mubr.bf16.gmra.mrb[0].mxu0 %v1580
    %v1615 = vpop.f32.mrb[0].mxu0
    %v1616 = vadd.f32 %v358, %v1615
    %v1617 = vpop.f32.mrb[0].mxu0
    %v1618 = vadd.f32 %v362, %v1617
    %v1619 = vpop.f32.mrb[0].mxu0
    %v1620 = vpop.f32.mrb[0].mxu0
    %1621 = vdwg.mxu0
    %1622 = vmatprep.subr.bf16.mxu0 %v506
    %1623 = vmatpush1.bf16.msra.mxu0 %v505
    %1624 = vmatprep.subr.bf16.mxu0 %v510
    %1625 = vmatpush1.bf16.msra.mxu0 %v509
    %1626 = vmatprep.subr.bf16.mxu0 %v514
    %1627 = vmatpush1.bf16.msra.mxu0 %v513
    %1628 = vmatprep.subr.bf16.mxu0 %v518
    %1629 = vmatpush1.bf16.msra.mxu0 %v517
    %1630 = vmatprep.subr.bf16.mxu0 %v522
    %1631 = vmatpush1.bf16.msra.mxu0 %v521
    %1632 = vmatprep.subr.bf16.mxu0 %v526
    %1633 = vmatpush1.bf16.msra.mxu0 %v525
    %1634 = vmatprep.subr.bf16.mxu0 %v530
    %1635 = vmatpush1.bf16.msra.mxu0 %v529
    %1636 = vmatprep.subr.bf16.mxu0 %v534
    %1637 = vmatpush1.bf16.msra.mxu0 %v533
    %1638 = vmatprep.subr.bf16.mxu0 0
    %1639 = vmatpush1.bf16.msra.mxu0 0
    %1640 = vmatprep.subr.bf16.mxu0 0
    %1641 = vmatpush1.bf16.msra.mxu0 0
    %1642 = vmatprep.subr.bf16.mxu0 0
    %1643 = vmatpush1.bf16.msra.mxu0 0
    %1644 = vmatprep.subr.bf16.mxu0 0
    %1645 = vmatpush1.bf16.msra.mxu0 0
    %1646 = vmatprep.subr.bf16.mxu0 0
    %1647 = vmatpush1.bf16.msra.mxu0 0
    %1648 = vmatprep.subr.bf16.mxu0 0
    %1649 = vmatpush1.bf16.msra.mxu0 0
    %1650 = vmatprep.subr.bf16.mxu0 0
    %1651 = vmatpush1.bf16.msra.mxu0 0
    %1652 = vmatprep.subr.bf16.mxu0 0
    %1653 = vmatpush1.bf16.msra.mxu0 0
    %1654 = vmatprep.mubr.bf16.mxu0 0
    %1655 = vmatmul.mubr.bf16.gmra.mrb[0].mxu0 %v1580
    %v1656 = vpop.f32.mrb[0].mxu0
    %v1657 = vadd.f32 %v366, %v1656
    %v1658 = vpop.f32.mrb[0].mxu0
    %v1659 = vadd.f32 %v370, %v1658
    %v1660 = vpop.f32.mrb[0].mxu0
    %v1661 = vpop.f32.mrb[0].mxu0
    %1662 = vdwg.mxu0
    %1663 = vmatprep.subr.bf16.mxu0 %v778
    %1664 = vmatpush1.bf16.msra.mxu0 %v777
    %1665 = vmatprep.subr.bf16.mxu0 %v782
    %1666 = vmatpush1.bf16.msra.mxu0 %v781
    %1667 = vmatprep.subr.bf16.mxu0 %v786
    %1668 = vmatpush1.bf16.msra.mxu0 %v785
    %1669 = vmatprep.subr.bf16.mxu0 %v790
    %1670 = vmatpush1.bf16.msra.mxu0 %v789
    %1671 = vmatprep.subr.bf16.mxu0 %v794
    %1672 = vmatpush1.bf16.msra.mxu0 %v793
    %1673 = vmatprep.subr.bf16.mxu0 %v798
    %1674 = vmatpush1.bf16.msra.mxu0 %v797
    %1675 = vmatprep.subr.bf16.mxu0 %v802
    %1676 = vmatpush1.bf16.msra.mxu0 %v801
    %1677 = vmatprep.subr.bf16.mxu0 %v806
    %1678 = vmatpush1.bf16.msra.mxu0 %v805
    %1679 = vmatprep.subr.bf16.mxu0 0
    %1680 = vmatpush1.bf16.msra.mxu0 0
    %1681 = vmatprep.subr.bf16.mxu0 0
    %1682 = vmatpush1.bf16.msra.mxu0 0
    %1683 = vmatprep.subr.bf16.mxu0 0
    %1684 = vmatpush1.bf16.msra.mxu0 0
    %1685 = vmatprep.subr.bf16.mxu0 0
    %1686 = vmatpush1.bf16.msra.mxu0 0
    %1687 = vmatprep.subr.bf16.mxu0 0
    %1688 = vmatpush1.bf16.msra.mxu0 0
    %1689 = vmatprep.subr.bf16.mxu0 0
    %1690 = vmatpush1.bf16.msra.mxu0 0
    %1691 = vmatprep.subr.bf16.mxu0 0
    %1692 = vmatpush1.bf16.msra.mxu0 0
    %1693 = vmatprep.subr.bf16.mxu0 0
    %1694 = vmatpush1.bf16.msra.mxu0 0
    %1695 = vmatprep.mubr.bf16.mxu0 0
    %1696 = vmatmul.mubr.bf16.gmra.mrb[0].mxu0 %v1473
    %v1697 = vpop.f32.mrb[0].mxu0
    %v1698 = vadd.f32 0.0, %v1697
    %v1699 = vpop.f32.mrb[0].mxu0
    %v1700 = vadd.f32 0.0, %v1699
    %v1701 = vpop.f32.mrb[0].mxu0
    %v1702 = vpop.f32.mrb[0].mxu0
    %1703 = vdwg.mxu0
    %1704 = vmatprep.subr.bf16.mxu0 %v780
    %1705 = vmatpush1.bf16.msra.mxu0 %v779
    %1706 = vmatprep.subr.bf16.mxu0 %v784
    %1707 = vmatpush1.bf16.msra.mxu0 %v783
    %1708 = vmatprep.subr.bf16.mxu0 %v788
    %1709 = vmatpush1.bf16.msra.mxu0 %v787
    %1710 = vmatprep.subr.bf16.mxu0 %v792
    %1711 = vmatpush1.bf16.msra.mxu0 %v791
    %1712 = vmatprep.subr.bf16.mxu0 %v796
    %1713 = vmatpush1.bf16.msra.mxu0 %v795
    %1714 = vmatprep.subr.bf16.mxu0 %v800
    %1715 = vmatpush1.bf16.msra.mxu0 %v799
    %1716 = vmatprep.subr.bf16.mxu0 %v804
    %1717 = vmatpush1.bf16.msra.mxu0 %v803
    %1718 = vmatprep.subr.bf16.mxu0 %v808
    %1719 = vmatpush1.bf16.msra.mxu0 %v807
    %1720 = vmatprep.subr.bf16.mxu0 0
    %1721 = vmatpush1.bf16.msra.mxu0 0
    %1722 = vmatprep.subr.bf16.mxu0 0
    %1723 = vmatpush1.bf16.msra.mxu0 0
    %1724 = vmatprep.subr.bf16.mxu0 0
    %1725 = vmatpush1.bf16.msra.mxu0 0
    %1726 = vmatprep.subr.bf16.mxu0 0
    %1727 = vmatpush1.bf16.msra.mxu0 0
    %1728 = vmatprep.subr.bf16.mxu0 0
    %1729 = vmatpush1.bf16.msra.mxu0 0
    %1730 = vmatprep.subr.bf16.mxu0 0
    %1731 = vmatpush1.bf16.msra.mxu0 0
    %1732 = vmatprep.subr.bf16.mxu0 0
    %1733 = vmatpush1.bf16.msra.mxu0 0
    %1734 = vmatprep.subr.bf16.mxu0 0
    %1735 = vmatpush1.bf16.msra.mxu0 0
    %1736 = vmatprep.mubr.bf16.mxu0 0
    %1737 = vmatmul.mubr.bf16.gmra.mrb[0].mxu0 %v1473
    %v1738 = vpop.f32.mrb[0].mxu0
    %v1739 = vadd.f32 0.0, %v1738
    %v1740 = vpop.f32.mrb[0].mxu0
    %v1741 = vadd.f32 0.0, %v1740
    %v1742 = vpop.f32.mrb[0].mxu0
    %v1743 = vpop.f32.mrb[0].mxu0
    %1744 = vdwg.mxu0
    %v1749 = vcombine.low %v1698, %v1700
    %v1750 = vcombine.low %v1739, %v1741
    %v1752 = vunpack.c.l.s4 1983009808
    %v1753 = vunpack.c.0.s8 %v1752
    %v1754 = vlaneseq
    %v1755 = vshrl.u32 %v1754, 7
    %v1756 = vsub.s32 %v1753, %v1755
    %v1757 = vrot.slane %v1749, %v1756
    %v1759 = vunpack.c.l.s4 1983009808
    %v1760 = vunpack.c.0.s8 %v1759
    %v1761 = vlaneseq
    %v1762 = vshrl.u32 %v1761, 7
    %v1763 = vsub.s32 %v1760, %v1762
    %v1764 = vrot.slane %v1750, %v1763
    %v1765 = vcombine.low %v1757, %v1764
    %v1767 = vadd.f32 %v307, %v1765
    %v1768 = vxor.u32 %v1767, 2147483648
    %v1769 = vmul.f32 %v1768, 1.442695
    %v1770 = vpow.pop %v1769
    %v1771 = vadd.f32 %v1770, 1.0
    %v1772 = vrcp.pop %v1771
    %v1773 = vmul.f32 1.0, %v1772
    %v1775 = vrot.slane %v1767, 6
    %v1777 = vtanh.pop %v1775
    %v1779 = vrot.slane %v1773, 2
    %v1781 = vmul.f32 %v1779, %v1468
    %v1782 = vmul.f32 %v1773, %v1777
    %v1783 = vadd.f32 %v1781, %v1782
    %v1784 = vtanh.pop %v1783
    %v1785 = vrot.slane %v1773, 4
    %v1787 = vmul.f32 %v1785, %v1784
    %v1788 = vpack.c.bf16 %v1787, %v1787
    %1789 = vmatprep.subr.bf16.mxu0 %v1096
    %1790 = vmatpush1.bf16.msra.mxu0 %v1095
    %1791 = vmatprep.subr.bf16.mxu0 %v1100
    %1792 = vmatpush1.bf16.msra.mxu0 %v1099
    %1793 = vmatprep.subr.bf16.mxu0 %v1104
    %1794 = vmatpush1.bf16.msra.mxu0 %v1103
    %1795 = vmatprep.subr.bf16.mxu0 %v1108
    %1796 = vmatpush1.bf16.msra.mxu0 %v1107
    %1797 = vmatprep.subr.bf16.mxu0 %v1112
    %1798 = vmatpush1.bf16.msra.mxu0 %v1111
    %1799 = vmatprep.subr.bf16.mxu0 %v1116
    %1800 = vmatpush1.bf16.msra.mxu0 %v1115
    %1801 = vmatprep.subr.bf16.mxu0 %v1120
    %1802 = vmatpush1.bf16.msra.mxu0 %v1119
    %1803 = vmatprep.subr.bf16.mxu0 %v1124
    %1804 = vmatpush1.bf16.msra.mxu0 %v1123
    %1805 = vmatprep.subr.bf16.mxu0 0
    %1806 = vmatpush1.bf16.msra.mxu0 0
    %1807 = vmatprep.subr.bf16.mxu0 0
    %1808 = vmatpush1.bf16.msra.mxu0 0
    %1809 = vmatprep.subr.bf16.mxu0 0
    %1810 = vmatpush1.bf16.msra.mxu0 0
    %1811 = vmatprep.subr.bf16.mxu0 0
    %1812 = vmatpush1.bf16.msra.mxu0 0
    %1813 = vmatprep.subr.bf16.mxu0 0
    %1814 = vmatpush1.bf16.msra.mxu0 0
    %1815 = vmatprep.subr.bf16.mxu0 0
    %1816 = vmatpush1.bf16.msra.mxu0 0
    %1817 = vmatprep.subr.bf16.mxu0 0
    %1818 = vmatpush1.bf16.msra.mxu0 0
    %1819 = vmatprep.subr.bf16.mxu0 0
    %1820 = vmatpush1.bf16.msra.mxu0 0
    %1821 = vmatprep.mubr.bf16.mxu0 0
    %1822 = vmatmul.mubr.bf16.gmra.mrb[0].mxu0 %v1788
    %v1823 = vpop.f32.mrb[0].mxu0
    %v1824 = vadd.f32 %v1616, %v1823
    %v1825 = vpop.f32.mrb[0].mxu0
    %v1826 = vadd.f32 %v1618, %v1825
    %v1827 = vpop.f32.mrb[0].mxu0
    %v1828 = vpop.f32.mrb[0].mxu0
    %1829 = vdwg.mxu0
    %1830 = vmatprep.subr.bf16.mxu0 %v1098
    %1831 = vmatpush1.bf16.msra.mxu0 %v1097
    %1832 = vmatprep.subr.bf16.mxu0 %v1102
    %1833 = vmatpush1.bf16.msra.mxu0 %v1101
    %1834 = vmatprep.subr.bf16.mxu0 %v1106
    %1835 = vmatpush1.bf16.msra.mxu0 %v1105
    %1836 = vmatprep.subr.bf16.mxu0 %v1110
    %1837 = vmatpush1.bf16.msra.mxu0 %v1109
    %1838 = vmatprep.subr.bf16.mxu0 %v1114
    %1839 = vmatpush1.bf16.msra.mxu0 %v1113
    %1840 = vmatprep.subr.bf16.mxu0 %v1118
    %1841 = vmatpush1.bf16.msra.mxu0 %v1117
    %1842 = vmatprep.subr.bf16.mxu0 %v1122
    %1843 = vmatpush1.bf16.msra.mxu0 %v1121
    %1844 = vmatprep.subr.bf16.mxu0 %v1126
    %1845 = vmatpush1.bf16.msra.mxu0 %v1125
    %1846 = vmatprep.subr.bf16.mxu0 0
    %1847 = vmatpush1.bf16.msra.mxu0 0
    %1848 = vmatprep.subr.bf16.mxu0 0
    %1849 = vmatpush1.bf16.msra.mxu0 0
    %1850 = vmatprep.subr.bf16.mxu0 0
    %1851 = vmatpush1.bf16.msra.mxu0 0
    %1852 = vmatprep.subr.bf16.mxu0 0
    %1853 = vmatpush1.bf16.msra.mxu0 0
    %1854 = vmatprep.subr.bf16.mxu0 0
    %1855 = vmatpush1.bf16.msra.mxu0 0
    %1856 = vmatprep.subr.bf16.mxu0 0
    %1857 = vmatpush1.bf16.msra.mxu0 0
    %1858 = vmatprep.subr.bf16.mxu0 0
    %1859 = vmatpush1.bf16.msra.mxu0 0
    %1860 = vmatprep.subr.bf16.mxu0 0
    %1861 = vmatpush1.bf16.msra.mxu0 0
    %1862 = vmatprep.mubr.bf16.mxu0 0
    %1863 = vmatmul.mubr.bf16.gmra.mrb[0].mxu0 %v1788
    %v1864 = vpop.f32.mrb[0].mxu0
    %v1865 = vadd.f32 %v1657, %v1864
    %v1866 = vpop.f32.mrb[0].mxu0
    %v1867 = vadd.f32 %v1659, %v1866
    %v1868 = vpop.f32.mrb[0].mxu0
    %v1869 = vpop.f32.mrb[0].mxu0
    %1870 = vdwg.mxu0
    %v1871 = vxor.u32 %v1824, 2147483648
    %v1872 = vxor.u32 %v1826, 2147483648
    %v1873 = vxor.u32 %v1865, 2147483648
    %v1874 = vmul.f32 %v1871, 1.442695
    %v1875 = vpow.pop %v1874
    %v1876 = vmul.f32 %v1872, 1.442695
    %v1877 = vpow.pop %v1876
    %v1878 = vmul.f32 %v1873, 1.442695
    %v1879 = vpow.pop %v1878
    %v1880 = vadd.f32 %v1875, 1.0
    %v1881 = vadd.f32 %v1877, 1.0
    %v1882 = vadd.f32 %v1879, 1.0
    %v1883 = vrcp.pop %v1880
    %v1884 = vmul.f32 1.0, %v1883
    %v1885 = vrcp.pop %v1881
    %v1886 = vmul.f32 1.0, %v1885
    %v1887 = vrcp.pop %v1882
    %v1888 = vmul.f32 1.0, %v1887
    %v1889 = vtanh.pop %v1867
    %v1890 = vmul.f32 %v1886, %v1577
    %v1891 = vmul.f32 %v1884, %v1889
    %v1892 = vadd.f32 %v1890, %v1891
    %v1893 = vtanh.pop %v1892
    %v1894 = vmul.f32 %v1888, %v1893
    %v1895 = vpack.c.bf16 %v1894, %v1894
    %1896 = vmatprep.subr.bf16.mxu0 %v504
    %1897 = vmatpush1.bf16.msra.mxu0 %v503
    %1898 = vmatprep.subr.bf16.mxu0 %v508
    %1899 = vmatpush1.bf16.msra.mxu0 %v507
    %1900 = vmatprep.subr.bf16.mxu0 %v512
    %1901 = vmatpush1.bf16.msra.mxu0 %v511
    %1902 = vmatprep.subr.bf16.mxu0 %v516
    %1903 = vmatpush1.bf16.msra.mxu0 %v515
    %1904 = vmatprep.subr.bf16.mxu0 %v520
    %1905 = vmatpush1.bf16.msra.mxu0 %v519
    %1906 = vmatprep.subr.bf16.mxu0 %v524
    %1907 = vmatpush1.bf16.msra.mxu0 %v523
    %1908 = vmatprep.subr.bf16.mxu0 %v528
    %1909 = vmatpush1.bf16.msra.mxu0 %v527
    %1910 = vmatprep.subr.bf16.mxu0 %v532
    %1911 = vmatpush1.bf16.msra.mxu0 %v531
    %1912 = vmatprep.subr.bf16.mxu0 0
    %1913 = vmatpush1.bf16.msra.mxu0 0
    %1914 = vmatprep.subr.bf16.mxu0 0
    %1915 = vmatpush1.bf16.msra.mxu0 0
    %1916 = vmatprep.subr.bf16.mxu0 0
    %1917 = vmatpush1.bf16.msra.mxu0 0
    %1918 = vmatprep.subr.bf16.mxu0 0
    %1919 = vmatpush1.bf16.msra.mxu0 0
    %1920 = vmatprep.subr.bf16.mxu0 0
    %1921 = vmatpush1.bf16.msra.mxu0 0
    %1922 = vmatprep.subr.bf16.mxu0 0
    %1923 = vmatpush1.bf16.msra.mxu0 0
    %1924 = vmatprep.subr.bf16.mxu0 0
    %1925 = vmatpush1.bf16.msra.mxu0 0
    %1926 = vmatprep.subr.bf16.mxu0 0
    %1927 = vmatpush1.bf16.msra.mxu0 0
    %1928 = vmatprep.mubr.bf16.mxu0 0
    %1929 = vmatmul.mubr.bf16.gmra.mrb[0].mxu0 %v1895
    %v1930 = vpop.f32.mrb[0].mxu0
    %v1931 = vadd.f32 %v358, %v1930
    %v1932 = vpop.f32.mrb[0].mxu0
    %v1933 = vadd.f32 %v362, %v1932
    %v1934 = vpop.f32.mrb[0].mxu0
    %v1935 = vpop.f32.mrb[0].mxu0
    %1936 = vdwg.mxu0
    %1937 = vmatprep.subr.bf16.mxu0 %v506
    %1938 = vmatpush1.bf16.msra.mxu0 %v505
    %1939 = vmatprep.subr.bf16.mxu0 %v510
    %1940 = vmatpush1.bf16.msra.mxu0 %v509
    %1941 = vmatprep.subr.bf16.mxu0 %v514
    %1942 = vmatpush1.bf16.msra.mxu0 %v513
    %1943 = vmatprep.subr.bf16.mxu0 %v518
    %1944 = vmatpush1.bf16.msra.mxu0 %v517
    %1945 = vmatprep.subr.bf16.mxu0 %v522
    %1946 = vmatpush1.bf16.msra.mxu0 %v521
    %1947 = vmatprep.subr.bf16.mxu0 %v526
    %1948 = vmatpush1.bf16.msra.mxu0 %v525
    %1949 = vmatprep.subr.bf16.mxu0 %v530
    %1950 = vmatpush1.bf16.msra.mxu0 %v529
    %1951 = vmatprep.subr.bf16.mxu0 %v534
    %1952 = vmatpush1.bf16.msra.mxu0 %v533
    %1953 = vmatprep.subr.bf16.mxu0 0
    %1954 = vmatpush1.bf16.msra.mxu0 0
    %1955 = vmatprep.subr.bf16.mxu0 0
    %1956 = vmatpush1.bf16.msra.mxu0 0
    %1957 = vmatprep.subr.bf16.mxu0 0
    %1958 = vmatpush1.bf16.msra.mxu0 0
    %1959 = vmatprep.subr.bf16.mxu0 0
    %1960 = vmatpush1.bf16.msra.mxu0 0
    %1961 = vmatprep.subr.bf16.mxu0 0
    %1962 = vmatpush1.bf16.msra.mxu0 0
    %1963 = vmatprep.subr.bf16.mxu0 0
    %1964 = vmatpush1.bf16.msra.mxu0 0
    %1965 = vmatprep.subr.bf16.mxu0 0
    %1966 = vmatpush1.bf16.msra.mxu0 0
    %1967 = vmatprep.subr.bf16.mxu0 0
    %1968 = vmatpush1.bf16.msra.mxu0 0
    %1969 = vmatprep.mubr.bf16.mxu0 0
    %1970 = vmatmul.mubr.bf16.gmra.mrb[0].mxu0 %v1895
    %v1971 = vpop.f32.mrb[0].mxu0
    %v1972 = vadd.f32 %v366, %v1971
    %v1973 = vpop.f32.mrb[0].mxu0
    %v1974 = vadd.f32 %v370, %v1973
    %v1975 = vpop.f32.mrb[0].mxu0
    %v1976 = vpop.f32.mrb[0].mxu0
    %1977 = vdwg.mxu0
    %1978 = vmatprep.subr.bf16.mxu0 %v778
    %1979 = vmatpush1.bf16.msra.mxu0 %v777
    %1980 = vmatprep.subr.bf16.mxu0 %v782
    %1981 = vmatpush1.bf16.msra.mxu0 %v781
    %1982 = vmatprep.subr.bf16.mxu0 %v786
    %1983 = vmatpush1.bf16.msra.mxu0 %v785
    %1984 = vmatprep.subr.bf16.mxu0 %v790
    %1985 = vmatpush1.bf16.msra.mxu0 %v789
    %1986 = vmatprep.subr.bf16.mxu0 %v794
    %1987 = vmatpush1.bf16.msra.mxu0 %v793
    %1988 = vmatprep.subr.bf16.mxu0 %v798
    %1989 = vmatpush1.bf16.msra.mxu0 %v797
    %1990 = vmatprep.subr.bf16.mxu0 %v802
    %1991 = vmatpush1.bf16.msra.mxu0 %v801
    %1992 = vmatprep.subr.bf16.mxu0 %v806
    %1993 = vmatpush1.bf16.msra.mxu0 %v805
    %1994 = vmatprep.subr.bf16.mxu0 0
    %1995 = vmatpush1.bf16.msra.mxu0 0
    %1996 = vmatprep.subr.bf16.mxu0 0
    %1997 = vmatpush1.bf16.msra.mxu0 0
    %1998 = vmatprep.subr.bf16.mxu0 0
    %1999 = vmatpush1.bf16.msra.mxu0 0
    %2000 = vmatprep.subr.bf16.mxu0 0
    %2001 = vmatpush1.bf16.msra.mxu0 0
    %2002 = vmatprep.subr.bf16.mxu0 0
    %2003 = vmatpush1.bf16.msra.mxu0 0
    %2004 = vmatprep.subr.bf16.mxu0 0
    %2005 = vmatpush1.bf16.msra.mxu0 0
    %2006 = vmatprep.subr.bf16.mxu0 0
    %2007 = vmatpush1.bf16.msra.mxu0 0
    %2008 = vmatprep.subr.bf16.mxu0 0
    %2009 = vmatpush1.bf16.msra.mxu0 0
    %2010 = vmatprep.mubr.bf16.mxu0 0
    %2011 = vmatmul.mubr.bf16.gmra.mrb[0].mxu0 %v1788
    %v2012 = vpop.f32.mrb[0].mxu0
    %v2013 = vadd.f32 0.0, %v2012
    %v2014 = vpop.f32.mrb[0].mxu0
    %v2015 = vadd.f32 0.0, %v2014
    %v2016 = vpop.f32.mrb[0].mxu0
    %v2017 = vpop.f32.mrb[0].mxu0
    %2018 = vdwg.mxu0
    %2019 = vmatprep.subr.bf16.mxu0 %v780
    %2020 = vmatpush1.bf16.msra.mxu0 %v779
    %2021 = vmatprep.subr.bf16.mxu0 %v784
    %2022 = vmatpush1.bf16.msra.mxu0 %v783
    %2023 = vmatprep.subr.bf16.mxu0 %v788
    %2024 = vmatpush1.bf16.msra.mxu0 %v787
    %2025 = vmatprep.subr.bf16.mxu0 %v792
    %2026 = vmatpush1.bf16.msra.mxu0 %v791
    %2027 = vmatprep.subr.bf16.mxu0 %v796
    %2028 = vmatpush1.bf16.msra.mxu0 %v795
    %2029 = vmatprep.subr.bf16.mxu0 %v800
    %2030 = vmatpush1.bf16.msra.mxu0 %v799
    %2031 = vmatprep.subr.bf16.mxu0 %v804
    %2032 = vmatpush1.bf16.msra.mxu0 %v803
    %2033 = vmatprep.subr.bf16.mxu0 %v808
    %2034 = vmatpush1.bf16.msra.mxu0 %v807
    %2035 = vmatprep.subr.bf16.mxu0 0
    %2036 = vmatpush1.bf16.msra.mxu0 0
    %2037 = vmatprep.subr.bf16.mxu0 0
    %2038 = vmatpush1.bf16.msra.mxu0 0
    %2039 = vmatprep.subr.bf16.mxu0 0
    %2040 = vmatpush1.bf16.msra.mxu0 0
    %2041 = vmatprep.subr.bf16.mxu0 0
    %2042 = vmatpush1.bf16.msra.mxu0 0
    %2043 = vmatprep.subr.bf16.mxu0 0
    %2044 = vmatpush1.bf16.msra.mxu0 0
    %2045 = vmatprep.subr.bf16.mxu0 0
    %2046 = vmatpush1.bf16.msra.mxu0 0
    %2047 = vmatprep.subr.bf16.mxu0 0
    %2048 = vmatpush1.bf16.msra.mxu0 0
    %2049 = vmatprep.subr.bf16.mxu0 0
    %2050 = vmatpush1.bf16.msra.mxu0 0
    %2051 = vmatprep.mubr.bf16.mxu0 0
    %2052 = vmatmul.mubr.bf16.gmra.mrb[0].mxu0 %v1788
    %v2053 = vpop.f32.mrb[0].mxu0
    %v2054 = vadd.f32 0.0, %v2053
    %v2055 = vpop.f32.mrb[0].mxu0
    %v2056 = vadd.f32 0.0, %v2055
    %v2057 = vpop.f32.mrb[0].mxu0
    %v2058 = vpop.f32.mrb[0].mxu0
    %2059 = vdwg.mxu0
    %v2064 = vcombine.low %v2013, %v2015
    %v2065 = vcombine.low %v2054, %v2056
    %v2067 = vunpack.c.l.s4 1983009808
    %v2068 = vunpack.c.0.s8 %v2067
    %v2069 = vlaneseq
    %v2070 = vshrl.u32 %v2069, 7
    %v2071 = vsub.s32 %v2068, %v2070
    %v2072 = vrot.slane %v2064, %v2071
    %v2074 = vunpack.c.l.s4 1983009808
    %v2075 = vunpack.c.0.s8 %v2074
    %v2076 = vlaneseq
    %v2077 = vshrl.u32 %v2076, 7
    %v2078 = vsub.s32 %v2075, %v2077
    %v2079 = vrot.slane %v2065, %v2078
    %v2080 = vcombine.low %v2072, %v2079
    %v2082 = vadd.f32 %v308, %v2080
    %v2083 = vxor.u32 %v2082, 2147483648
    %v2084 = vmul.f32 %v2083, 1.442695
    %v2085 = vpow.pop %v2084
    %v2086 = vadd.f32 %v2085, 1.0
    %v2087 = vrcp.pop %v2086
    %v2088 = vmul.f32 1.0, %v2087
    %v2090 = vrot.slane %v2082, 6
    %v2092 = vtanh.pop %v2090
    %v2094 = vrot.slane %v2088, 2
    %v2096 = vmul.f32 %v2094, %v1783
    %v2097 = vmul.f32 %v2088, %v2092
    %v2098 = vadd.f32 %v2096, %v2097
    %v2099 = vtanh.pop %v2098
    %v2100 = vrot.slane %v2088, 4
    %v2102 = vmul.f32 %v2100, %v2099
    %v2103 = vpack.c.bf16 %v2102, %v2102
    %2104 = vmatprep.subr.bf16.mxu0 %v1096
    %2105 = vmatpush1.bf16.msra.mxu0 %v1095
    %2106 = vmatprep.subr.bf16.mxu0 %v1100
    %2107 = vmatpush1.bf16.msra.mxu0 %v1099
    %2108 = vmatprep.subr.bf16.mxu0 %v1104
    %2109 = vmatpush1.bf16.msra.mxu0 %v1103
    %2110 = vmatprep.subr.bf16.mxu0 %v1108
    %2111 = vmatpush1.bf16.msra.mxu0 %v1107
    %2112 = vmatprep.subr.bf16.mxu0 %v1112
    %2113 = vmatpush1.bf16.msra.mxu0 %v1111
    %2114 = vmatprep.subr.bf16.mxu0 %v1116
    %2115 = vmatpush1.bf16.msra.mxu0 %v1115
    %2116 = vmatprep.subr.bf16.mxu0 %v1120
    %2117 = vmatpush1.bf16.msra.mxu0 %v1119
    %2118 = vmatprep.subr.bf16.mxu0 %v1124
    %2119 = vmatpush1.bf16.msra.mxu0 %v1123
    %2120 = vmatprep.subr.bf16.mxu0 0
    %2121 = vmatpush1.bf16.msra.mxu0 0
    %2122 = vmatprep.subr.bf16.mxu0 0
    %2123 = vmatpush1.bf16.msra.mxu0 0
    %2124 = vmatprep.subr.bf16.mxu0 0
    %2125 = vmatpush1.bf16.msra.mxu0 0
    %2126 = vmatprep.subr.bf16.mxu0 0
    %2127 = vmatpush1.bf16.msra.mxu0 0
    %2128 = vmatprep.subr.bf16.mxu0 0
    %2129 = vmatpush1.bf16.msra.mxu0 0
    %2130 = vmatprep.subr.bf16.mxu0 0
    %2131 = vmatpush1.bf16.msra.mxu0 0
    %2132 = vmatprep.subr.bf16.mxu0 0
    %2133 = vmatpush1.bf16.msra.mxu0 0
    %2134 = vmatprep.subr.bf16.mxu0 0
    %2135 = vmatpush1.bf16.msra.mxu0 0
    %2136 = vmatprep.mubr.bf16.mxu0 0
    %2137 = vmatmul.mubr.bf16.gmra.mrb[0].mxu0 %v2103
    %v2138 = vpop.f32.mrb[0].mxu0
    %v2139 = vadd.f32 %v1931, %v2138
    %v2140 = vpop.f32.mrb[0].mxu0
    %v2141 = vadd.f32 %v1933, %v2140
    %v2142 = vpop.f32.mrb[0].mxu0
    %v2143 = vpop.f32.mrb[0].mxu0
    %2144 = vdwg.mxu0
    %2145 = vmatprep.subr.bf16.mxu0 %v1098
    %2146 = vmatpush1.bf16.msra.mxu0 %v1097
    %2147 = vmatprep.subr.bf16.mxu0 %v1102
    %2148 = vmatpush1.bf16.msra.mxu0 %v1101
    %2149 = vmatprep.subr.bf16.mxu0 %v1106
    %2150 = vmatpush1.bf16.msra.mxu0 %v1105
    %2151 = vmatprep.subr.bf16.mxu0 %v1110
    %2152 = vmatpush1.bf16.msra.mxu0 %v1109
    %2153 = vmatprep.subr.bf16.mxu0 %v1114
    %2154 = vmatpush1.bf16.msra.mxu0 %v1113
    %2155 = vmatprep.subr.bf16.mxu0 %v1118
    %2156 = vmatpush1.bf16.msra.mxu0 %v1117
    %2157 = vmatprep.subr.bf16.mxu0 %v1122
    %2158 = vmatpush1.bf16.msra.mxu0 %v1121
    %2159 = vmatprep.subr.bf16.mxu0 %v1126
    %2160 = vmatpush1.bf16.msra.mxu0 %v1125
    %2161 = vmatprep.subr.bf16.mxu0 0
    %2162 = vmatpush1.bf16.msra.mxu0 0
    %2163 = vmatprep.subr.bf16.mxu0 0
    %2164 = vmatpush1.bf16.msra.mxu0 0
    %2165 = vmatprep.subr.bf16.mxu0 0
    %2166 = vmatpush1.bf16.msra.mxu0 0
    %2167 = vmatprep.subr.bf16.mxu0 0
    %2168 = vmatpush1.bf16.msra.mxu0 0
    %2169 = vmatprep.subr.bf16.mxu0 0
    %2170 = vmatpush1.bf16.msra.mxu0 0
    %2171 = vmatprep.subr.bf16.mxu0 0
    %2172 = vmatpush1.bf16.msra.mxu0 0
    %2173 = vmatprep.subr.bf16.mxu0 0
    %2174 = vmatpush1.bf16.msra.mxu0 0
    %2175 = vmatprep.subr.bf16.mxu0 0
    %2176 = vmatpush1.bf16.msra.mxu0 0
    %2177 = vmatprep.mubr.bf16.mxu0 0
    %2178 = vmatmul.mubr.bf16.gmra.mrb[0].mxu0 %v2103
    %v2179 = vpop.f32.mrb[0].mxu0
    %v2180 = vadd.f32 %v1972, %v2179
    %v2181 = vpop.f32.mrb[0].mxu0
    %v2182 = vadd.f32 %v1974, %v2181
    %v2183 = vpop.f32.mrb[0].mxu0
    %v2184 = vpop.f32.mrb[0].mxu0
    %2185 = vdwg.mxu0
    %v2186 = vxor.u32 %v2139, 2147483648
    %v2187 = vxor.u32 %v2141, 2147483648
    %v2188 = vxor.u32 %v2180, 2147483648
    %v2189 = vmul.f32 %v2186, 1.442695
    %v2190 = vpow.pop %v2189
    %v2191 = vmul.f32 %v2187, 1.442695
    %v2192 = vpow.pop %v2191
    %v2193 = vmul.f32 %v2188, 1.442695
    %v2194 = vpow.pop %v2193
    %v2195 = vadd.f32 %v2190, 1.0
    %v2196 = vadd.f32 %v2192, 1.0
    %v2197 = vadd.f32 %v2194, 1.0
    %v2198 = vrcp.pop %v2195
    %v2199 = vmul.f32 1.0, %v2198
    %v2200 = vrcp.pop %v2196
    %v2201 = vmul.f32 1.0, %v2200
    %v2202 = vrcp.pop %v2197
    %v2203 = vmul.f32 1.0, %v2202
    %v2204 = vtanh.pop %v2182
    %v2205 = vmul.f32 %v2201, %v1892
    %v2206 = vmul.f32 %v2199, %v2204
    %v2207 = vadd.f32 %v2205, %v2206
    %v2208 = vtanh.pop %v2207
    %v2209 = vmul.f32 %v2203, %v2208
    %v2210 = vpack.c.bf16 %v2209, %v2209
    %2211 = vmatprep.subr.bf16.mxu0 %v504
    %2212 = vmatpush1.bf16.msra.mxu0 %v503
    %2213 = vmatprep.subr.bf16.mxu0 %v508
    %2214 = vmatpush1.bf16.msra.mxu0 %v507
    %2215 = vmatprep.subr.bf16.mxu0 %v512
    %2216 = vmatpush1.bf16.msra.mxu0 %v511
    %2217 = vmatprep.subr.bf16.mxu0 %v516
    %2218 = vmatpush1.bf16.msra.mxu0 %v515
    %2219 = vmatprep.subr.bf16.mxu0 %v520
    %2220 = vmatpush1.bf16.msra.mxu0 %v519
    %2221 = vmatprep.subr.bf16.mxu0 %v524
    %2222 = vmatpush1.bf16.msra.mxu0 %v523
    %2223 = vmatprep.subr.bf16.mxu0 %v528
    %2224 = vmatpush1.bf16.msra.mxu0 %v527
    %2225 = vmatprep.subr.bf16.mxu0 %v532
    %2226 = vmatpush1.bf16.msra.mxu0 %v531
    %2227 = vmatprep.subr.bf16.mxu0 0
    %2228 = vmatpush1.bf16.msra.mxu0 0
    %2229 = vmatprep.subr.bf16.mxu0 0
    %2230 = vmatpush1.bf16.msra.mxu0 0
    %2231 = vmatprep.subr.bf16.mxu0 0
    %2232 = vmatpush1.bf16.msra.mxu0 0
    %2233 = vmatprep.subr.bf16.mxu0 0
    %2234 = vmatpush1.bf16.msra.mxu0 0
    %2235 = vmatprep.subr.bf16.mxu0 0
    %2236 = vmatpush1.bf16.msra.mxu0 0
    %2237 = vmatprep.subr.bf16.mxu0 0
    %2238 = vmatpush1.bf16.msra.mxu0 0
    %2239 = vmatprep.subr.bf16.mxu0 0
    %2240 = vmatpush1.bf16.msra.mxu0 0
    %2241 = vmatprep.subr.bf16.mxu0 0
    %2242 = vmatpush1.bf16.msra.mxu0 0
    %2243 = vmatprep.mubr.bf16.mxu0 0
    %2244 = vmatmul.mubr.bf16.gmra.mrb[0].mxu0 %v2210
    %v2245 = vpop.f32.mrb[0].mxu0
    %v2246 = vadd.f32 %v358, %v2245
    %v2247 = vpop.f32.mrb[0].mxu0
    %v2248 = vadd.f32 %v362, %v2247
    %v2249 = vpop.f32.mrb[0].mxu0
    %v2250 = vpop.f32.mrb[0].mxu0
    %2251 = vdwg.mxu0
    %2252 = vmatprep.subr.bf16.mxu0 %v506
    %2253 = vmatpush1.bf16.msra.mxu0 %v505
    %2254 = vmatprep.subr.bf16.mxu0 %v510
    %2255 = vmatpush1.bf16.msra.mxu0 %v509
    %2256 = vmatprep.subr.bf16.mxu0 %v514
    %2257 = vmatpush1.bf16.msra.mxu0 %v513
    %2258 = vmatprep.subr.bf16.mxu0 %v518
    %2259 = vmatpush1.bf16.msra.mxu0 %v517
    %2260 = vmatprep.subr.bf16.mxu0 %v522
    %2261 = vmatpush1.bf16.msra.mxu0 %v521
    %2262 = vmatprep.subr.bf16.mxu0 %v526
    %2263 = vmatpush1.bf16.msra.mxu0 %v525
    %2264 = vmatprep.subr.bf16.mxu0 %v530
    %2265 = vmatpush1.bf16.msra.mxu0 %v529
    %2266 = vmatprep.subr.bf16.mxu0 %v534
    %2267 = vmatpush1.bf16.msra.mxu0 %v533
    %2268 = vmatprep.subr.bf16.mxu0 0
    %2269 = vmatpush1.bf16.msra.mxu0 0
    %2270 = vmatprep.subr.bf16.mxu0 0
    %2271 = vmatpush1.bf16.msra.mxu0 0
    %2272 = vmatprep.subr.bf16.mxu0 0
    %2273 = vmatpush1.bf16.msra.mxu0 0
    %2274 = vmatprep.subr.bf16.mxu0 0
    %2275 = vmatpush1.bf16.msra.mxu0 0
    %2276 = vmatprep.subr.bf16.mxu0 0
    %2277 = vmatpush1.bf16.msra.mxu0 0
    %2278 = vmatprep.subr.bf16.mxu0 0
    %2279 = vmatpush1.bf16.msra.mxu0 0
    %2280 = vmatprep.subr.bf16.mxu0 0
    %2281 = vmatpush1.bf16.msra.mxu0 0
    %2282 = vmatprep.subr.bf16.mxu0 0
    %2283 = vmatpush1.bf16.msra.mxu0 0
    %2284 = vmatprep.mubr.bf16.mxu0 0
    %2285 = vmatmul.mubr.bf16.gmra.mrb[0].mxu0 %v2210
    %v2286 = vpop.f32.mrb[0].mxu0
    %v2287 = vadd.f32 %v366, %v2286
    %v2288 = vpop.f32.mrb[0].mxu0
    %v2289 = vadd.f32 %v370, %v2288
    %v2290 = vpop.f32.mrb[0].mxu0
    %v2291 = vpop.f32.mrb[0].mxu0
    %2292 = vdwg.mxu0
    %2293 = vmatprep.subr.bf16.mxu0 %v778
    %2294 = vmatpush1.bf16.msra.mxu0 %v777
    %2295 = vmatprep.subr.bf16.mxu0 %v782
    %2296 = vmatpush1.bf16.msra.mxu0 %v781
    %2297 = vmatprep.subr.bf16.mxu0 %v786
    %2298 = vmatpush1.bf16.msra.mxu0 %v785
    %2299 = vmatprep.subr.bf16.mxu0 %v790
    %2300 = vmatpush1.bf16.msra.mxu0 %v789
    %2301 = vmatprep.subr.bf16.mxu0 %v794
    %2302 = vmatpush1.bf16.msra.mxu0 %v793
    %2303 = vmatprep.subr.bf16.mxu0 %v798
    %2304 = vmatpush1.bf16.msra.mxu0 %v797
    %2305 = vmatprep.subr.bf16.mxu0 %v802
    %2306 = vmatpush1.bf16.msra.mxu0 %v801
    %2307 = vmatprep.subr.bf16.mxu0 %v806
    %2308 = vmatpush1.bf16.msra.mxu0 %v805
    %2309 = vmatprep.subr.bf16.mxu0 0
    %2310 = vmatpush1.bf16.msra.mxu0 0
    %2311 = vmatprep.subr.bf16.mxu0 0
    %2312 = vmatpush1.bf16.msra.mxu0 0
    %2313 = vmatprep.subr.bf16.mxu0 0
    %2314 = vmatpush1.bf16.msra.mxu0 0
    %2315 = vmatprep.subr.bf16.mxu0 0
    %2316 = vmatpush1.bf16.msra.mxu0 0
    %2317 = vmatprep.subr.bf16.mxu0 0
    %2318 = vmatpush1.bf16.msra.mxu0 0
    %2319 = vmatprep.subr.bf16.mxu0 0
    %2320 = vmatpush1.bf16.msra.mxu0 0
    %2321 = vmatprep.subr.bf16.mxu0 0
    %2322 = vmatpush1.bf16.msra.mxu0 0
    %2323 = vmatprep.subr.bf16.mxu0 0
    %2324 = vmatpush1.bf16.msra.mxu0 0
    %2325 = vmatprep.mubr.bf16.mxu0 0
    %2326 = vmatmul.mubr.bf16.gmra.mrb[0].mxu0 %v2103
    %v2327 = vpop.f32.mrb[0].mxu0
    %v2328 = vadd.f32 0.0, %v2327
    %v2329 = vpop.f32.mrb[0].mxu0
    %v2330 = vadd.f32 0.0, %v2329
    %v2331 = vpop.f32.mrb[0].mxu0
    %v2332 = vpop.f32.mrb[0].mxu0
    %2333 = vdwg.mxu0
    %2334 = vmatprep.subr.bf16.mxu0 %v780
    %2335 = vmatpush1.bf16.msra.mxu0 %v779
    %2336 = vmatprep.subr.bf16.mxu0 %v784
    %2337 = vmatpush1.bf16.msra.mxu0 %v783
    %2338 = vmatprep.subr.bf16.mxu0 %v788
    %2339 = vmatpush1.bf16.msra.mxu0 %v787
    %2340 = vmatprep.subr.bf16.mxu0 %v792
    %2341 = vmatpush1.bf16.msra.mxu0 %v791
    %2342 = vmatprep.subr.bf16.mxu0 %v796
    %2343 = vmatpush1.bf16.msra.mxu0 %v795
    %2344 = vmatprep.subr.bf16.mxu0 %v800
    %2345 = vmatpush1.bf16.msra.mxu0 %v799
    %2346 = vmatprep.subr.bf16.mxu0 %v804
    %2347 = vmatpush1.bf16.msra.mxu0 %v803
    %2348 = vmatprep.subr.bf16.mxu0 %v808
    %2349 = vmatpush1.bf16.msra.mxu0 %v807
    %2350 = vmatprep.subr.bf16.mxu0 0
    %2351 = vmatpush1.bf16.msra.mxu0 0
    %2352 = vmatprep.subr.bf16.mxu0 0
    %2353 = vmatpush1.bf16.msra.mxu0 0
    %2354 = vmatprep.subr.bf16.mxu0 0
    %2355 = vmatpush1.bf16.msra.mxu0 0
    %2356 = vmatprep.subr.bf16.mxu0 0
    %2357 = vmatpush1.bf16.msra.mxu0 0
    %2358 = vmatprep.subr.bf16.mxu0 0
    %2359 = vmatpush1.bf16.msra.mxu0 0
    %2360 = vmatprep.subr.bf16.mxu0 0
    %2361 = vmatpush1.bf16.msra.mxu0 0
    %2362 = vmatprep.subr.bf16.mxu0 0
    %2363 = vmatpush1.bf16.msra.mxu0 0
    %2364 = vmatprep.subr.bf16.mxu0 0
    %2365 = vmatpush1.bf16.msra.mxu0 0
    %2366 = vmatprep.mubr.bf16.mxu0 0
    %2367 = vmatmul.mubr.bf16.gmra.mrb[0].mxu0 %v2103
    %v2368 = vpop.f32.mrb[0].mxu0
    %v2369 = vadd.f32 0.0, %v2368
    %v2370 = vpop.f32.mrb[0].mxu0
    %v2371 = vadd.f32 0.0, %v2370
    %v2372 = vpop.f32.mrb[0].mxu0
    %v2373 = vpop.f32.mrb[0].mxu0
    %2374 = vdwg.mxu0
    %v2379 = vcombine.low %v2328, %v2330
    %v2380 = vcombine.low %v2369, %v2371
    %v2382 = vunpack.c.l.s4 1983009808
    %v2383 = vunpack.c.0.s8 %v2382
    %v2384 = vlaneseq
    %v2385 = vshrl.u32 %v2384, 7
    %v2386 = vsub.s32 %v2383, %v2385
    %v2387 = vrot.slane %v2379, %v2386
    %v2389 = vunpack.c.l.s4 1983009808
    %v2390 = vunpack.c.0.s8 %v2389
    %v2391 = vlaneseq
    %v2392 = vshrl.u32 %v2391, 7
    %v2393 = vsub.s32 %v2390, %v2392
    %v2394 = vrot.slane %v2380, %v2393
    %v2395 = vcombine.low %v2387, %v2394
    %v2397 = vadd.f32 %v341, %v2395
    %v2398 = vxor.u32 %v2397, 2147483648
    %v2399 = vmul.f32 %v2398, 1.442695
    %v2400 = vpow.pop %v2399
    %v2401 = vadd.f32 %v2400, 1.0
    %v2402 = vrcp.pop %v2401
    %v2403 = vmul.f32 1.0, %v2402
    %v2405 = vrot.slane %v2397, 6
    %v2407 = vtanh.pop %v2405
    %v2409 = vrot.slane %v2403, 2
    %v2411 = vmul.f32 %v2409, %v2098
    %v2412 = vmul.f32 %v2403, %v2407
    %v2413 = vadd.f32 %v2411, %v2412
    %v2414 = vtanh.pop %v2413
    %v2415 = vrot.slane %v2403, 4
    %v2417 = vmul.f32 %v2415, %v2414
    %v2418 = vpack.c.bf16 %v2417, %v2417
    %2419 = vmatprep.subr.bf16.mxu0 %v1096
    %2420 = vmatpush1.bf16.msra.mxu0 %v1095
    %2421 = vmatprep.subr.bf16.mxu0 %v1100
    %2422 = vmatpush1.bf16.msra.mxu0 %v1099
    %2423 = vmatprep.subr.bf16.mxu0 %v1104
    %2424 = vmatpush1.bf16.msra.mxu0 %v1103
    %2425 = vmatprep.subr.bf16.mxu0 %v1108
    %2426 = vmatpush1.bf16.msra.mxu0 %v1107
    %2427 = vmatprep.subr.bf16.mxu0 %v1112
    %2428 = vmatpush1.bf16.msra.mxu0 %v1111
    %2429 = vmatprep.subr.bf16.mxu0 %v1116
    %2430 = vmatpush1.bf16.msra.mxu0 %v1115
    %2431 = vmatprep.subr.bf16.mxu0 %v1120
    %2432 = vmatpush1.bf16.msra.mxu0 %v1119
    %2433 = vmatprep.subr.bf16.mxu0 %v1124
    %2434 = vmatpush1.bf16.msra.mxu0 %v1123
    %2435 = vmatprep.subr.bf16.mxu0 0
    %2436 = vmatpush1.bf16.msra.mxu0 0
    %2437 = vmatprep.subr.bf16.mxu0 0
    %2438 = vmatpush1.bf16.msra.mxu0 0
    %2439 = vmatprep.subr.bf16.mxu0 0
    %2440 = vmatpush1.bf16.msra.mxu0 0
    %2441 = vmatprep.subr.bf16.mxu0 0
    %2442 = vmatpush1.bf16.msra.mxu0 0
    %2443 = vmatprep.subr.bf16.mxu0 0
    %2444 = vmatpush1.bf16.msra.mxu0 0
    %2445 = vmatprep.subr.bf16.mxu0 0
    %2446 = vmatpush1.bf16.msra.mxu0 0
    %2447 = vmatprep.subr.bf16.mxu0 0
    %2448 = vmatpush1.bf16.msra.mxu0 0
    %2449 = vmatprep.subr.bf16.mxu0 0
    %2450 = vmatpush1.bf16.msra.mxu0 0
    %2451 = vmatprep.mubr.bf16.mxu0 0
    %2452 = vmatmul.mubr.bf16.gmra.mrb[0].mxu0 %v2418
    %v2453 = vpop.f32.mrb[0].mxu0
    %v2454 = vadd.f32 %v2246, %v2453
    %v2455 = vpop.f32.mrb[0].mxu0
    %v2456 = vadd.f32 %v2248, %v2455
    %v2457 = vpop.f32.mrb[0].mxu0
    %v2458 = vpop.f32.mrb[0].mxu0
    %2459 = vdwg.mxu0
    %2460 = vmatprep.subr.bf16.mxu0 %v1098
    %2461 = vmatpush1.bf16.msra.mxu0 %v1097
    %2462 = vmatprep.subr.bf16.mxu0 %v1102
    %2463 = vmatpush1.bf16.msra.mxu0 %v1101
    %2464 = vmatprep.subr.bf16.mxu0 %v1106
    %2465 = vmatpush1.bf16.msra.mxu0 %v1105
    %2466 = vmatprep.subr.bf16.mxu0 %v1110
    %2467 = vmatpush1.bf16.msra.mxu0 %v1109
    %2468 = vmatprep.subr.bf16.mxu0 %v1114
    %2469 = vmatpush1.bf16.msra.mxu0 %v1113
    %2470 = vmatprep.subr.bf16.mxu0 %v1118
    %2471 = vmatpush1.bf16.msra.mxu0 %v1117
    %2472 = vmatprep.subr.bf16.mxu0 %v1122
    %2473 = vmatpush1.bf16.msra.mxu0 %v1121
    %2474 = vmatprep.subr.bf16.mxu0 %v1126
    %2475 = vmatpush1.bf16.msra.mxu0 %v1125
    %2476 = vmatprep.subr.bf16.mxu0 0
    %2477 = vmatpush1.bf16.msra.mxu0 0
    %2478 = vmatprep.subr.bf16.mxu0 0
    %2479 = vmatpush1.bf16.msra.mxu0 0
    %2480 = vmatprep.subr.bf16.mxu0 0
    %2481 = vmatpush1.bf16.msra.mxu0 0
    %2482 = vmatprep.subr.bf16.mxu0 0
    %2483 = vmatpush1.bf16.msra.mxu0 0
    %2484 = vmatprep.subr.bf16.mxu0 0
    %2485 = vmatpush1.bf16.msra.mxu0 0
    %2486 = vmatprep.subr.bf16.mxu0 0
    %2487 = vmatpush1.bf16.msra.mxu0 0
    %2488 = vmatprep.subr.bf16.mxu0 0
    %2489 = vmatpush1.bf16.msra.mxu0 0
    %2490 = vmatprep.subr.bf16.mxu0 0
    %2491 = vmatpush1.bf16.msra.mxu0 0
    %2492 = vmatprep.mubr.bf16.mxu0 0
    %2493 = vmatmul.mubr.bf16.gmra.mrb[0].mxu0 %v2418
    %v2494 = vpop.f32.mrb[0].mxu0
    %v2495 = vadd.f32 %v2287, %v2494
    %v2496 = vpop.f32.mrb[0].mxu0
    %v2497 = vadd.f32 %v2289, %v2496
    %v2498 = vpop.f32.mrb[0].mxu0
    %v2499 = vpop.f32.mrb[0].mxu0
    %2500 = vdwg.mxu0
    %v2501 = vxor.u32 %v2454, 2147483648
    %v2502 = vxor.u32 %v2456, 2147483648
    %v2503 = vxor.u32 %v2495, 2147483648
    %v2504 = vmul.f32 %v2501, 1.442695
    %v2505 = vpow.pop %v2504
    %v2506 = vmul.f32 %v2502, 1.442695
    %v2507 = vpow.pop %v2506
    %v2508 = vmul.f32 %v2503, 1.442695
    %v2509 = vpow.pop %v2508
    %v2510 = vadd.f32 %v2505, 1.0
    %v2511 = vadd.f32 %v2507, 1.0
    %v2512 = vadd.f32 %v2509, 1.0
    %v2513 = vrcp.pop %v2510
    %v2514 = vmul.f32 1.0, %v2513
    %v2515 = vrcp.pop %v2511
    %v2516 = vmul.f32 1.0, %v2515
    %v2517 = vrcp.pop %v2512
    %v2518 = vmul.f32 1.0, %v2517
    %v2519 = vtanh.pop %v2497
    %v2520 = vmul.f32 %v2516, %v2207
    %v2521 = vmul.f32 %v2514, %v2519
    %v2522 = vadd.f32 %v2520, %v2521
    %v2523 = vtanh.pop %v2522
    %v2524 = vmul.f32 %v2518, %v2523
    %v2525 = vpack.c.bf16 %v2524, %v2524
    %2526 = vmatprep.subr.bf16.mxu0 %v504
    %2527 = vmatpush1.bf16.msra.mxu0 %v503
    %2528 = vmatprep.subr.bf16.mxu0 %v508
    %2529 = vmatpush1.bf16.msra.mxu0 %v507
    %2530 = vmatprep.subr.bf16.mxu0 %v512
    %2531 = vmatpush1.bf16.msra.mxu0 %v511
    %2532 = vmatprep.subr.bf16.mxu0 %v516
    %2533 = vmatpush1.bf16.msra.mxu0 %v515
    %2534 = vmatprep.subr.bf16.mxu0 %v520
    %2535 = vmatpush1.bf16.msra.mxu0 %v519
    %2536 = vmatprep.subr.bf16.mxu0 %v524
    %2537 = vmatpush1.bf16.msra.mxu0 %v523
    %2538 = vmatprep.subr.bf16.mxu0 %v528
    %2539 = vmatpush1.bf16.msra.mxu0 %v527
    %2540 = vmatprep.subr.bf16.mxu0 %v532
    %2541 = vmatpush1.bf16.msra.mxu0 %v531
    %2542 = vmatprep.subr.bf16.mxu0 0
    %2543 = vmatpush1.bf16.msra.mxu0 0
    %2544 = vmatprep.subr.bf16.mxu0 0
    %2545 = vmatpush1.bf16.msra.mxu0 0
    %2546 = vmatprep.subr.bf16.mxu0 0
    %2547 = vmatpush1.bf16.msra.mxu0 0
    %2548 = vmatprep.subr.bf16.mxu0 0
    %2549 = vmatpush1.bf16.msra.mxu0 0
    %2550 = vmatprep.subr.bf16.mxu0 0
    %2551 = vmatpush1.bf16.msra.mxu0 0
    %2552 = vmatprep.subr.bf16.mxu0 0
    %2553 = vmatpush1.bf16.msra.mxu0 0
    %2554 = vmatprep.subr.bf16.mxu0 0
    %2555 = vmatpush1.bf16.msra.mxu0 0
    %2556 = vmatprep.subr.bf16.mxu0 0
    %2557 = vmatpush1.bf16.msra.mxu0 0
    %2558 = vmatprep.mubr.bf16.mxu0 0
    %2559 = vmatmul.mubr.bf16.gmra.mrb[0].mxu0 %v2525
    %v2560 = vpop.f32.mrb[0].mxu0
    %v2561 = vadd.f32 %v358, %v2560
    %v2562 = vpop.f32.mrb[0].mxu0
    %v2563 = vadd.f32 %v362, %v2562
    %v2564 = vpop.f32.mrb[0].mxu0
    %v2565 = vpop.f32.mrb[0].mxu0
    %2566 = vdwg.mxu0
    %2567 = vmatprep.subr.bf16.mxu0 %v506
    %2568 = vmatpush1.bf16.msra.mxu0 %v505
    %2569 = vmatprep.subr.bf16.mxu0 %v510
    %2570 = vmatpush1.bf16.msra.mxu0 %v509
    %2571 = vmatprep.subr.bf16.mxu0 %v514
    %2572 = vmatpush1.bf16.msra.mxu0 %v513
    %2573 = vmatprep.subr.bf16.mxu0 %v518
    %2574 = vmatpush1.bf16.msra.mxu0 %v517
    %2575 = vmatprep.subr.bf16.mxu0 %v522
    %2576 = vmatpush1.bf16.msra.mxu0 %v521
    %2577 = vmatprep.subr.bf16.mxu0 %v526
    %2578 = vmatpush1.bf16.msra.mxu0 %v525
    %2579 = vmatprep.subr.bf16.mxu0 %v530
    %2580 = vmatpush1.bf16.msra.mxu0 %v529
    %2581 = vmatprep.subr.bf16.mxu0 %v534
    %2582 = vmatpush1.bf16.msra.mxu0 %v533
    %2583 = vmatprep.subr.bf16.mxu0 0
    %2584 = vmatpush1.bf16.msra.mxu0 0
    %2585 = vmatprep.subr.bf16.mxu0 0
    %2586 = vmatpush1.bf16.msra.mxu0 0
    %2587 = vmatprep.subr.bf16.mxu0 0
    %2588 = vmatpush1.bf16.msra.mxu0 0
    %2589 = vmatprep.subr.bf16.mxu0 0
    %2590 = vmatpush1.bf16.msra.mxu0 0
    %2591 = vmatprep.subr.bf16.mxu0 0
    %2592 = vmatpush1.bf16.msra.mxu0 0
    %2593 = vmatprep.subr.bf16.mxu0 0
    %2594 = vmatpush1.bf16.msra.mxu0 0
    %2595 = vmatprep.subr.bf16.mxu0 0
    %2596 = vmatpush1.bf16.msra.mxu0 0
    %2597 = vmatprep.subr.bf16.mxu0 0
    %2598 = vmatpush1.bf16.msra.mxu0 0
    %2599 = vmatprep.mubr.bf16.mxu0 0
    %2600 = vmatmul.mubr.bf16.gmra.mrb[0].mxu0 %v2525
    %v2601 = vpop.f32.mrb[0].mxu0
    %v2602 = vadd.f32 %v366, %v2601
    %v2603 = vpop.f32.mrb[0].mxu0
    %v2604 = vadd.f32 %v370, %v2603
    %v2605 = vpop.f32.mrb[0].mxu0
    %v2606 = vpop.f32.mrb[0].mxu0
    %2607 = vdwg.mxu0
    %2608 = vmatprep.subr.bf16.mxu0 %v778
    %2609 = vmatpush1.bf16.msra.mxu0 %v777
    %2610 = vmatprep.subr.bf16.mxu0 %v782
    %2611 = vmatpush1.bf16.msra.mxu0 %v781
    %2612 = vmatprep.subr.bf16.mxu0 %v786
    %2613 = vmatpush1.bf16.msra.mxu0 %v785
    %2614 = vmatprep.subr.bf16.mxu0 %v790
    %2615 = vmatpush1.bf16.msra.mxu0 %v789
    %2616 = vmatprep.subr.bf16.mxu0 %v794
    %2617 = vmatpush1.bf16.msra.mxu0 %v793
    %2618 = vmatprep.subr.bf16.mxu0 %v798
    %2619 = vmatpush1.bf16.msra.mxu0 %v797
    %2620 = vmatprep.subr.bf16.mxu0 %v802
    %2621 = vmatpush1.bf16.msra.mxu0 %v801
    %2622 = vmatprep.subr.bf16.mxu0 %v806
    %2623 = vmatpush1.bf16.msra.mxu0 %v805
    %2624 = vmatprep.subr.bf16.mxu0 0
    %2625 = vmatpush1.bf16.msra.mxu0 0
    %2626 = vmatprep.subr.bf16.mxu0 0
    %2627 = vmatpush1.bf16.msra.mxu0 0
    %2628 = vmatprep.subr.bf16.mxu0 0
    %2629 = vmatpush1.bf16.msra.mxu0 0
    %2630 = vmatprep.subr.bf16.mxu0 0
    %2631 = vmatpush1.bf16.msra.mxu0 0
    %2632 = vmatprep.subr.bf16.mxu0 0
    %2633 = vmatpush1.bf16.msra.mxu0 0
    %2634 = vmatprep.subr.bf16.mxu0 0
    %2635 = vmatpush1.bf16.msra.mxu0 0
    %2636 = vmatprep.subr.bf16.mxu0 0
    %2637 = vmatpush1.bf16.msra.mxu0 0
    %2638 = vmatprep.subr.bf16.mxu0 0
    %2639 = vmatpush1.bf16.msra.mxu0 0
    %2640 = vmatprep.mubr.bf16.mxu0 0
    %2641 = vmatmul.mubr.bf16.gmra.mrb[0].mxu0 %v2418
    %v2642 = vpop.f32.mrb[0].mxu0
    %v2643 = vadd.f32 0.0, %v2642
    %v2644 = vpop.f32.mrb[0].mxu0
    %v2645 = vadd.f32 0.0, %v2644
    %v2646 = vpop.f32.mrb[0].mxu0
    %v2647 = vpop.f32.mrb[0].mxu0
    %2648 = vdwg.mxu0
    %2649 = vmatprep.subr.bf16.mxu0 %v780
    %2650 = vmatpush1.bf16.msra.mxu0 %v779
    %2651 = vmatprep.subr.bf16.mxu0 %v784
    %2652 = vmatpush1.bf16.msra.mxu0 %v783
    %2653 = vmatprep.subr.bf16.mxu0 %v788
    %2654 = vmatpush1.bf16.msra.mxu0 %v787
    %2655 = vmatprep.subr.bf16.mxu0 %v792
    %2656 = vmatpush1.bf16.msra.mxu0 %v791
    %2657 = vmatprep.subr.bf16.mxu0 %v796
    %2658 = vmatpush1.bf16.msra.mxu0 %v795
    %2659 = vmatprep.subr.bf16.mxu0 %v800
    %2660 = vmatpush1.bf16.msra.mxu0 %v799
    %2661 = vmatprep.subr.bf16.mxu0 %v804
    %2662 = vmatpush1.bf16.msra.mxu0 %v803
    %2663 = vmatprep.subr.bf16.mxu0 %v808
    %2664 = vmatpush1.bf16.msra.mxu0 %v807
    %2665 = vmatprep.subr.bf16.mxu0 0
    %2666 = vmatpush1.bf16.msra.mxu0 0
    %2667 = vmatprep.subr.bf16.mxu0 0
    %2668 = vmatpush1.bf16.msra.mxu0 0
    %2669 = vmatprep.subr.bf16.mxu0 0
    %2670 = vmatpush1.bf16.msra.mxu0 0
    %2671 = vmatprep.subr.bf16.mxu0 0
    %2672 = vmatpush1.bf16.msra.mxu0 0
    %2673 = vmatprep.subr.bf16.mxu0 0
    %2674 = vmatpush1.bf16.msra.mxu0 0
    %2675 = vmatprep.subr.bf16.mxu0 0
    %2676 = vmatpush1.bf16.msra.mxu0 0
    %2677 = vmatprep.subr.bf16.mxu0 0
    %2678 = vmatpush1.bf16.msra.mxu0 0
    %2679 = vmatprep.subr.bf16.mxu0 0
    %2680 = vmatpush1.bf16.msra.mxu0 0
    %2681 = vmatprep.mubr.bf16.mxu0 0
    %2682 = vmatmul.mubr.bf16.gmra.mrb[0].mxu0 %v2418
    %v2683 = vpop.f32.mrb[0].mxu0
    %v2684 = vadd.f32 0.0, %v2683
    %v2685 = vpop.f32.mrb[0].mxu0
    %v2686 = vadd.f32 0.0, %v2685
    %v2687 = vpop.f32.mrb[0].mxu0
    %v2688 = vpop.f32.mrb[0].mxu0
    %2689 = vdwg.mxu0
    %v2694 = vcombine.low %v2643, %v2645
    %v2695 = vcombine.low %v2684, %v2686
    %v2697 = vunpack.c.l.s4 1983009808
    %v2698 = vunpack.c.0.s8 %v2697
    %v2699 = vlaneseq
    %v2700 = vshrl.u32 %v2699, 7
    %v2701 = vsub.s32 %v2698, %v2700
    %v2702 = vrot.slane %v2694, %v2701
    %v2704 = vunpack.c.l.s4 1983009808
    %v2705 = vunpack.c.0.s8 %v2704
    %v2706 = vlaneseq
    %v2707 = vshrl.u32 %v2706, 7
    %v2708 = vsub.s32 %v2705, %v2707
    %v2709 = vrot.slane %v2695, %v2708
    %v2710 = vcombine.low %v2702, %v2709
    %v2712 = vadd.f32 %v342, %v2710
    %v2713 = vxor.u32 %v2712, 2147483648
    %v2714 = vmul.f32 %v2713, 1.442695
    %v2715 = vpow.pop %v2714
    %v2716 = vadd.f32 %v2715, 1.0
    %v2717 = vrcp.pop %v2716
    %v2718 = vmul.f32 1.0, %v2717
    %v2720 = vrot.slane %v2712, 6
    %v2722 = vtanh.pop %v2720
    %v2724 = vrot.slane %v2718, 2
    %v2726 = vmul.f32 %v2724, %v2413
    %v2727 = vmul.f32 %v2718, %v2722
    %v2728 = vadd.f32 %v2726, %v2727
    %v2729 = vtanh.pop %v2728
    %v2730 = vrot.slane %v2718, 4
    %v2732 = vmul.f32 %v2730, %v2729
    %v2733 = vpack.c.bf16 %v2732, %v2732
    %2734 = vmatprep.subr.bf16.mxu0 %v1096
    %2735 = vmatpush1.bf16.msra.mxu0 %v1095
    %2736 = vmatprep.subr.bf16.mxu0 %v1100
    %2737 = vmatpush1.bf16.msra.mxu0 %v1099
    %2738 = vmatprep.subr.bf16.mxu0 %v1104
    %2739 = vmatpush1.bf16.msra.mxu0 %v1103
    %2740 = vmatprep.subr.bf16.mxu0 %v1108
    %2741 = vmatpush1.bf16.msra.mxu0 %v1107
    %2742 = vmatprep.subr.bf16.mxu0 %v1112
    %2743 = vmatpush1.bf16.msra.mxu0 %v1111
    %2744 = vmatprep.subr.bf16.mxu0 %v1116
    %2745 = vmatpush1.bf16.msra.mxu0 %v1115
    %2746 = vmatprep.subr.bf16.mxu0 %v1120
    %2747 = vmatpush1.bf16.msra.mxu0 %v1119
    %2748 = vmatprep.subr.bf16.mxu0 %v1124
    %2749 = vmatpush1.bf16.msra.mxu0 %v1123
    %2750 = vmatprep.subr.bf16.mxu0 0
    %2751 = vmatpush1.bf16.msra.mxu0 0
    %2752 = vmatprep.subr.bf16.mxu0 0
    %2753 = vmatpush1.bf16.msra.mxu0 0
    %2754 = vmatprep.subr.bf16.mxu0 0
    %2755 = vmatpush1.bf16.msra.mxu0 0
    %2756 = vmatprep.subr.bf16.mxu0 0
    %2757 = vmatpush1.bf16.msra.mxu0 0
    %2758 = vmatprep.subr.bf16.mxu0 0
    %2759 = vmatpush1.bf16.msra.mxu0 0
    %2760 = vmatprep.subr.bf16.mxu0 0
    %2761 = vmatpush1.bf16.msra.mxu0 0
    %2762 = vmatprep.subr.bf16.mxu0 0
    %2763 = vmatpush1.bf16.msra.mxu0 0
    %2764 = vmatprep.subr.bf16.mxu0 0
    %2765 = vmatpush1.bf16.msra.mxu0 0
    %2766 = vmatprep.mubr.bf16.mxu0 0
    %2767 = vmatmul.mubr.bf16.gmra.mrb[0].mxu0 %v2733
    %v2768 = vpop.f32.mrb[0].mxu0
    %v2769 = vadd.f32 %v2561, %v2768
    %v2770 = vpop.f32.mrb[0].mxu0
    %v2771 = vadd.f32 %v2563, %v2770
    %v2772 = vpop.f32.mrb[0].mxu0
    %v2773 = vpop.f32.mrb[0].mxu0
    %2774 = vdwg.mxu0
    %2775 = vmatprep.subr.bf16.mxu0 %v1098
    %2776 = vmatpush1.bf16.msra.mxu0 %v1097
    %2777 = vmatprep.subr.bf16.mxu0 %v1102
    %2778 = vmatpush1.bf16.msra.mxu0 %v1101
    %2779 = vmatprep.subr.bf16.mxu0 %v1106
    %2780 = vmatpush1.bf16.msra.mxu0 %v1105
    %2781 = vmatprep.subr.bf16.mxu0 %v1110
    %2782 = vmatpush1.bf16.msra.mxu0 %v1109
    %2783 = vmatprep.subr.bf16.mxu0 %v1114
    %2784 = vmatpush1.bf16.msra.mxu0 %v1113
    %2785 = vmatprep.subr.bf16.mxu0 %v1118
    %2786 = vmatpush1.bf16.msra.mxu0 %v1117
    %2787 = vmatprep.subr.bf16.mxu0 %v1122
    %2788 = vmatpush1.bf16.msra.mxu0 %v1121
    %2789 = vmatprep.subr.bf16.mxu0 %v1126
    %2790 = vmatpush1.bf16.msra.mxu0 %v1125
    %2791 = vmatprep.subr.bf16.mxu0 0
    %2792 = vmatpush1.bf16.msra.mxu0 0
    %2793 = vmatprep.subr.bf16.mxu0 0
    %2794 = vmatpush1.bf16.msra.mxu0 0
    %2795 = vmatprep.subr.bf16.mxu0 0
    %2796 = vmatpush1.bf16.msra.mxu0 0
    %2797 = vmatprep.subr.bf16.mxu0 0
    %2798 = vmatpush1.bf16.msra.mxu0 0
    %2799 = vmatprep.subr.bf16.mxu0 0
    %2800 = vmatpush1.bf16.msra.mxu0 0
    %2801 = vmatprep.subr.bf16.mxu0 0
    %2802 = vmatpush1.bf16.msra.mxu0 0
    %2803 = vmatprep.subr.bf16.mxu0 0
    %2804 = vmatpush1.bf16.msra.mxu0 0
    %2805 = vmatprep.subr.bf16.mxu0 0
    %2806 = vmatpush1.bf16.msra.mxu0 0
    %2807 = vmatprep.mubr.bf16.mxu0 0
    %2808 = vmatmul.mubr.bf16.gmra.mrb[0].mxu0 %v2733
    %v2809 = vpop.f32.mrb[0].mxu0
    %v2810 = vadd.f32 %v2602, %v2809
    %v2811 = vpop.f32.mrb[0].mxu0
    %v2812 = vadd.f32 %v2604, %v2811
    %v2813 = vpop.f32.mrb[0].mxu0
    %v2814 = vpop.f32.mrb[0].mxu0
    %2815 = vdwg.mxu0
    %v2816 = vxor.u32 %v2769, 2147483648
    %v2817 = vxor.u32 %v2771, 2147483648
    %v2818 = vxor.u32 %v2810, 2147483648
    %v2819 = vmul.f32 %v2816, 1.442695
    %v2820 = vpow.pop %v2819
    %v2821 = vmul.f32 %v2817, 1.442695
    %v2822 = vpow.pop %v2821
    %v2823 = vmul.f32 %v2818, 1.442695
    %v2824 = vpow.pop %v2823
    %v2825 = vadd.f32 %v2820, 1.0
    %v2826 = vadd.f32 %v2822, 1.0
    %v2827 = vadd.f32 %v2824, 1.0
    %v2828 = vrcp.pop %v2825
    %v2829 = vmul.f32 1.0, %v2828
    %v2830 = vrcp.pop %v2826
    %v2831 = vmul.f32 1.0, %v2830
    %v2832 = vrcp.pop %v2827
    %v2833 = vmul.f32 1.0, %v2832
    %v2834 = vtanh.pop %v2812
    %v2835 = vmul.f32 %v2831, %v2522
    %v2836 = vmul.f32 %v2829, %v2834
    %v2837 = vadd.f32 %v2835, %v2836
    %v2838 = vtanh.pop %v2837
    %v2839 = vmul.f32 %v2833, %v2838
    %v2840 = vpack.c.bf16 %v2839, %v2839
    %2841 = vmatprep.subr.bf16.mxu0 %v504
    %2842 = vmatpush1.bf16.msra.mxu0 %v503
    %2843 = vmatprep.subr.bf16.mxu0 %v508
    %2844 = vmatpush1.bf16.msra.mxu0 %v507
    %2845 = vmatprep.subr.bf16.mxu0 %v512
    %2846 = vmatpush1.bf16.msra.mxu0 %v511
    %2847 = vmatprep.subr.bf16.mxu0 %v516
    %2848 = vmatpush1.bf16.msra.mxu0 %v515
    %2849 = vmatprep.subr.bf16.mxu0 %v520
    %2850 = vmatpush1.bf16.msra.mxu0 %v519
    %2851 = vmatprep.subr.bf16.mxu0 %v524
    %2852 = vmatpush1.bf16.msra.mxu0 %v523
    %2853 = vmatprep.subr.bf16.mxu0 %v528
    %2854 = vmatpush1.bf16.msra.mxu0 %v527
    %2855 = vmatprep.subr.bf16.mxu0 %v532
    %2856 = vmatpush1.bf16.msra.mxu0 %v531
    %2857 = vmatprep.subr.bf16.mxu0 0
    %2858 = vmatpush1.bf16.msra.mxu0 0
    %2859 = vmatprep.subr.bf16.mxu0 0
    %2860 = vmatpush1.bf16.msra.mxu0 0
    %2861 = vmatprep.subr.bf16.mxu0 0
    %2862 = vmatpush1.bf16.msra.mxu0 0
    %2863 = vmatprep.subr.bf16.mxu0 0
    %2864 = vmatpush1.bf16.msra.mxu0 0
    %2865 = vmatprep.subr.bf16.mxu0 0
    %2866 = vmatpush1.bf16.msra.mxu0 0
    %2867 = vmatprep.subr.bf16.mxu0 0
    %2868 = vmatpush1.bf16.msra.mxu0 0
    %2869 = vmatprep.subr.bf16.mxu0 0
    %2870 = vmatpush1.bf16.msra.mxu0 0
    %2871 = vmatprep.subr.bf16.mxu0 0
    %2872 = vmatpush1.bf16.msra.mxu0 0
    %2873 = vmatprep.mubr.bf16.mxu0 0
    %2874 = vmatmul.mubr.bf16.gmra.mrb[0].mxu0 %v2840
    %v2875 = vpop.f32.mrb[0].mxu0
    %v2876 = vadd.f32 %v358, %v2875
    %v2877 = vpop.f32.mrb[0].mxu0
    %v2878 = vadd.f32 %v362, %v2877
    %v2879 = vpop.f32.mrb[0].mxu0
    %v2880 = vpop.f32.mrb[0].mxu0
    %2881 = vdwg.mxu0
    %2882 = vmatprep.subr.bf16.mxu0 %v506
    %2883 = vmatpush1.bf16.msra.mxu0 %v505
    %2884 = vmatprep.subr.bf16.mxu0 %v510
    %2885 = vmatpush1.bf16.msra.mxu0 %v509
    %2886 = vmatprep.subr.bf16.mxu0 %v514
    %2887 = vmatpush1.bf16.msra.mxu0 %v513
    %2888 = vmatprep.subr.bf16.mxu0 %v518
    %2889 = vmatpush1.bf16.msra.mxu0 %v517
    %2890 = vmatprep.subr.bf16.mxu0 %v522
    %2891 = vmatpush1.bf16.msra.mxu0 %v521
    %2892 = vmatprep.subr.bf16.mxu0 %v526
    %2893 = vmatpush1.bf16.msra.mxu0 %v525
    %2894 = vmatprep.subr.bf16.mxu0 %v530
    %2895 = vmatpush1.bf16.msra.mxu0 %v529
    %2896 = vmatprep.subr.bf16.mxu0 %v534
    %2897 = vmatpush1.bf16.msra.mxu0 %v533
    %2898 = vmatprep.subr.bf16.mxu0 0
    %2899 = vmatpush1.bf16.msra.mxu0 0
    %2900 = vmatprep.subr.bf16.mxu0 0
    %2901 = vmatpush1.bf16.msra.mxu0 0
    %2902 = vmatprep.subr.bf16.mxu0 0
    %2903 = vmatpush1.bf16.msra.mxu0 0
    %2904 = vmatprep.subr.bf16.mxu0 0
    %2905 = vmatpush1.bf16.msra.mxu0 0
    %2906 = vmatprep.subr.bf16.mxu0 0
    %2907 = vmatpush1.bf16.msra.mxu0 0
    %2908 = vmatprep.subr.bf16.mxu0 0
    %2909 = vmatpush1.bf16.msra.mxu0 0
    %2910 = vmatprep.subr.bf16.mxu0 0
    %2911 = vmatpush1.bf16.msra.mxu0 0
    %2912 = vmatprep.subr.bf16.mxu0 0
    %2913 = vmatpush1.bf16.msra.mxu0 0
    %2914 = vmatprep.mubr.bf16.mxu0 0
    %2915 = vmatmul.mubr.bf16.gmra.mrb[0].mxu0 %v2840
    %v2916 = vpop.f32.mrb[0].mxu0
    %v2917 = vadd.f32 %v366, %v2916
    %v2918 = vpop.f32.mrb[0].mxu0
    %v2919 = vadd.f32 %v370, %v2918
    %v2920 = vpop.f32.mrb[0].mxu0
    %v2921 = vpop.f32.mrb[0].mxu0
    %2922 = vdwg.mxu0
    %2923 = vmatprep.subr.bf16.mxu0 %v778
    %2924 = vmatpush1.bf16.msra.mxu0 %v777
    %2925 = vmatprep.subr.bf16.mxu0 %v782
    %2926 = vmatpush1.bf16.msra.mxu0 %v781
    %2927 = vmatprep.subr.bf16.mxu0 %v786
    %2928 = vmatpush1.bf16.msra.mxu0 %v785
    %2929 = vmatprep.subr.bf16.mxu0 %v790
    %2930 = vmatpush1.bf16.msra.mxu0 %v789
    %2931 = vmatprep.subr.bf16.mxu0 %v794
    %2932 = vmatpush1.bf16.msra.mxu0 %v793
    %2933 = vmatprep.subr.bf16.mxu0 %v798
    %2934 = vmatpush1.bf16.msra.mxu0 %v797
    %2935 = vmatprep.subr.bf16.mxu0 %v802
    %2936 = vmatpush1.bf16.msra.mxu0 %v801
    %2937 = vmatprep.subr.bf16.mxu0 %v806
    %2938 = vmatpush1.bf16.msra.mxu0 %v805
    %2939 = vmatprep.subr.bf16.mxu0 0
    %2940 = vmatpush1.bf16.msra.mxu0 0
    %2941 = vmatprep.subr.bf16.mxu0 0
    %2942 = vmatpush1.bf16.msra.mxu0 0
    %2943 = vmatprep.subr.bf16.mxu0 0
    %2944 = vmatpush1.bf16.msra.mxu0 0
    %2945 = vmatprep.subr.bf16.mxu0 0
    %2946 = vmatpush1.bf16.msra.mxu0 0
    %2947 = vmatprep.subr.bf16.mxu0 0
    %2948 = vmatpush1.bf16.msra.mxu0 0
    %2949 = vmatprep.subr.bf16.mxu0 0
    %2950 = vmatpush1.bf16.msra.mxu0 0
    %2951 = vmatprep.subr.bf16.mxu0 0
    %2952 = vmatpush1.bf16.msra.mxu0 0
    %2953 = vmatprep.subr.bf16.mxu0 0
    %2954 = vmatpush1.bf16.msra.mxu0 0
    %2955 = vmatprep.mubr.bf16.mxu0 0
    %2956 = vmatmul.mubr.bf16.gmra.mrb[0].mxu0 %v2733
    %v2957 = vpop.f32.mrb[0].mxu0
    %v2958 = vadd.f32 0.0, %v2957
    %v2959 = vpop.f32.mrb[0].mxu0
    %v2960 = vadd.f32 0.0, %v2959
    %v2961 = vpop.f32.mrb[0].mxu0
    %v2962 = vpop.f32.mrb[0].mxu0
    %2963 = vdwg.mxu0
    %2964 = vmatprep.subr.bf16.mxu0 %v780
    %2965 = vmatpush1.bf16.msra.mxu0 %v779
    %2966 = vmatprep.subr.bf16.mxu0 %v784
    %2967 = vmatpush1.bf16.msra.mxu0 %v783
    %2968 = vmatprep.subr.bf16.mxu0 %v788
    %2969 = vmatpush1.bf16.msra.mxu0 %v787
    %2970 = vmatprep.subr.bf16.mxu0 %v792
    %2971 = vmatpush1.bf16.msra.mxu0 %v791
    %2972 = vmatprep.subr.bf16.mxu0 %v796
    %2973 = vmatpush1.bf16.msra.mxu0 %v795
    %2974 = vmatprep.subr.bf16.mxu0 %v800
    %2975 = vmatpush1.bf16.msra.mxu0 %v799
    %2976 = vmatprep.subr.bf16.mxu0 %v804
    %2977 = vmatpush1.bf16.msra.mxu0 %v803
    %2978 = vmatprep.subr.bf16.mxu0 %v808
    %2979 = vmatpush1.bf16.msra.mxu0 %v807
    %2980 = vmatprep.subr.bf16.mxu0 0
    %2981 = vmatpush1.bf16.msra.mxu0 0
    %2982 = vmatprep.subr.bf16.mxu0 0
    %2983 = vmatpush1.bf16.msra.mxu0 0
    %2984 = vmatprep.subr.bf16.mxu0 0
    %2985 = vmatpush1.bf16.msra.mxu0 0
    %2986 = vmatprep.subr.bf16.mxu0 0
    %2987 = vmatpush1.bf16.msra.mxu0 0
    %2988 = vmatprep.subr.bf16.mxu0 0
    %2989 = vmatpush1.bf16.msra.mxu0 0
    %2990 = vmatprep.subr.bf16.mxu0 0
    %2991 = vmatpush1.bf16.msra.mxu0 0
    %2992 = vmatprep.subr.bf16.mxu0 0
    %2993 = vmatpush1.bf16.msra.mxu0 0
    %2994 = vmatprep.subr.bf16.mxu0 0
    %2995 = vmatpush1.bf16.msra.mxu0 0
    %2996 = vmatprep.mubr.bf16.mxu0 0
    %2997 = vmatmul.mubr.bf16.gmra.mrb[0].mxu0 %v2733
    %v2998 = vpop.f32.mrb[0].mxu0
    %v2999 = vadd.f32 0.0, %v2998
    %v3000 = vpop.f32.mrb[0].mxu0
    %v3001 = vadd.f32 0.0, %v3000
    %v3002 = vpop.f32.mrb[0].mxu0
    %v3003 = vpop.f32.mrb[0].mxu0
    %3004 = vdwg.mxu0
    %v3009 = vcombine.low %v2958, %v2960
    %v3010 = vcombine.low %v2999, %v3001
    %v3012 = vunpack.c.l.s4 1983009808
    %v3013 = vunpack.c.0.s8 %v3012
    %v3014 = vlaneseq
    %v3015 = vshrl.u32 %v3014, 7
    %v3016 = vsub.s32 %v3013, %v3015
    %v3017 = vrot.slane %v3009, %v3016
    %v3019 = vunpack.c.l.s4 1983009808
    %v3020 = vunpack.c.0.s8 %v3019
    %v3021 = vlaneseq
    %v3022 = vshrl.u32 %v3021, 7
    %v3023 = vsub.s32 %v3020, %v3022
    %v3024 = vrot.slane %v3010, %v3023
    %v3025 = vcombine.low %v3017, %v3024
    %v3027 = vadd.f32 %v343, %v3025
    %v3028 = vxor.u32 %v3027, 2147483648
    %v3029 = vmul.f32 %v3028, 1.442695
    %v3030 = vpow.pop %v3029
    %v3031 = vadd.f32 %v3030, 1.0
    %v3032 = vrcp.pop %v3031
    %v3033 = vmul.f32 1.0, %v3032
    %v3035 = vrot.slane %v3027, 6
    %v3037 = vtanh.pop %v3035
    %v3039 = vrot.slane %v3033, 2
    %v3041 = vmul.f32 %v3039, %v2728
    %v3042 = vmul.f32 %v3033, %v3037
    %v3043 = vadd.f32 %v3041, %v3042
    %v3044 = vtanh.pop %v3043
    %v3045 = vrot.slane %v3033, 4
    %v3047 = vmul.f32 %v3045, %v3044
    %v3048 = vpack.c.bf16 %v3047, %v3047
    %3049 = vmatprep.subr.bf16.mxu0 %v1096
    %3050 = vmatpush1.bf16.msra.mxu0 %v1095
    %3051 = vmatprep.subr.bf16.mxu0 %v1100
    %3052 = vmatpush1.bf16.msra.mxu0 %v1099
    %3053 = vmatprep.subr.bf16.mxu0 %v1104
    %3054 = vmatpush1.bf16.msra.mxu0 %v1103
    %3055 = vmatprep.subr.bf16.mxu0 %v1108
    %3056 = vmatpush1.bf16.msra.mxu0 %v1107
    %3057 = vmatprep.subr.bf16.mxu0 %v1112
    %3058 = vmatpush1.bf16.msra.mxu0 %v1111
    %3059 = vmatprep.subr.bf16.mxu0 %v1116
    %3060 = vmatpush1.bf16.msra.mxu0 %v1115
    %3061 = vmatprep.subr.bf16.mxu0 %v1120
    %3062 = vmatpush1.bf16.msra.mxu0 %v1119
    %3063 = vmatprep.subr.bf16.mxu0 %v1124
    %3064 = vmatpush1.bf16.msra.mxu0 %v1123
    %3065 = vmatprep.subr.bf16.mxu0 0
    %3066 = vmatpush1.bf16.msra.mxu0 0
    %3067 = vmatprep.subr.bf16.mxu0 0
    %3068 = vmatpush1.bf16.msra.mxu0 0
    %3069 = vmatprep.subr.bf16.mxu0 0
    %3070 = vmatpush1.bf16.msra.mxu0 0
    %3071 = vmatprep.subr.bf16.mxu0 0
    %3072 = vmatpush1.bf16.msra.mxu0 0
    %3073 = vmatprep.subr.bf16.mxu0 0
    %3074 = vmatpush1.bf16.msra.mxu0 0
    %3075 = vmatprep.subr.bf16.mxu0 0
    %3076 = vmatpush1.bf16.msra.mxu0 0
    %3077 = vmatprep.subr.bf16.mxu0 0
    %3078 = vmatpush1.bf16.msra.mxu0 0
    %3079 = vmatprep.subr.bf16.mxu0 0
    %3080 = vmatpush1.bf16.msra.mxu0 0
    %3081 = vmatprep.mubr.bf16.mxu0 0
    %3082 = vmatmul.mubr.bf16.gmra.mrb[0].mxu0 %v3048
    %v3083 = vpop.f32.mrb[0].mxu0
    %v3084 = vadd.f32 %v2876, %v3083
    %v3085 = vpop.f32.mrb[0].mxu0
    %v3086 = vadd.f32 %v2878, %v3085
    %v3087 = vpop.f32.mrb[0].mxu0
    %v3088 = vpop.f32.mrb[0].mxu0
    %3089 = vdwg.mxu0
    %3090 = vmatprep.subr.bf16.mxu0 %v1098
    %3091 = vmatpush1.bf16.msra.mxu0 %v1097
    %3092 = vmatprep.subr.bf16.mxu0 %v1102
    %3093 = vmatpush1.bf16.msra.mxu0 %v1101
    %3094 = vmatprep.subr.bf16.mxu0 %v1106
    %3095 = vmatpush1.bf16.msra.mxu0 %v1105
    %3096 = vmatprep.subr.bf16.mxu0 %v1110
    %3097 = vmatpush1.bf16.msra.mxu0 %v1109
    %3098 = vmatprep.subr.bf16.mxu0 %v1114
    %3099 = vmatpush1.bf16.msra.mxu0 %v1113
    %3100 = vmatprep.subr.bf16.mxu0 %v1118
    %3101 = vmatpush1.bf16.msra.mxu0 %v1117
    %3102 = vmatprep.subr.bf16.mxu0 %v1122
    %3103 = vmatpush1.bf16.msra.mxu0 %v1121
    %3104 = vmatprep.subr.bf16.mxu0 %v1126
    %3105 = vmatpush1.bf16.msra.mxu0 %v1125
    %3106 = vmatprep.subr.bf16.mxu0 0
    %3107 = vmatpush1.bf16.msra.mxu0 0
    %3108 = vmatprep.subr.bf16.mxu0 0
    %3109 = vmatpush1.bf16.msra.mxu0 0
    %3110 = vmatprep.subr.bf16.mxu0 0
    %3111 = vmatpush1.bf16.msra.mxu0 0
    %3112 = vmatprep.subr.bf16.mxu0 0
    %3113 = vmatpush1.bf16.msra.mxu0 0
    %3114 = vmatprep.subr.bf16.mxu0 0
    %3115 = vmatpush1.bf16.msra.mxu0 0
    %3116 = vmatprep.subr.bf16.mxu0 0
    %3117 = vmatpush1.bf16.msra.mxu0 0
    %3118 = vmatprep.subr.bf16.mxu0 0
    %3119 = vmatpush1.bf16.msra.mxu0 0
    %3120 = vmatprep.subr.bf16.mxu0 0
    %3121 = vmatpush1.bf16.msra.mxu0 0
    %3122 = vmatprep.mubr.bf16.mxu0 0
    %3123 = vmatmul.mubr.bf16.gmra.mrb[0].mxu0 %v3048
    %v3124 = vpop.f32.mrb[0].mxu0
    %v3125 = vadd.f32 %v2917, %v3124
    %v3126 = vpop.f32.mrb[0].mxu0
    %v3127 = vadd.f32 %v2919, %v3126
    %v3128 = vpop.f32.mrb[0].mxu0
    %v3129 = vpop.f32.mrb[0].mxu0
    %3130 = vdwg.mxu0
    %v3131 = vxor.u32 %v3084, 2147483648
    %v3132 = vxor.u32 %v3086, 2147483648
    %v3133 = vxor.u32 %v3125, 2147483648
    %v3134 = vmul.f32 %v3131, 1.442695
    %v3135 = vpow.pop %v3134
    %v3136 = vmul.f32 %v3132, 1.442695
    %v3137 = vpow.pop %v3136
    %v3138 = vmul.f32 %v3133, 1.442695
    %v3139 = vpow.pop %v3138
    %v3140 = vadd.f32 %v3135, 1.0
    %v3141 = vadd.f32 %v3137, 1.0
    %v3142 = vadd.f32 %v3139, 1.0
    %v3143 = vrcp.pop %v3140
    %v3144 = vmul.f32 1.0, %v3143
    %v3145 = vrcp.pop %v3141
    %v3146 = vmul.f32 1.0, %v3145
    %v3147 = vrcp.pop %v3142
    %v3148 = vmul.f32 1.0, %v3147
    %v3149 = vtanh.pop %v3127
    %v3150 = vmul.f32 %v3146, %v2837
    %v3151 = vmul.f32 %v3144, %v3149
    %v3152 = vadd.f32 %v3150, %v3151
    %v3153 = vtanh.pop %v3152
    %v3154 = vmul.f32 %v3148, %v3153
    %v3155 = vpack.c.bf16 %v3154, %v3154
    %3156 = vmatprep.subr.bf16.mxu0 %v504
    %3157 = vmatpush1.bf16.msra.mxu0 %v503
    %3158 = vmatprep.subr.bf16.mxu0 %v508
    %3159 = vmatpush1.bf16.msra.mxu0 %v507
    %3160 = vmatprep.subr.bf16.mxu0 %v512
    %3161 = vmatpush1.bf16.msra.mxu0 %v511
    %3162 = vmatprep.subr.bf16.mxu0 %v516
    %3163 = vmatpush1.bf16.msra.mxu0 %v515
    %3164 = vmatprep.subr.bf16.mxu0 %v520
    %3165 = vmatpush1.bf16.msra.mxu0 %v519
    %3166 = vmatprep.subr.bf16.mxu0 %v524
    %3167 = vmatpush1.bf16.msra.mxu0 %v523
    %3168 = vmatprep.subr.bf16.mxu0 %v528
    %3169 = vmatpush1.bf16.msra.mxu0 %v527
    %3170 = vmatprep.subr.bf16.mxu0 %v532
    %3171 = vmatpush1.bf16.msra.mxu0 %v531
    %3172 = vmatprep.subr.bf16.mxu0 0
    %3173 = vmatpush1.bf16.msra.mxu0 0
    %3174 = vmatprep.subr.bf16.mxu0 0
    %3175 = vmatpush1.bf16.msra.mxu0 0
    %3176 = vmatprep.subr.bf16.mxu0 0
    %3177 = vmatpush1.bf16.msra.mxu0 0
    %3178 = vmatprep.subr.bf16.mxu0 0
    %3179 = vmatpush1.bf16.msra.mxu0 0
    %3180 = vmatprep.subr.bf16.mxu0 0
    %3181 = vmatpush1.bf16.msra.mxu0 0
    %3182 = vmatprep.subr.bf16.mxu0 0
    %3183 = vmatpush1.bf16.msra.mxu0 0
    %3184 = vmatprep.subr.bf16.mxu0 0
    %3185 = vmatpush1.bf16.msra.mxu0 0
    %3186 = vmatprep.subr.bf16.mxu0 0
    %3187 = vmatpush1.bf16.msra.mxu0 0
    %3188 = vmatprep.mubr.bf16.mxu0 0
    %3189 = vmatmul.mubr.bf16.gmra.mrb[0].mxu0 %v3155
    %v3190 = vpop.f32.mrb[0].mxu0
    %v3191 = vadd.f32 %v358, %v3190
    %v3192 = vpop.f32.mrb[0].mxu0
    %v3193 = vadd.f32 %v362, %v3192
    %v3194 = vpop.f32.mrb[0].mxu0
    %v3195 = vpop.f32.mrb[0].mxu0
    %3196 = vdwg.mxu0
    %3197 = vmatprep.subr.bf16.mxu0 %v506
    %3198 = vmatpush1.bf16.msra.mxu0 %v505
    %3199 = vmatprep.subr.bf16.mxu0 %v510
    %3200 = vmatpush1.bf16.msra.mxu0 %v509
    %3201 = vmatprep.subr.bf16.mxu0 %v514
    %3202 = vmatpush1.bf16.msra.mxu0 %v513
    %3203 = vmatprep.subr.bf16.mxu0 %v518
    %3204 = vmatpush1.bf16.msra.mxu0 %v517
    %3205 = vmatprep.subr.bf16.mxu0 %v522
    %3206 = vmatpush1.bf16.msra.mxu0 %v521
    %3207 = vmatprep.subr.bf16.mxu0 %v526
    %3208 = vmatpush1.bf16.msra.mxu0 %v525
    %3209 = vmatprep.subr.bf16.mxu0 %v530
    %3210 = vmatpush1.bf16.msra.mxu0 %v529
    %3211 = vmatprep.subr.bf16.mxu0 %v534
    %3212 = vmatpush1.bf16.msra.mxu0 %v533
    %3213 = vmatprep.subr.bf16.mxu0 0
    %3214 = vmatpush1.bf16.msra.mxu0 0
    %3215 = vmatprep.subr.bf16.mxu0 0
    %3216 = vmatpush1.bf16.msra.mxu0 0
    %3217 = vmatprep.subr.bf16.mxu0 0
    %3218 = vmatpush1.bf16.msra.mxu0 0
    %3219 = vmatprep.subr.bf16.mxu0 0
    %3220 = vmatpush1.bf16.msra.mxu0 0
    %3221 = vmatprep.subr.bf16.mxu0 0
    %3222 = vmatpush1.bf16.msra.mxu0 0
    %3223 = vmatprep.subr.bf16.mxu0 0
    %3224 = vmatpush1.bf16.msra.mxu0 0
    %3225 = vmatprep.subr.bf16.mxu0 0
    %3226 = vmatpush1.bf16.msra.mxu0 0
    %3227 = vmatprep.subr.bf16.mxu0 0
    %3228 = vmatpush1.bf16.msra.mxu0 0
    %3229 = vmatprep.mubr.bf16.mxu0 0
    %3230 = vmatmul.mubr.bf16.gmra.mrb[0].mxu0 %v3155
    %v3231 = vpop.f32.mrb[0].mxu0
    %v3232 = vadd.f32 %v366, %v3231
    %v3233 = vpop.f32.mrb[0].mxu0
    %v3234 = vadd.f32 %v370, %v3233
    %v3235 = vpop.f32.mrb[0].mxu0
    %v3236 = vpop.f32.mrb[0].mxu0
    %3237 = vdwg.mxu0
    %3238 = vmatprep.subr.bf16.mxu0 %v778
    %3239 = vmatpush1.bf16.msra.mxu0 %v777
    %3240 = vmatprep.subr.bf16.mxu0 %v782
    %3241 = vmatpush1.bf16.msra.mxu0 %v781
    %3242 = vmatprep.subr.bf16.mxu0 %v786
    %3243 = vmatpush1.bf16.msra.mxu0 %v785
    %3244 = vmatprep.subr.bf16.mxu0 %v790
    %3245 = vmatpush1.bf16.msra.mxu0 %v789
    %3246 = vmatprep.subr.bf16.mxu0 %v794
    %3247 = vmatpush1.bf16.msra.mxu0 %v793
    %3248 = vmatprep.subr.bf16.mxu0 %v798
    %3249 = vmatpush1.bf16.msra.mxu0 %v797
    %3250 = vmatprep.subr.bf16.mxu0 %v802
    %3251 = vmatpush1.bf16.msra.mxu0 %v801
    %3252 = vmatprep.subr.bf16.mxu0 %v806
    %3253 = vmatpush1.bf16.msra.mxu0 %v805
    %3254 = vmatprep.subr.bf16.mxu0 0
    %3255 = vmatpush1.bf16.msra.mxu0 0
    %3256 = vmatprep.subr.bf16.mxu0 0
    %3257 = vmatpush1.bf16.msra.mxu0 0
    %3258 = vmatprep.subr.bf16.mxu0 0
    %3259 = vmatpush1.bf16.msra.mxu0 0
    %3260 = vmatprep.subr.bf16.mxu0 0
    %3261 = vmatpush1.bf16.msra.mxu0 0
    %3262 = vmatprep.subr.bf16.mxu0 0
    %3263 = vmatpush1.bf16.msra.mxu0 0
    %3264 = vmatprep.subr.bf16.mxu0 0
    %3265 = vmatpush1.bf16.msra.mxu0 0
    %3266 = vmatprep.subr.bf16.mxu0 0
    %3267 = vmatpush1.bf16.msra.mxu0 0
    %3268 = vmatprep.subr.bf16.mxu0 0
    %3269 = vmatpush1.bf16.msra.mxu0 0
    %3270 = vmatprep.mubr.bf16.mxu0 0
    %3271 = vmatmul.mubr.bf16.gmra.mrb[0].mxu0 %v3048
    %v3272 = vpop.f32.mrb[0].mxu0
    %v3273 = vadd.f32 0.0, %v3272
    %v3274 = vpop.f32.mrb[0].mxu0
    %v3275 = vadd.f32 0.0, %v3274
    %v3276 = vpop.f32.mrb[0].mxu0
    %v3277 = vpop.f32.mrb[0].mxu0
    %3278 = vdwg.mxu0
    %3279 = vmatprep.subr.bf16.mxu0 %v780
    %3280 = vmatpush1.bf16.msra.mxu0 %v779
    %3281 = vmatprep.subr.bf16.mxu0 %v784
    %3282 = vmatpush1.bf16.msra.mxu0 %v783
    %3283 = vmatprep.subr.bf16.mxu0 %v788
    %3284 = vmatpush1.bf16.msra.mxu0 %v787
    %3285 = vmatprep.subr.bf16.mxu0 %v792
    %3286 = vmatpush1.bf16.msra.mxu0 %v791
    %3287 = vmatprep.subr.bf16.mxu0 %v796
    %3288 = vmatpush1.bf16.msra.mxu0 %v795
    %3289 = vmatprep.subr.bf16.mxu0 %v800
    %3290 = vmatpush1.bf16.msra.mxu0 %v799
    %3291 = vmatprep.subr.bf16.mxu0 %v804
    %3292 = vmatpush1.bf16.msra.mxu0 %v803
    %3293 = vmatprep.subr.bf16.mxu0 %v808
    %3294 = vmatpush1.bf16.msra.mxu0 %v807
    %3295 = vmatprep.subr.bf16.mxu0 0
    %3296 = vmatpush1.bf16.msra.mxu0 0
    %3297 = vmatprep.subr.bf16.mxu0 0
    %3298 = vmatpush1.bf16.msra.mxu0 0
    %3299 = vmatprep.subr.bf16.mxu0 0
    %3300 = vmatpush1.bf16.msra.mxu0 0
    %3301 = vmatprep.subr.bf16.mxu0 0
    %3302 = vmatpush1.bf16.msra.mxu0 0
    %3303 = vmatprep.subr.bf16.mxu0 0
    %3304 = vmatpush1.bf16.msra.mxu0 0
    %3305 = vmatprep.subr.bf16.mxu0 0
    %3306 = vmatpush1.bf16.msra.mxu0 0
    %3307 = vmatprep.subr.bf16.mxu0 0
    %3308 = vmatpush1.bf16.msra.mxu0 0
    %3309 = vmatprep.subr.bf16.mxu0 0
    %3310 = vmatpush1.bf16.msra.mxu0 0
    %3311 = vmatprep.mubr.bf16.mxu0 0
    %3312 = vmatmul.mubr.bf16.gmra.mrb[0].mxu0 %v3048
    %v3313 = vpop.f32.mrb[0].mxu0
    %v3314 = vadd.f32 0.0, %v3313
    %v3315 = vpop.f32.mrb[0].mxu0
    %v3316 = vadd.f32 0.0, %v3315
    %v3317 = vpop.f32.mrb[0].mxu0
    %v3318 = vpop.f32.mrb[0].mxu0
    %3319 = vdwg.mxu0
    %v3324 = vcombine.low %v3273, %v3275
    %v3325 = vcombine.low %v3314, %v3316
    %v3327 = vunpack.c.l.s4 1983009808
    %v3328 = vunpack.c.0.s8 %v3327
    %v3329 = vlaneseq
    %v3330 = vshrl.u32 %v3329, 7
    %v3331 = vsub.s32 %v3328, %v3330
    %v3332 = vrot.slane %v3324, %v3331
    %v3334 = vunpack.c.l.s4 1983009808
    %v3335 = vunpack.c.0.s8 %v3334
    %v3336 = vlaneseq
    %v3337 = vshrl.u32 %v3336, 7
    %v3338 = vsub.s32 %v3335, %v3337
    %v3339 = vrot.slane %v3325, %v3338
    %v3340 = vcombine.low %v3332, %v3339
    %v3342 = vadd.f32 %v344, %v3340
    %v3343 = vxor.u32 %v3342, 2147483648
    %v3344 = vmul.f32 %v3343, 1.442695
    %v3345 = vpow.pop %v3344
    %v3346 = vadd.f32 %v3345, 1.0
    %v3347 = vrcp.pop %v3346
    %v3348 = vmul.f32 1.0, %v3347
    %v3350 = vrot.slane %v3342, 6
    %v3352 = vtanh.pop %v3350
    %v3354 = vrot.slane %v3348, 2
    %v3356 = vmul.f32 %v3354, %v3043
    %v3357 = vmul.f32 %v3348, %v3352
    %v3358 = vadd.f32 %v3356, %v3357
    %v3359 = vtanh.pop %v3358
    %v3360 = vrot.slane %v3348, 4
    %v3362 = vmul.f32 %v3360, %v3359
    %v3363 = vpack.c.bf16 %v3362, %v3362
    %3364 = vmatprep.subr.bf16.mxu0 %v1096
    %3365 = vmatpush1.bf16.msra.mxu0 %v1095
    %3366 = vmatprep.subr.bf16.mxu0 %v1100
    %3367 = vmatpush1.bf16.msra.mxu0 %v1099
    %3368 = vmatprep.subr.bf16.mxu0 %v1104
    %3369 = vmatpush1.bf16.msra.mxu0 %v1103
    %3370 = vmatprep.subr.bf16.mxu0 %v1108
    %3371 = vmatpush1.bf16.msra.mxu0 %v1107
    %3372 = vmatprep.subr.bf16.mxu0 %v1112
    %3373 = vmatpush1.bf16.msra.mxu0 %v1111
    %3374 = vmatprep.subr.bf16.mxu0 %v1116
    %3375 = vmatpush1.bf16.msra.mxu0 %v1115
    %3376 = vmatprep.subr.bf16.mxu0 %v1120
    %3377 = vmatpush1.bf16.msra.mxu0 %v1119
    %3378 = vmatprep.subr.bf16.mxu0 %v1124
    %3379 = vmatpush1.bf16.msra.mxu0 %v1123
    %3380 = vmatprep.subr.bf16.mxu0 0
    %3381 = vmatpush1.bf16.msra.mxu0 0
    %3382 = vmatprep.subr.bf16.mxu0 0
    %3383 = vmatpush1.bf16.msra.mxu0 0
    %3384 = vmatprep.subr.bf16.mxu0 0
    %3385 = vmatpush1.bf16.msra.mxu0 0
    %3386 = vmatprep.subr.bf16.mxu0 0
    %3387 = vmatpush1.bf16.msra.mxu0 0
    %3388 = vmatprep.subr.bf16.mxu0 0
    %3389 = vmatpush1.bf16.msra.mxu0 0
    %3390 = vmatprep.subr.bf16.mxu0 0
    %3391 = vmatpush1.bf16.msra.mxu0 0
    %3392 = vmatprep.subr.bf16.mxu0 0
    %3393 = vmatpush1.bf16.msra.mxu0 0
    %3394 = vmatprep.subr.bf16.mxu0 0
    %3395 = vmatpush1.bf16.msra.mxu0 0
    %3396 = vmatprep.mubr.bf16.mxu0 0
    %3397 = vmatmul.mubr.bf16.gmra.mrb[0].mxu0 %v3363
    %v3398 = vpop.f32.mrb[0].mxu0
    %v3399 = vadd.f32 %v3191, %v3398
    %v3400 = vpop.f32.mrb[0].mxu0
    %v3401 = vadd.f32 %v3193, %v3400
    %v3402 = vpop.f32.mrb[0].mxu0
    %v3403 = vpop.f32.mrb[0].mxu0
    %3404 = vdwg.mxu0
    %3405 = vmatprep.subr.bf16.mxu0 %v1098
    %3406 = vmatpush1.bf16.msra.mxu0 %v1097
    %3407 = vmatprep.subr.bf16.mxu0 %v1102
    %3408 = vmatpush1.bf16.msra.mxu0 %v1101
    %3409 = vmatprep.subr.bf16.mxu0 %v1106
    %3410 = vmatpush1.bf16.msra.mxu0 %v1105
    %3411 = vmatprep.subr.bf16.mxu0 %v1110
    %3412 = vmatpush1.bf16.msra.mxu0 %v1109
    %3413 = vmatprep.subr.bf16.mxu0 %v1114
    %3414 = vmatpush1.bf16.msra.mxu0 %v1113
    %3415 = vmatprep.subr.bf16.mxu0 %v1118
    %3416 = vmatpush1.bf16.msra.mxu0 %v1117
    %3417 = vmatprep.subr.bf16.mxu0 %v1122
    %3418 = vmatpush1.bf16.msra.mxu0 %v1121
    %3419 = vmatprep.subr.bf16.mxu0 %v1126
    %3420 = vmatpush1.bf16.msra.mxu0 %v1125
    %3421 = vmatprep.subr.bf16.mxu0 0
    %3422 = vmatpush1.bf16.msra.mxu0 0
    %3423 = vmatprep.subr.bf16.mxu0 0
    %3424 = vmatpush1.bf16.msra.mxu0 0
    %3425 = vmatprep.subr.bf16.mxu0 0
    %3426 = vmatpush1.bf16.msra.mxu0 0
    %3427 = vmatprep.subr.bf16.mxu0 0
    %3428 = vmatpush1.bf16.msra.mxu0 0
    %3429 = vmatprep.subr.bf16.mxu0 0
    %3430 = vmatpush1.bf16.msra.mxu0 0
    %3431 = vmatprep.subr.bf16.mxu0 0
    %3432 = vmatpush1.bf16.msra.mxu0 0
    %3433 = vmatprep.subr.bf16.mxu0 0
    %3434 = vmatpush1.bf16.msra.mxu0 0
    %3435 = vmatprep.subr.bf16.mxu0 0
    %3436 = vmatpush1.bf16.msra.mxu0 0
    %3437 = vmatprep.mubr.bf16.mxu0 0
    %3438 = vmatmul.mubr.bf16.gmra.mrb[0].mxu0 %v3363
    %v3439 = vpop.f32.mrb[0].mxu0
    %v3440 = vadd.f32 %v3232, %v3439
    %v3441 = vpop.f32.mrb[0].mxu0
    %v3442 = vadd.f32 %v3234, %v3441
    %v3443 = vpop.f32.mrb[0].mxu0
    %v3444 = vpop.f32.mrb[0].mxu0
    %3445 = vdwg.mxu0
    %v3446 = vxor.u32 %v3399, 2147483648
    %v3447 = vxor.u32 %v3401, 2147483648
    %v3448 = vxor.u32 %v3440, 2147483648
    %v3449 = vmul.f32 %v3446, 1.442695
    %v3450 = vpow.pop %v3449
    %v3451 = vmul.f32 %v3447, 1.442695
    %v3452 = vpow.pop %v3451
    %v3453 = vmul.f32 %v3448, 1.442695
    %v3454 = vpow.pop %v3453
    %v3455 = vadd.f32 %v3450, 1.0
    %v3456 = vadd.f32 %v3452, 1.0
    %v3457 = vadd.f32 %v3454, 1.0
    %v3458 = vrcp.pop %v3455
    %v3459 = vmul.f32 1.0, %v3458
    %v3460 = vrcp.pop %v3456
    %v3461 = vmul.f32 1.0, %v3460
    %v3462 = vrcp.pop %v3457
    %v3463 = vmul.f32 1.0, %v3462
    %v3464 = vtanh.pop %v3442
    %v3465 = vmul.f32 %v3461, %v3152
    %v3466 = vmul.f32 %v3459, %v3464
    %v3467 = vadd.f32 %v3465, %v3466
    %v3468 = vtanh.pop %v3467
    %v3469 = vmul.f32 %v3463, %v3468
    %v3470 = vld [vmem:[%s7] sm:$0x1]
    %v3472 = vlaneseq
    %v3473 = vshrl.u32 %v3472, 7
    %v3474 = vsub.s32 0, %v3473
    %v3475 = vrot.slane %v3470, %v3474
    %v3477 = vmul.f32 %v3469, %v3475
    %vm3478 = vcmask 1041408
    %v3479 = vsel %vm3478, %v3477, 0.0
    %3480 = vadd.xlane.f32.xlu0 %v3479
    %v3481 = vpop.xlane.xlu0 %3480
    %v3482 = vld [vmem:[#allocation2] sm:$0x1]
    %v3484 = vlaneseq
    %v3485 = vshrl.u32 %v3484, 7
    %v3486 = vsub.s32 0, %v3485
    %v3487 = vrot.slane %v3482, %v3486
    %v3489 = vadd.f32 %v3481, %v3487
    %v3490 = vxor.u32 %v3489, 2147483648
    %v3491 = vmul.f32 %v3490, 1.442695
    %v3492 = vpow.pop %v3491
    %v3493 = vadd.f32 %v3492, 1.0
    %v3494 = vrcp.pop %v3493
    %v3495 = vmul.f32 1.0, %v3494
    %vm3496 = vcmask 1024
    %3497 = vst.msk [vmem:[%s9] sm:$0x3] %vm3496, %v3495
    // Predicated region
    $region50: #{lstm_forward.1} parent=1 // pred_check
      _
    $region51: #{lstm_forward.1} parent=1 // pred_check_branch
      %3499 = sbr.rel (0) target = $region53
    $region52: #{lstm_forward.1} parent=1 // pred_region
      _
    $region53: #{lstm_forward.1} parent=1 // pred_fallthru
      _
    // Predicated region
    $region54: #{lstm_forward.1} parent=1 // pred_check
      _
    $region55: #{lstm_forward.1} parent=1 // pred_check_branch
      %3501 = sbr.rel (0) target = $region57
    $region56: #{lstm_forward.1} parent=1 // pred_region
      _
    $region57: #{lstm_forward.1} parent=1 // pred_fallthru
      _
    %3502 = vsyncpa [#allocation4], 1
    %3503 = vsyncpa [#allocation6], 1

</llo_original>
